<compile_context>
chip_gen: v6e
topology: v6e:2x2x1
jax: 0.10.0
libtpu: 0.0.40
codegen_flags: <defaults>
</compile_context>

<pallas_src>
import jax
import jax.numpy as jnp
from jax.experimental import pallas as pl
from jax.experimental.pallas import tpu as pltpu

LN_EPS = 1e-5


# ----------------------------------------------------------------------------
# helpers
# ----------------------------------------------------------------------------
def _round_up(x, m):
  return (x + m - 1) // m * m


def _choose_row_tile(n):
  n16 = _round_up(n, 16)
  return n16 if n16 <= 512 else 512


def _pad_dim(a, axis, target):
  pad = target - a.shape[axis]
  if pad == 0:
    return a
  cfg = [(0, 0)] * a.ndim
  cfg[axis] = (0, pad)
  return jnp.pad(a, cfg)


# ----------------------------------------------------------------------------
# kernels
# ----------------------------------------------------------------------------
def _make_matmul_stats_kernel(nchunks, n_real, tile_n, masked):
  """Pass A: z = sum_c x_c @ W_c + b, plus whole-sample LayerNorm stats."""

  def kernel(*refs):
    xs = refs[0:nchunks]                         # each (1, tile_n, Kc)
    ws = refs[nchunks:2 * nchunks]               # each (Kc, L)
    b_ref = refs[2 * nchunks]                    # (1, L)       f32
    z_ref = refs[2 * nchunks + 1]                # (1, tile_n, L) f32
    mean_ref = refs[2 * nchunks + 2]             # (1, 1, 1)    f32
    rstd_ref = refs[2 * nchunks + 3]             # (1, 1, 1)    f32
    sum_ref = refs[2 * nchunks + 4]              # VMEM (1, 1)  f32 scratch
    sq_ref = refs[2 * nchunks + 5]               # VMEM (1, 1)  f32 scratch

    n = pl.program_id(1)

    @pl.when(n == 0)
    def _():
      sum_ref[...] = jnp.zeros_like(sum_ref)
      sq_ref[...] = jnp.zeros_like(sq_ref)

    # bf16 (or f32) operands, f32 accumulation on the MXU.
    z = jnp.dot(xs[0][0], ws[0][...], preferred_element_type=jnp.float32)
    for c in range(1, nchunks):
      z = z + jnp.dot(xs[c][0], ws[c][...], preferred_element_type=jnp.float32)
    z = z + b_ref[...]

    # one-pass statistics (sum, sum of squares), padded rows masked out.
    if masked:
      row = jax.lax.broadcasted_iota(jnp.int32, z.shape, 0) + n * tile_n
      zm = jnp.where(row < n_real, z, 0.0)
    else:
      zm = z
    sum_ref[...] += jnp.sum(zm, keepdims=True)
    sq_ref[...] += jnp.sum(zm * zm, keepdims=True)

    z_ref[0] = z

    @pl.when(n == pl.num_programs(1) - 1)
    def _():
      cnt = float(n_real * z.shape[-1])
      mu = sum_ref[...] / cnt                    # (1, 1)
      var = sq_ref[...] / cnt - mu * mu
      mean_ref[0] = mu
      rstd_ref[0] = jax.lax.rsqrt(var + LN_EPS)

  return kernel


def _make_ln_act_kernel(apply_prelu):
  """Pass B: y = (z - mean) * rstd * gamma + beta  (+ optional PReLU)."""

  def kernel(z_ref, mean_ref, rstd_ref, g_ref, be_ref, alpha_ref, o_ref):
    y = (z_ref[0] - mean_ref[0]) * rstd_ref[0]
    y = y * g_ref[...] + be_ref[...]
    if apply_prelu:
      a = alpha_ref[0]
      y = jnp.where(y > 0, y, a * y)
    o_ref[0] = y.astype(o_ref.dtype)

  return kernel


def _make_matmul_kernel(nchunks):
  """Final projection: o = sum_c x_c @ W_c + b (lane-dense padded output)."""

  def kernel(*refs):
    xs = refs[0:nchunks]
    ws = refs[nchunks:2 * nchunks]
    b_ref = refs[2 * nchunks]
    o_ref = refs[2 * nchunks + 1]
    z = jnp.dot(xs[0][0], ws[0][...], preferred_element_type=jnp.float32)
    for c in range(1, nchunks):
      z = z + jnp.dot(xs[c][0], ws[c][...], preferred_element_type=jnp.float32)
    o_ref[0] = (z + b_ref[...]).astype(o_ref.dtype)

  return kernel


# ----------------------------------------------------------------------------
# pallas_call wrappers
# ----------------------------------------------------------------------------
def matmul_stats(x_chunks, w_chunks, b, *, n_real, tile_n):
  """z = sum_c x_c @ W_c + b  plus per-batch LayerNorm mean / rstd."""
  B, n_pad, _ = x_chunks[0].shape
  L = w_chunks[0].shape[1]
  n_tiles = n_pad // tile_n
  nchunks = len(x_chunks)
  kernel = _make_matmul_stats_kernel(nchunks, n_real, tile_n,
                                     masked=(n_pad != n_real))

  in_specs = []
  for xc in x_chunks:
    in_specs.append(pl.BlockSpec((1, tile_n, xc.shape[2]),
                                 lambda bi, ni: (bi, ni, 0)))
  for wc in w_chunks:
    in_specs.append(pl.BlockSpec(wc.shape, lambda bi, ni: (0, 0)))
  in_specs.append(pl.BlockSpec((1, L), lambda bi, ni: (0, 0)))

  out_shape = (jax.ShapeDtypeStruct((B, n_pad, L), jnp.float32),
               jax.ShapeDtypeStruct((B, 1, 1), jnp.float32),
               jax.ShapeDtypeStruct((B, 1, 1), jnp.float32))
  out_specs = (pl.BlockSpec((1, tile_n, L), lambda bi, ni: (bi, ni, 0)),
               pl.BlockSpec((1, 1, 1), lambda bi, ni: (bi, 0, 0)),
               pl.BlockSpec((1, 1, 1), lambda bi, ni: (bi, 0, 0)))

  # Tiles sized so 2x(inputs) + output stay well under the default 32 MiB
  # scoped VMEM on all generations; no vmem_limit override needed.
  return pl.pallas_call(
      kernel,
      out_shape=out_shape,
      grid=(B, n_tiles),
      in_specs=in_specs,
      out_specs=out_specs,
      scratch_shapes=[pltpu.VMEM((1, 1), jnp.float32),
                      pltpu.VMEM((1, 1), jnp.float32)],
      compiler_params=pltpu.CompilerParams(
          dimension_semantics=("parallel", "arbitrary")),
  )(*x_chunks, *w_chunks, b.reshape(1, L))


def ln_act(z, mean, rstd, gamma, beta, alpha, *, tile_n, apply_prelu,
           out_dtype):
  """Elementwise whole-sample LayerNorm (+ PReLU), gamma/beta tiled by row."""
  B, n_pad, L = z.shape
  n_tiles = n_pad // tile_n
  return pl.pallas_call(
      _make_ln_act_kernel(apply_prelu),
      out_shape=jax.ShapeDtypeStruct((B, n_pad, L), out_dtype),
      grid=(B, n_tiles),
      in_specs=[
          pl.BlockSpec((1, tile_n, L), lambda bi, ni: (bi, ni, 0)),
          pl.BlockSpec((1, 1, 1), lambda bi, ni: (bi, 0, 0)),
          pl.BlockSpec((1, 1, 1), lambda bi, ni: (bi, 0, 0)),
          pl.BlockSpec((tile_n, L), lambda bi, ni: (ni, 0)),
          pl.BlockSpec((tile_n, L), lambda bi, ni: (ni, 0)),
          pl.BlockSpec(memory_space=pltpu.MemorySpace.SMEM),
      ],
      out_specs=pl.BlockSpec((1, tile_n, L), lambda bi, ni: (bi, ni, 0)),
      compiler_params=pltpu.CompilerParams(
          dimension_semantics=("parallel", "parallel")),
  )(z, mean, rstd, gamma, beta, alpha)


def matmul_chunks(x_chunks, w_chunks, b, *, tile_n):
  """o = sum_c x_c @ W_c + b  (no norm / activation)."""
  B, n_pad, _ = x_chunks[0].shape
  out_dim = w_chunks[0].shape[1]
  n_tiles = n_pad // tile_n
  nchunks = len(x_chunks)
  in_specs = []
  for xc in x_chunks:
    in_specs.append(pl.BlockSpec((1, tile_n, xc.shape[2]),
                                 lambda bi, ni: (bi, ni, 0)))
  for wc in w_chunks:
    in_specs.append(pl.BlockSpec(wc.shape, lambda bi, ni: (0, 0)))
  in_specs.append(pl.BlockSpec((1, out_dim), lambda bi, ni: (0, 0)))
  return pl.pallas_call(
      _make_matmul_kernel(nchunks),
      out_shape=jax.ShapeDtypeStruct((B, n_pad, out_dim), jnp.float32),
      grid=(B, n_tiles),
      in_specs=in_specs,
      out_specs=pl.BlockSpec((1, tile_n, out_dim),
                             lambda bi, ni: (bi, ni, 0)),
      compiler_params=pltpu.CompilerParams(
          dimension_semantics=("parallel", "parallel")),
  )(*x_chunks, *w_chunks, b.reshape(1, out_dim))


# ----------------------------------------------------------------------------
# parameters (deterministic, mirrors module __init__ shapes)
# ----------------------------------------------------------------------------
def make_params(key, *, num_frame, num_joints, hidden, out_ch, num_proposals,
                linear_size, num_stage):
  N = num_frame * num_joints
  keys = iter(jax.random.split(key, 64))

  def lin(fan_in, fan_out):
    w = jax.random.normal(next(keys), (fan_in, fan_out), jnp.float32)
    w = w * (1.0 / jnp.sqrt(jnp.float32(fan_in)))
    b = 0.01 * jax.random.normal(next(keys), (fan_out,), jnp.float32)
    return w, b

  def ln_p():
    g = 1.0 + 0.05 * jax.random.normal(next(keys), (N, linear_size),
                                       jnp.float32)
    be = 0.05 * jax.random.normal(next(keys), (N, linear_size), jnp.float32)
    return g, be

  p = {}
  # stand-in feature extractor: 3 -> hidden  (TODO(synk): PoseTransformer)
  p["w_feat"], p["b_feat"] = lin(3, hidden)

  in_channel = hidden * num_proposals
  p["w_in"], p["b_in"] = lin(in_channel, linear_size)     # DenseFC.dense_in
  p["g_in"], p["be_in"] = ln_p()

  p["stages"] = []
  for i in range(num_stage):                              # linear_stages[i]
    w, b = lin(linear_size * (1 + i), linear_size)
    g, be = ln_p()
    alpha = jnp.full((1,), 0.25, jnp.float32)             # PReLU default
    p["stages"].append(dict(w=w, b=b, g=g, be=be, alpha=alpha))

  p["w_out"], p["b_out"] = lin(linear_size * (num_stage + 1), out_ch)
  return p


def _fold_feature_extractor(params, num_proposals):
  """Fold the stand-in linear extractor and the proposal concat into
  dense_in:  dense_in(concat_h(x_h @ A + a)) == sum_h x_h @ (A @ B_h) + b'."""
  w_feat, b_feat = params["w_feat"], params["b_feat"]     # (3, hid), (hid,)
  w_in, b_in = params["w_in"], params["b_in"]             # (H*hid, L), (L,)
  hidden = w_feat.shape[1]
  blocks = []
  b_fold = b_in
  for h in range(num_proposals):
    w_h = w_in[h * hidden:(h + 1) * hidden]               # (hid, L)
    blocks.append(w_feat @ w_h)                           # (3, L)
    b_fold = b_fold + b_feat @ w_h
  return jnp.concatenate(blocks, axis=0), b_fold          # (H*3, L), (L,)


# ----------------------------------------------------------------------------
# FusionNet forward (Pallas)
# ----------------------------------------------------------------------------
def fusionnet_forward(x, params):
  B, H, F, J, C = x.shape
  N = F * J
  L = params["w_in"].shape[1]
  tile_n = _choose_row_tile(N)
  n_pad = _round_up(N, tile_n)
  zero_alpha = jnp.zeros((1,), jnp.float32)

  # feature extractor folded into dense_in (no H loop, no concat).
  w_fold, b_fold = _fold_feature_extractor(params, H)
  k_in = H * C
  k_pad = _round_up(k_in, 16)
  x_cat = jnp.transpose(x, (0, 2, 3, 1, 4)).reshape(B, N, k_in)
  x_cat = _pad_dim(_pad_dim(x_cat, 1, n_pad), 2, k_pad).astype(jnp.bfloat16)
  w_fold_p = _pad_dim(w_fold, 0, k_pad).astype(jnp.bfloat16)

  # dense_in: Linear + whole-sample LayerNorm (two tiled passes).
  z, mu, rstd = matmul_stats([x_cat], [w_fold_p], b_fold,
                             n_real=N, tile_n=tile_n)
  cur = ln_act(z, mu, rstd,
               _pad_dim(params["g_in"], 0, n_pad),
               _pad_dim(params["be_in"], 0, n_pad),
               zero_alpha, tile_n=tile_n, apply_prelu=False,
               out_dtype=jnp.bfloat16)

  # dense connectivity: keep per-stage activations as separate chunks.
  chunks = [cur]
  for st in params["stages"]:
    w_parts = [st["w"][c * L:(c + 1) * L].astype(jnp.bfloat16)
               for c in range(len(chunks))]
    z, mu, rstd = matmul_stats(chunks, w_parts, st["b"],
                               n_real=N, tile_n=tile_n)
    y = ln_act(z, mu, rstd,
               _pad_dim(st["g"], 0, n_pad),
               _pad_dim(st["be"], 0, n_pad),
               st["alpha"], tile_n=tile_n, apply_prelu=True,
               out_dtype=jnp.bfloat16)
    chunks.append(y)

  # dense_out: lane-dense padded projection, slice back in JAX.
  out_ch = params["w_out"].shape[1]
  out_pad = _round_up(out_ch, 128)
  w_out = jnp.zeros((params["w_out"].shape[0], out_pad), jnp.float32)
  w_out = w_out.at[:, :out_ch].set(params["w_out"])
  b_out = jnp.zeros((out_pad,), jnp.float32).at[:out_ch].set(params["b_out"])
  w_out_parts = [w_out[c * L:(c + 1) * L].astype(jnp.bfloat16)
                 for c in range(len(chunks))]
  out = matmul_chunks(chunks, w_out_parts, b_out, tile_n=tile_n)
  out = out[:, :N, :out_ch]
  return out.reshape(B, F, J, out_ch)


# ----------------------------------------------------------------------------
# references for correctness checks
# ----------------------------------------------------------------------------
def _bf16(a):
  return a.astype(jnp.bfloat16).astype(jnp.float32)


def fusionnet_ref_matched(x, params):
  """Pure-JAX reference mirroring the kernel math exactly (folded dense_in,
  bf16 matmul operands, f32 accumulation, one-pass whole-sample LN)."""
  B, H, F, J, C = x.shape
  N = F * J
  L = params["w_in"].shape[1]

  def ln(z, g, be):
    mu = jnp.mean(z, axis=(1, 2), keepdims=True)
    var = jnp.mean(z * z, axis=(1, 2), keepdims=True) - mu * mu
    return (z - mu) * jax.lax.rsqrt(var + LN_EPS) * g + be

  def mm(xs, ws):
    z = None
    for xc, wc in zip(xs, ws):
      t = jnp.einsum("bnk,kl->bnl", _bf16(xc), _bf16(wc))
      z = t if z is None else z + t
    return z

  w_fold, b_fold = _fold_feature_extractor(params, H)
  x_cat = jnp.transpose(x, (0, 2, 3, 1, 4)).reshape(B, N, H * C)
  z = mm([x_cat], [w_fold]) + b_fold
  cur = ln(z, params["g_in"], params["be_in"])
  chunks = [_bf16(cur)]
  for st in params["stages"]:
    ws = [st["w"][c * L:(c + 1) * L] for c in range(len(chunks))]
    z = mm(chunks, ws) + st["b"]
    y = ln(z, st["g"], st["be"])
    y = jnp.where(y > 0, y, st["alpha"][0] * y)
    chunks.append(_bf16(y))
  ws = [params["w_out"][c * L:(c + 1) * L] for c in range(len(chunks))]
  out = mm(chunks, ws) + params["b_out"]
  return out.reshape(B, F, J, -1)


def fusionnet_ref_f32(x, params):
  """Literal module math in f32 (per-proposal extractor, channel concat,
  DenseFC with concat) -- loose check that fold/bf16 preserve semantics."""
  B, H, F, J, C = x.shape
  N = F * J

  def ln(y, g, be):
    mu = jnp.mean(y, axis=(1, 2), keepdims=True)
    var = jnp.mean((y - mu) ** 2, axis=(1, 2), keepdims=True)
    return (y - mu) * jax.lax.rsqrt(var + LN_EPS) * g + be

  feats = [x[:, i].reshape(B, N, C) @ params["w_feat"] + params["b_feat"]
           for i in range(H)]
  feat = jnp.concatenate(feats, axis=-1)
  cur = ln(feat @ params["w_in"] + params["b_in"],
           params["g_in"], params["be_in"])
  for st in params["stages"]:
    y = ln(cur @ st["w"] + st["b"], st["g"], st["be"])
    y = jnp.where(y > 0, y, st["alpha"][0] * y)
    cur = jnp.concatenate([cur, y], axis=-1)
  out = cur @ params["w_out"] + params["b_out"]
  return out.reshape(B, F, J, -1)


# ----------------------------------------------------------------------------
if __name__ == "__main__":
  # Small shapes consistent with the module (real model: F=243, J=17, L=1024)
  B = 2               # batch
  NUM_PROPOSALS = 3   # args.num_proposals (H)
  F = 9               # frames
  J = 17              # joints
  HIDDEN = 16         # hidden_chanel
  OUT_CH = 3          # out_chanel
  LINEAR = 128        # linear_size
  NUM_STAGE = 2       # DenseFC num_stage

  key = jax.random.PRNGKey(0)
  k_x, k_p = jax.random.split(key)
  x = jax.random.normal(k_x, (B, NUM_PROPOSALS, F, J, 3), jnp.float32)
  params = make_params(k_p, num_frame=F, num_joints=J, hidden=HIDDEN,
                       out_ch=OUT_CH, num_proposals=NUM_PROPOSALS,
                       linear_size=LINEAR, num_stage=NUM_STAGE)

  out = jax.block_until_ready(jax.jit(fusionnet_forward)(x, params))
  assert out.shape == (B, F, J, OUT_CH), out.shape

  # strict check vs a reference that mirrors the kernel math (bf16 operands).
  ref_m = jax.block_until_ready(fusionnet_ref_matched(x, params))
  err_m = float(jnp.max(jnp.abs(out - ref_m)))
  assert err_m < 2e-2, f"mismatch vs matched reference: {err_m}"

  # loose check vs the literal f32 module math (validates the algebraic fold).
  ref_f = jax.block_until_ready(fusionnet_ref_f32(x, params))
  err_f = float(jnp.max(jnp.abs(out - ref_f)))
  assert jnp.allclose(out, ref_f, rtol=1e-1, atol=3e-1), (
      f"mismatch vs f32 module reference: {err_f}")

  print("KERNEL_OK")
</pallas_src>

<mosaic_0001>
module attributes {stable_mosaic.version = 11 : i64} {
  func.func @kernel(%arg0: i32, %arg1: i32, %arg2: memref<1x160x16xbf16, #tpu.memory_space<vmem>>, %arg3: memref<16x128xbf16, #tpu.memory_space<vmem>>, %arg4: memref<1x128xf32, #tpu.memory_space<vmem>>, %arg5: memref<1x160x128xf32, #tpu.memory_space<vmem>>, %arg6: memref<1x1x1xf32, #tpu.memory_space<vmem>>, %arg7: memref<1x1x1xf32, #tpu.memory_space<vmem>>, %arg8: memref<1x1xf32, #tpu.memory_space<vmem>>, %arg9: memref<1x1xf32, #tpu.memory_space<vmem>>) attributes {dimension_semantics = [#tpu.dimension_semantics<parallel>, #tpu.dimension_semantics<arbitrary>], iteration_bounds = array<i64: 2, 1>, scalar_prefetch = 0 : i64, scratch_operands = 2 : i64, tpu.core_type = #tpu.core_type<tc>, window_params = [{transform_indices = @transform_0, window_bounds = array<i64: 1, 160, 16>}, {pipeline_mode = #tpu.pipeline_mode<synchronous>, transform_indices = @transform_1, window_bounds = array<i64: 16, 128>}, {pipeline_mode = #tpu.pipeline_mode<synchronous>, transform_indices = @transform_2, window_bounds = array<i64: 1, 128>}, {transform_indices = @transform_3, window_bounds = array<i64: 1, 160, 128>}, {transform_indices = @transform_4, window_bounds = array<i64: 1, 1, 1>}, {transform_indices = @transform_5, window_bounds = array<i64: 1, 1, 1>}]} {
    %c0_i32 = arith.constant 0 : i32
    %0 = arith.cmpi eq, %arg1, %c0_i32 : i32
    %1 = arith.extui %0 : i1 to i32
    %c0_i32_0 = arith.constant 0 : i32
    %2 = arith.cmpi ne, %1, %c0_i32_0 : i32
    scf.if %2 {
      %cst_23 = arith.constant 0.000000e+00 : f32
      %41 = vector.broadcast %cst_23 : f32 to vector<1x1xf32>
      %c0_24 = arith.constant 0 : index
      %c0_25 = arith.constant 0 : index
      %42 = vector.load %arg8[%c0_24, %c0_25] : memref<1x1xf32, #tpu.memory_space<vmem>>, vector<1x1xf32>
      tpu.vector_store %arg8[%c0_24, %c0_25], %41 {strides = array<i32>} : memref<1x1xf32, #tpu.memory_space<vmem>>, vector<1x1xf32>,
      %cst_26 = arith.constant 0.000000e+00 : f32
      %43 = vector.broadcast %cst_26 : f32 to vector<1x1xf32>
      %c0_27 = arith.constant 0 : index
      %c0_28 = arith.constant 0 : index
      %44 = vector.load %arg9[%c0_27, %c0_28] : memref<1x1xf32, #tpu.memory_space<vmem>>, vector<1x1xf32>
      tpu.vector_store %arg9[%c0_27, %c0_28], %43 {strides = array<i32>} : memref<1x1xf32, #tpu.memory_space<vmem>>, vector<1x1xf32>,
    } else {
    }
    %c0 = arith.constant 0 : index
    %c0_1 = arith.constant 0 : index
    %c0_2 = arith.constant 0 : index
    %3 = vector.load %arg2[%c0, %c0_1, %c0_2] : memref<1x160x16xbf16, #tpu.memory_space<vmem>>, vector<1x160x16xbf16>
    %4 = vector.shape_cast %3 : vector<1x160x16xbf16> to vector<160x16xbf16>
    %c0_3 = arith.constant 0 : index
    %c0_4 = arith.constant 0 : index
    %5 = vector.load %arg3[%c0_3, %c0_4] : memref<16x128xbf16, #tpu.memory_space<vmem>>, vector<16x128xbf16>
    %cst = arith.constant dense<0.000000e+00> : vector<160x128xf32>
    %6 = tpu.matmul %4, %5, %cst {dimension_numbers = #tpu.dot_dimension_numbers<[1], [0], [0], [1], [0, 0, 1, 1], [], []>} : vector<160x16xbf16>, vector<16x128xbf16>, vector<160x128xf32> -> vector<160x128xf32>
    %c0_5 = arith.constant 0 : index
    %c0_6 = arith.constant 0 : index
    %7 = vector.load %arg4[%c0_5, %c0_6] : memref<1x128xf32, #tpu.memory_space<vmem>>, vector<1x128xf32>
    %8 = vector.broadcast %7 : vector<1x128xf32> to vector<160x128xf32>
    %9 = arith.addf %6, %8 : vector<160x128xf32>
    %10 = tpu.iota {dimensions = array<i32: 0>} : vector<160x128xi32>
    %c160_i32 = arith.constant 160 : i32
    %11 = arith.muli %arg1, %c160_i32 : i32
    %12 = vector.broadcast %11 : i32 to vector<160x128xi32>
    %13 = arith.addi %10, %12 : vector<160x128xi32>
    %c153_i32 = arith.constant 153 : i32
    %14 = vector.broadcast %c153_i32 : i32 to vector<160x128xi32>
    %15 = arith.cmpi slt, %13, %14 : vector<160x128xi32>
    %cst_7 = arith.constant 0.000000e+00 : f32
    %16 = vector.broadcast %cst_7 : f32 to vector<160x128xf32>
    %17 = arith.select %15, %9, %16 : vector<160x128xi1>, vector<160x128xf32>
    %c0_8 = arith.constant 0 : index
    %c0_9 = arith.constant 0 : index
    %18 = vector.load %arg8[%c0_8, %c0_9] : memref<1x1xf32, #tpu.memory_space<vmem>>, vector<1x1xf32>
    %19 = vector.shape_cast %17 : vector<160x128xf32> to vector<1x160x128xf32>
    %cst_10 = arith.constant dense<0.000000e+00> : vector<1xf32>
    %20 = vector.multi_reduction <add>, %19, %cst_10 [1, 2] : vector<1x160x128xf32> to vector<1xf32>
    %21 = vector.shape_cast %20 : vector<1xf32> to vector<1x1x1xf32>
    %22 = vector.extract %21[0, 0, 0] : f32 from vector<1x1x1xf32>
    %23 = vector.broadcast %22 : f32 to vector<1x1xf32>
    %24 = arith.addf %18, %23 : vector<1x1xf32>
    %c0_11 = arith.constant 0 : index
    %c0_12 = arith.constant 0 : index
    %25 = vector.load %arg8[%c0_11, %c0_12] : memref<1x1xf32, #tpu.memory_space<vmem>>, vector<1x1xf32>
    tpu.vector_store %arg8[%c0_11, %c0_12], %24 {strides = array<i32>} : memref<1x1xf32, #tpu.memory_space<vmem>>, vector<1x1xf32>,
    %c0_13 = arith.constant 0 : index
    %c0_14 = arith.constant 0 : index
    %26 = vector.load %arg9[%c0_13, %c0_14] : memref<1x1xf32, #tpu.memory_space<vmem>>, vector<1x1xf32>
    %27 = arith.mulf %17, %17 : vector<160x128xf32>
    %28 = vector.shape_cast %27 : vector<160x128xf32> to vector<1x160x128xf32>
    %cst_15 = arith.constant dense<0.000000e+00> : vector<1xf32>
    %29 = vector.multi_reduction <add>, %28, %cst_15 [1, 2] : vector<1x160x128xf32> to vector<1xf32>
    %30 = vector.shape_cast %29 : vector<1xf32> to vector<1x1x1xf32>
    %31 = vector.extract %30[0, 0, 0] : f32 from vector<1x1x1xf32>
    %32 = vector.broadcast %31 : f32 to vector<1x1xf32>
    %33 = arith.addf %26, %32 : vector<1x1xf32>
    %c0_16 = arith.constant 0 : index
    %c0_17 = arith.constant 0 : index
    %34 = vector.load %arg9[%c0_16, %c0_17] : memref<1x1xf32, #tpu.memory_space<vmem>>, vector<1x1xf32>
    tpu.vector_store %arg9[%c0_16, %c0_17], %33 {strides = array<i32>} : memref<1x1xf32, #tpu.memory_space<vmem>>, vector<1x1xf32>,
    %c0_18 = arith.constant 0 : index
    %c0_19 = arith.constant 0 : index
    %c0_20 = arith.constant 0 : index
    %35 = vector.load %arg5[%c0_18, %c0_19, %c0_20] : memref<1x160x128xf32, #tpu.memory_space<vmem>>, vector<1x160x128xf32>
    %36 = vector.shape_cast %35 : vector<1x160x128xf32> to vector<160x128xf32>
    %37 = vector.shape_cast %9 : vector<160x128xf32> to vector<1x160x128xf32>
    tpu.vector_store %arg5[%c0_18, %c0_19, %c0_20], %37 {strides = array<i32>} : memref<1x160x128xf32, #tpu.memory_space<vmem>>, vector<1x160x128xf32>,
    %c0_i32_21 = arith.constant 0 : i32
    %38 = arith.cmpi eq, %arg1, %c0_i32_21 : i32
    %39 = arith.extui %38 : i1 to i32
    %c0_i32_22 = arith.constant 0 : i32
    %40 = arith.cmpi ne, %39, %c0_i32_22 : i32
    scf.if %40 {
      %c0_23 = arith.constant 0 : index
      %c0_24 = arith.constant 0 : index
      %41 = vector.load %arg8[%c0_23, %c0_24] : memref<1x1xf32, #tpu.memory_space<vmem>>, vector<1x1xf32>
      %cst_25 = arith.constant 1.958400e+04 : f32
      %42 = vector.broadcast %cst_25 : f32 to vector<1x1xf32>
      %43 = arith.divf %41, %42 : vector<1x1xf32>
      %c0_26 = arith.constant 0 : index
      %c0_27 = arith.constant 0 : index
      %44 = vector.load %arg9[%c0_26, %c0_27] : memref<1x1xf32, #tpu.memory_space<vmem>>, vector<1x1xf32>
      %cst_28 = arith.constant 1.958400e+04 : f32
      %45 = vector.broadcast %cst_28 : f32 to vector<1x1xf32>
      %46 = arith.divf %44, %45 : vector<1x1xf32>
      %47 = arith.mulf %43, %43 : vector<1x1xf32>
      %48 = arith.subf %46, %47 : vector<1x1xf32>
      %c0_29 = arith.constant 0 : index
      %c0_30 = arith.constant 0 : index
      %c0_31 = arith.constant 0 : index
      %49 = vector.load %arg6[%c0_29, %c0_30, %c0_31] : memref<1x1x1xf32, #tpu.memory_space<vmem>>, vector<1x1x1xf32>
      %50 = vector.shape_cast %49 : vector<1x1x1xf32> to vector<1x1xf32>
      %51 = vector.shape_cast %43 : vector<1x1xf32> to vector<1x1x1xf32>
      tpu.vector_store %arg6[%c0_29, %c0_30, %c0_31], %51 {strides = array<i32>} : memref<1x1x1xf32, #tpu.memory_space<vmem>>, vector<1x1x1xf32>,
      %cst_32 = arith.constant 9.99999974E-6 : f32
      %52 = vector.broadcast %cst_32 : f32 to vector<1x1xf32>
      %53 = arith.addf %48, %52 : vector<1x1xf32>
      %54 = math.rsqrt %53 : vector<1x1xf32>
      %c0_33 = arith.constant 0 : index
      %c0_34 = arith.constant 0 : index
      %c0_35 = arith.constant 0 : index
      %55 = vector.load %arg7[%c0_33, %c0_34, %c0_35] : memref<1x1x1xf32, #tpu.memory_space<vmem>>, vector<1x1x1xf32>
      %56 = vector.shape_cast %55 : vector<1x1x1xf32> to vector<1x1xf32>
      %57 = vector.shape_cast %54 : vector<1x1xf32> to vector<1x1x1xf32>
      tpu.vector_store %arg7[%c0_33, %c0_34, %c0_35], %57 {strides = array<i32>} : memref<1x1x1xf32, #tpu.memory_space<vmem>>, vector<1x1x1xf32>,
    } else {
    }
    return
  }
  func.func @transform_0(%arg0: i32, %arg1: i32) -> (i32, i32, i32) {
    %c0_i32 = arith.constant 0 : i32
    %c0_i32_0 = arith.constant 0 : i32
    return %arg0, %arg1, %c0_i32 : i32, i32, i32
  }
  func.func @transform_1(%arg0: i32, %arg1: i32) -> (i32, i32) {
    %c0_i32 = arith.constant 0 : i32
    %c0_i32_0 = arith.constant 0 : i32
    %c0_i32_1 = arith.constant 0 : i32
    return %c0_i32, %c0_i32_0 : i32, i32
  }
  func.func @transform_2(%arg0: i32, %arg1: i32) -> (i32, i32) {
    %c0_i32 = arith.constant 0 : i32
    %c0_i32_0 = arith.constant 0 : i32
    %c0_i32_1 = arith.constant 0 : i32
    return %c0_i32, %c0_i32_0 : i32, i32
  }
  func.func @transform_3(%arg0: i32, %arg1: i32) -> (i32, i32, i32) {
    %c0_i32 = arith.constant 0 : i32
    %c0_i32_0 = arith.constant 0 : i32
    return %arg0, %arg1, %c0_i32 : i32, i32, i32
  }
  func.func @transform_4(%arg0: i32, %arg1: i32) -> (i32, i32, i32) {
    %c0_i32 = arith.constant 0 : i32
    %c0_i32_0 = arith.constant 0 : i32
    %c0_i32_1 = arith.constant 0 : i32
    return %arg0, %c0_i32, %c0_i32_0 : i32, i32, i32
  }
  func.func @transform_5(%arg0: i32, %arg1: i32) -> (i32, i32, i32) {
    %c0_i32 = arith.constant 0 : i32
    %c0_i32_0 = arith.constant 0 : i32
    %c0_i32_1 = arith.constant 0 : i32
    return %arg0, %c0_i32, %c0_i32_0 : i32, i32, i32
  }
}

module attributes {stable_mosaic.version = 11 : i64} {
  func.func @kernel(%arg0: i32, %arg1: i32, %arg2: memref<1x160x128xf32, #tpu.memory_space<vmem>>, %arg3: memref<1x1x1xf32, #tpu.memory_space<vmem>>, %arg4: memref<1x1x1xf32, #tpu.memory_space<vmem>>, %arg5: memref<160x128xf32, #tpu.memory_space<vmem>>, %arg6: memref<160x128xf32, #tpu.memory_space<vmem>>, %arg7: memref<1xf32, #tpu.memory_space<smem>>, %arg8: memref<1x160x128xbf16, #tpu.memory_space<vmem>>) attributes {dimension_semantics = [#tpu.dimension_semantics<parallel>, #tpu.dimension_semantics<parallel>], iteration_bounds = array<i64: 2, 1>, scalar_prefetch = 0 : i64, scratch_operands = 0 : i64, tpu.core_type = #tpu.core_type<tc>, window_params = [{transform_indices = @transform_0, window_bounds = array<i64: 1, 160, 128>}, {transform_indices = @transform_1, window_bounds = array<i64: 1, 1, 1>}, {transform_indices = @transform_2, window_bounds = array<i64: 1, 1, 1>}, {transform_indices = @transform_3, window_bounds = array<i64: 160, 128>}, {transform_indices = @transform_4, window_bounds = array<i64: 160, 128>}, {transform_indices = @transform_5, window_bounds = array<i64: 1>}, {transform_indices = @transform_6, window_bounds = array<i64: 1, 160, 128>}]} {
    %c0 = arith.constant 0 : index
    %c0_0 = arith.constant 0 : index
    %c0_1 = arith.constant 0 : index
    %0 = vector.load %arg2[%c0, %c0_0, %c0_1] : memref<1x160x128xf32, #tpu.memory_space<vmem>>, vector<1x160x128xf32>
    %1 = vector.shape_cast %0 : vector<1x160x128xf32> to vector<160x128xf32>
    %c0_2 = arith.constant 0 : index
    %c0_3 = arith.constant 0 : index
    %c0_4 = arith.constant 0 : index
    %2 = vector.load %arg3[%c0_2, %c0_3, %c0_4] : memref<1x1x1xf32, #tpu.memory_space<vmem>>, vector<1x1x1xf32>
    %3 = vector.shape_cast %2 : vector<1x1x1xf32> to vector<1x1xf32>
    %4 = vector.broadcast %3 : vector<1x1xf32> to vector<160x128xf32>
    %5 = arith.subf %1, %4 : vector<160x128xf32>
    %c0_5 = arith.constant 0 : index
    %c0_6 = arith.constant 0 : index
    %c0_7 = arith.constant 0 : index
    %6 = vector.load %arg4[%c0_5, %c0_6, %c0_7] : memref<1x1x1xf32, #tpu.memory_space<vmem>>, vector<1x1x1xf32>
    %7 = vector.shape_cast %6 : vector<1x1x1xf32> to vector<1x1xf32>
    %8 = vector.broadcast %7 : vector<1x1xf32> to vector<160x128xf32>
    %9 = arith.mulf %5, %8 : vector<160x128xf32>
    %c0_8 = arith.constant 0 : index
    %c0_9 = arith.constant 0 : index
    %10 = vector.load %arg5[%c0_8, %c0_9] : memref<160x128xf32, #tpu.memory_space<vmem>>, vector<160x128xf32>
    %11 = arith.mulf %9, %10 : vector<160x128xf32>
    %c0_10 = arith.constant 0 : index
    %c0_11 = arith.constant 0 : index
    %12 = vector.load %arg6[%c0_10, %c0_11] : memref<160x128xf32, #tpu.memory_space<vmem>>, vector<160x128xf32>
    %13 = arith.addf %11, %12 : vector<160x128xf32>
    %14 = arith.truncf %13 : vector<160x128xf32> to vector<160x128xbf16>
    %c0_12 = arith.constant 0 : index
    %c0_13 = arith.constant 0 : index
    %c0_14 = arith.constant 0 : index
    %15 = vector.load %arg8[%c0_12, %c0_13, %c0_14] : memref<1x160x128xbf16, #tpu.memory_space<vmem>>, vector<1x160x128xbf16>
    %16 = vector.shape_cast %15 : vector<1x160x128xbf16> to vector<160x128xbf16>
    %17 = vector.shape_cast %14 : vector<160x128xbf16> to vector<1x160x128xbf16>
    tpu.vector_store %arg8[%c0_12, %c0_13, %c0_14], %17 {strides = array<i32>} : memref<1x160x128xbf16, #tpu.memory_space<vmem>>, vector<1x160x128xbf16>,
    return
  }
  func.func @transform_0(%arg0: i32, %arg1: i32) -> (i32, i32, i32) {
    %c0_i32 = arith.constant 0 : i32
    %c0_i32_0 = arith.constant 0 : i32
    return %arg0, %arg1, %c0_i32 : i32, i32, i32
  }
  func.func @transform_1(%arg0: i32, %arg1: i32) -> (i32, i32, i32) {
    %c0_i32 = arith.constant 0 : i32
    %c0_i32_0 = arith.constant 0 : i32
    %c0_i32_1 = arith.constant 0 : i32
    return %arg0, %c0_i32, %c0_i32_0 : i32, i32, i32
  }
  func.func @transform_2(%arg0: i32, %arg1: i32) -> (i32, i32, i32) {
    %c0_i32 = arith.constant 0 : i32
    %c0_i32_0 = arith.constant 0 : i32
    %c0_i32_1 = arith.constant 0 : i32
    return %arg0, %c0_i32, %c0_i32_0 : i32, i32, i32
  }
  func.func @transform_3(%arg0: i32, %arg1: i32) -> (i32, i32) {
    %c0_i32 = arith.constant 0 : i32
    %c0_i32_0 = arith.constant 0 : i32
    return %arg1, %c0_i32 : i32, i32
  }
  func.func @transform_4(%arg0: i32, %arg1: i32) -> (i32, i32) {
    %c0_i32 = arith.constant 0 : i32
    %c0_i32_0 = arith.constant 0 : i32
    return %arg1, %c0_i32 : i32, i32
  }
  func.func @transform_5(%arg0: i32, %arg1: i32) -> i32 {
    %c0_i32 = arith.constant 0 : i32
    %c0_i32_0 = arith.constant 0 : i32
    return %c0_i32 : i32
  }
  func.func @transform_6(%arg0: i32, %arg1: i32) -> (i32, i32, i32) {
    %c0_i32 = arith.constant 0 : i32
    %c0_i32_0 = arith.constant 0 : i32
    return %arg0, %arg1, %c0_i32 : i32, i32, i32
  }
}

module attributes {stable_mosaic.version = 11 : i64} {
  func.func @kernel(%arg0: i32, %arg1: i32, %arg2: memref<1x160x128xbf16, #tpu.memory_space<vmem>>, %arg3: memref<128x128xbf16, #tpu.memory_space<vmem>>, %arg4: memref<1x128xf32, #tpu.memory_space<vmem>>, %arg5: memref<1x160x128xf32, #tpu.memory_space<vmem>>, %arg6: memref<1x1x1xf32, #tpu.memory_space<vmem>>, %arg7: memref<1x1x1xf32, #tpu.memory_space<vmem>>, %arg8: memref<1x1xf32, #tpu.memory_space<vmem>>, %arg9: memref<1x1xf32, #tpu.memory_space<vmem>>) attributes {dimension_semantics = [#tpu.dimension_semantics<parallel>, #tpu.dimension_semantics<arbitrary>], iteration_bounds = array<i64: 2, 1>, scalar_prefetch = 0 : i64, scratch_operands = 2 : i64, tpu.core_type = #tpu.core_type<tc>, window_params = [{transform_indices = @transform_0, window_bounds = array<i64: 1, 160, 128>}, {pipeline_mode = #tpu.pipeline_mode<synchronous>, transform_indices = @transform_1, window_bounds = array<i64: 128, 128>}, {pipeline_mode = #tpu.pipeline_mode<synchronous>, transform_indices = @transform_2, window_bounds = array<i64: 1, 128>}, {transform_indices = @transform_3, window_bounds = array<i64: 1, 160, 128>}, {transform_indices = @transform_4, window_bounds = array<i64: 1, 1, 1>}, {transform_indices = @transform_5, window_bounds = array<i64: 1, 1, 1>}]} {
    %c0_i32 = arith.constant 0 : i32
    %0 = arith.cmpi eq, %arg1, %c0_i32 : i32
    %1 = arith.extui %0 : i1 to i32
    %c0_i32_0 = arith.constant 0 : i32
    %2 = arith.cmpi ne, %1, %c0_i32_0 : i32
    scf.if %2 {
      %cst_23 = arith.constant 0.000000e+00 : f32
      %41 = vector.broadcast %cst_23 : f32 to vector<1x1xf32>
      %c0_24 = arith.constant 0 : index
      %c0_25 = arith.constant 0 : index
      %42 = vector.load %arg8[%c0_24, %c0_25] : memref<1x1xf32, #tpu.memory_space<vmem>>, vector<1x1xf32>
      tpu.vector_store %arg8[%c0_24, %c0_25], %41 {strides = array<i32>} : memref<1x1xf32, #tpu.memory_space<vmem>>, vector<1x1xf32>,
      %cst_26 = arith.constant 0.000000e+00 : f32
      %43 = vector.broadcast %cst_26 : f32 to vector<1x1xf32>
      %c0_27 = arith.constant 0 : index
      %c0_28 = arith.constant 0 : index
      %44 = vector.load %arg9[%c0_27, %c0_28] : memref<1x1xf32, #tpu.memory_space<vmem>>, vector<1x1xf32>
      tpu.vector_store %arg9[%c0_27, %c0_28], %43 {strides = array<i32>} : memref<1x1xf32, #tpu.memory_space<vmem>>, vector<1x1xf32>,
    } else {
    }
    %c0 = arith.constant 0 : index
    %c0_1 = arith.constant 0 : index
    %c0_2 = arith.constant 0 : index
    %3 = vector.load %arg2[%c0, %c0_1, %c0_2] : memref<1x160x128xbf16, #tpu.memory_space<vmem>>, vector<1x160x128xbf16>
    %4 = vector.shape_cast %3 : vector<1x160x128xbf16> to vector<160x128xbf16>
    %c0_3 = arith.constant 0 : index
    %c0_4 = arith.constant 0 : index
    %5 = vector.load %arg3[%c0_3, %c0_4] : memref<128x128xbf16, #tpu.memory_space<vmem>>, vector<128x128xbf16>
    %cst = arith.constant dense<0.000000e+00> : vector<160x128xf32>
    %6 = tpu.matmul %4, %5, %cst {dimension_numbers = #tpu.dot_dimension_numbers<[1], [0], [0], [1], [0, 0, 1, 1], [], []>} : vector<160x128xbf16>, vector<128x128xbf16>, vector<160x128xf32> -> vector<160x128xf32>
    %c0_5 = arith.constant 0 : index
    %c0_6 = arith.constant 0 : index
    %7 = vector.load %arg4[%c0_5, %c0_6] : memref<1x128xf32, #tpu.memory_space<vmem>>, vector<1x128xf32>
    %8 = vector.broadcast %7 : vector<1x128xf32> to vector<160x128xf32>
    %9 = arith.addf %6, %8 : vector<160x128xf32>
    %10 = tpu.iota {dimensions = array<i32: 0>} : vector<160x128xi32>
    %c160_i32 = arith.constant 160 : i32
    %11 = arith.muli %arg1, %c160_i32 : i32
    %12 = vector.broadcast %11 : i32 to vector<160x128xi32>
    %13 = arith.addi %10, %12 : vector<160x128xi32>
    %c153_i32 = arith.constant 153 : i32
    %14 = vector.broadcast %c153_i32 : i32 to vector<160x128xi32>
    %15 = arith.cmpi slt, %13, %14 : vector<160x128xi32>
    %cst_7 = arith.constant 0.000000e+00 : f32
    %16 = vector.broadcast %cst_7 : f32 to vector<160x128xf32>
    %17 = arith.select %15, %9, %16 : vector<160x128xi1>, vector<160x128xf32>
    %c0_8 = arith.constant 0 : index
    %c0_9 = arith.constant 0 : index
    %18 = vector.load %arg8[%c0_8, %c0_9] : memref<1x1xf32, #tpu.memory_space<vmem>>, vector<1x1xf32>
    %19 = vector.shape_cast %17 : vector<160x128xf32> to vector<1x160x128xf32>
    %cst_10 = arith.constant dense<0.000000e+00> : vector<1xf32>
    %20 = vector.multi_reduction <add>, %19, %cst_10 [1, 2] : vector<1x160x128xf32> to vector<1xf32>
    %21 = vector.shape_cast %20 : vector<1xf32> to vector<1x1x1xf32>
    %22 = vector.extract %21[0, 0, 0] : f32 from vector<1x1x1xf32>
    %23 = vector.broadcast %22 : f32 to vector<1x1xf32>
    %24 = arith.addf %18, %23 : vector<1x1xf32>
    %c0_11 = arith.constant 0 : index
    %c0_12 = arith.constant 0 : index
    %25 = vector.load %arg8[%c0_11, %c0_12] : memref<1x1xf32, #tpu.memory_space<vmem>>, vector<1x1xf32>
    tpu.vector_store %arg8[%c0_11, %c0_12], %24 {strides = array<i32>} : memref<1x1xf32, #tpu.memory_space<vmem>>, vector<1x1xf32>,
    %c0_13 = arith.constant 0 : index
    %c0_14 = arith.constant 0 : index
    %26 = vector.load %arg9[%c0_13, %c0_14] : memref<1x1xf32, #tpu.memory_space<vmem>>, vector<1x1xf32>
    %27 = arith.mulf %17, %17 : vector<160x128xf32>
    %28 = vector.shape_cast %27 : vector<160x128xf32> to vector<1x160x128xf32>
    %cst_15 = arith.constant dense<0.000000e+00> : vector<1xf32>
    %29 = vector.multi_reduction <add>, %28, %cst_15 [1, 2] : vector<1x160x128xf32> to vector<1xf32>
    %30 = vector.shape_cast %29 : vector<1xf32> to vector<1x1x1xf32>
    %31 = vector.extract %30[0, 0, 0] : f32 from vector<1x1x1xf32>
    %32 = vector.broadcast %31 : f32 to vector<1x1xf32>
    %33 = arith.addf %26, %32 : vector<1x1xf32>
    %c0_16 = arith.constant 0 : index
    %c0_17 = arith.constant 0 : index
    %34 = vector.load %arg9[%c0_16, %c0_17] : memref<1x1xf32, #tpu.memory_space<vmem>>, vector<1x1xf32>
    tpu.vector_store %arg9[%c0_16, %c0_17], %33 {strides = array<i32>} : memref<1x1xf32, #tpu.memory_space<vmem>>, vector<1x1xf32>,
    %c0_18 = arith.constant 0 : index
    %c0_19 = arith.constant 0 : index
    %c0_20 = arith.constant 0 : index
    %35 = vector.load %arg5[%c0_18, %c0_19, %c0_20] : memref<1x160x128xf32, #tpu.memory_space<vmem>>, vector<1x160x128xf32>
    %36 = vector.shape_cast %35 : vector<1x160x128xf32> to vector<160x128xf32>
    %37 = vector.shape_cast %9 : vector<160x128xf32> to vector<1x160x128xf32>
    tpu.vector_store %arg5[%c0_18, %c0_19, %c0_20], %37 {strides = array<i32>} : memref<1x160x128xf32, #tpu.memory_space<vmem>>, vector<1x160x128xf32>,
    %c0_i32_21 = arith.constant 0 : i32
    %38 = arith.cmpi eq, %arg1, %c0_i32_21 : i32
    %39 = arith.extui %38 : i1 to i32
    %c0_i32_22 = arith.constant 0 : i32
    %40 = arith.cmpi ne, %39, %c0_i32_22 : i32
    scf.if %40 {
      %c0_23 = arith.constant 0 : index
      %c0_24 = arith.constant 0 : index
      %41 = vector.load %arg8[%c0_23, %c0_24] : memref<1x1xf32, #tpu.memory_space<vmem>>, vector<1x1xf32>
      %cst_25 = arith.constant 1.958400e+04 : f32
      %42 = vector.broadcast %cst_25 : f32 to vector<1x1xf32>
      %43 = arith.divf %41, %42 : vector<1x1xf32>
      %c0_26 = arith.constant 0 : index
      %c0_27 = arith.constant 0 : index
      %44 = vector.load %arg9[%c0_26, %c0_27] : memref<1x1xf32, #tpu.memory_space<vmem>>, vector<1x1xf32>
      %cst_28 = arith.constant 1.958400e+04 : f32
      %45 = vector.broadcast %cst_28 : f32 to vector<1x1xf32>
      %46 = arith.divf %44, %45 : vector<1x1xf32>
      %47 = arith.mulf %43, %43 : vector<1x1xf32>
      %48 = arith.subf %46, %47 : vector<1x1xf32>
      %c0_29 = arith.constant 0 : index
      %c0_30 = arith.constant 0 : index
      %c0_31 = arith.constant 0 : index
      %49 = vector.load %arg6[%c0_29, %c0_30, %c0_31] : memref<1x1x1xf32, #tpu.memory_space<vmem>>, vector<1x1x1xf32>
      %50 = vector.shape_cast %49 : vector<1x1x1xf32> to vector<1x1xf32>
      %51 = vector.shape_cast %43 : vector<1x1xf32> to vector<1x1x1xf32>
      tpu.vector_store %arg6[%c0_29, %c0_30, %c0_31], %51 {strides = array<i32>} : memref<1x1x1xf32, #tpu.memory_space<vmem>>, vector<1x1x1xf32>,
      %cst_32 = arith.constant 9.99999974E-6 : f32
      %52 = vector.broadcast %cst_32 : f32 to vector<1x1xf32>
      %53 = arith.addf %48, %52 : vector<1x1xf32>
      %54 = math.rsqrt %53 : vector<1x1xf32>
      %c0_33 = arith.constant 0 : index
      %c0_34 = arith.constant 0 : index
      %c0_35 = arith.constant 0 : index
      %55 = vector.load %arg7[%c0_33, %c0_34, %c0_35] : memref<1x1x1xf32, #tpu.memory_space<vmem>>, vector<1x1x1xf32>
      %56 = vector.shape_cast %55 : vector<1x1x1xf32> to vector<1x1xf32>
      %57 = vector.shape_cast %54 : vector<1x1xf32> to vector<1x1x1xf32>
      tpu.vector_store %arg7[%c0_33, %c0_34, %c0_35], %57 {strides = array<i32>} : memref<1x1x1xf32, #tpu.memory_space<vmem>>, vector<1x1x1xf32>,
    } else {
    }
    return
  }
  func.func @transform_0(%arg0: i32, %arg1: i32) -> (i32, i32, i32) {
    %c0_i32 = arith.constant 0 : i32
    %c0_i32_0 = arith.constant 0 : i32
    return %arg0, %arg1, %c0_i32 : i32, i32, i32
  }
  func.func @transform_1(%arg0: i32, %arg1: i32) -> (i32, i32) {
    %c0_i32 = arith.constant 0 : i32
    %c0_i32_0 = arith.constant 0 : i32
    %c0_i32_1 = arith.constant 0 : i32
    return %c0_i32, %c0_i32_0 : i32, i32
  }
  func.func @transform_2(%arg0: i32, %arg1: i32) -> (i32, i32) {
    %c0_i32 = arith.constant 0 : i32
    %c0_i32_0 = arith.constant 0 : i32
    %c0_i32_1 = arith.constant 0 : i32
    return %c0_i32, %c0_i32_0 : i32, i32
  }
  func.func @transform_3(%arg0: i32, %arg1: i32) -> (i32, i32, i32) {
    %c0_i32 = arith.constant 0 : i32
    %c0_i32_0 = arith.constant 0 : i32
    return %arg0, %arg1, %c0_i32 : i32, i32, i32
  }
  func.func @transform_4(%arg0: i32, %arg1: i32) -> (i32, i32, i32) {
    %c0_i32 = arith.constant 0 : i32
    %c0_i32_0 = arith.constant 0 : i32
    %c0_i32_1 = arith.constant 0 : i32
    return %arg0, %c0_i32, %c0_i32_0 : i32, i32, i32
  }
  func.func @transform_5(%arg0: i32, %arg1: i32) -> (i32, i32, i32) {
    %c0_i32 = arith.constant 0 : i32
    %c0_i32_0 = arith.constant 0 : i32
    %c0_i32_1 = arith.constant 0 : i32
    return %arg0, %c0_i32, %c0_i32_0 : i32, i32, i32
  }
}

module attributes {stable_mosaic.version = 11 : i64} {
  func.func @kernel(%arg0: i32, %arg1: i32, %arg2: memref<1x160x128xf32, #tpu.memory_space<vmem>>, %arg3: memref<1x1x1xf32, #tpu.memory_space<vmem>>, %arg4: memref<1x1x1xf32, #tpu.memory_space<vmem>>, %arg5: memref<160x128xf32, #tpu.memory_space<vmem>>, %arg6: memref<160x128xf32, #tpu.memory_space<vmem>>, %arg7: memref<1xf32, #tpu.memory_space<smem>>, %arg8: memref<1x160x128xbf16, #tpu.memory_space<vmem>>) attributes {dimension_semantics = [#tpu.dimension_semantics<parallel>, #tpu.dimension_semantics<parallel>], iteration_bounds = array<i64: 2, 1>, scalar_prefetch = 0 : i64, scratch_operands = 0 : i64, tpu.core_type = #tpu.core_type<tc>, window_params = [{transform_indices = @transform_0, window_bounds = array<i64: 1, 160, 128>}, {transform_indices = @transform_1, window_bounds = array<i64: 1, 1, 1>}, {transform_indices = @transform_2, window_bounds = array<i64: 1, 1, 1>}, {transform_indices = @transform_3, window_bounds = array<i64: 160, 128>}, {transform_indices = @transform_4, window_bounds = array<i64: 160, 128>}, {transform_indices = @transform_5, window_bounds = array<i64: 1>}, {transform_indices = @transform_6, window_bounds = array<i64: 1, 160, 128>}]} {
    %c0 = arith.constant 0 : index
    %c0_0 = arith.constant 0 : index
    %c0_1 = arith.constant 0 : index
    %0 = vector.load %arg2[%c0, %c0_0, %c0_1] : memref<1x160x128xf32, #tpu.memory_space<vmem>>, vector<1x160x128xf32>
    %1 = vector.shape_cast %0 : vector<1x160x128xf32> to vector<160x128xf32>
    %c0_2 = arith.constant 0 : index
    %c0_3 = arith.constant 0 : index
    %c0_4 = arith.constant 0 : index
    %2 = vector.load %arg3[%c0_2, %c0_3, %c0_4] : memref<1x1x1xf32, #tpu.memory_space<vmem>>, vector<1x1x1xf32>
    %3 = vector.shape_cast %2 : vector<1x1x1xf32> to vector<1x1xf32>
    %4 = vector.broadcast %3 : vector<1x1xf32> to vector<160x128xf32>
    %5 = arith.subf %1, %4 : vector<160x128xf32>
    %c0_5 = arith.constant 0 : index
    %c0_6 = arith.constant 0 : index
    %c0_7 = arith.constant 0 : index
    %6 = vector.load %arg4[%c0_5, %c0_6, %c0_7] : memref<1x1x1xf32, #tpu.memory_space<vmem>>, vector<1x1x1xf32>
    %7 = vector.shape_cast %6 : vector<1x1x1xf32> to vector<1x1xf32>
    %8 = vector.broadcast %7 : vector<1x1xf32> to vector<160x128xf32>
    %9 = arith.mulf %5, %8 : vector<160x128xf32>
    %c0_8 = arith.constant 0 : index
    %c0_9 = arith.constant 0 : index
    %10 = vector.load %arg5[%c0_8, %c0_9] : memref<160x128xf32, #tpu.memory_space<vmem>>, vector<160x128xf32>
    %11 = arith.mulf %9, %10 : vector<160x128xf32>
    %c0_10 = arith.constant 0 : index
    %c0_11 = arith.constant 0 : index
    %12 = vector.load %arg6[%c0_10, %c0_11] : memref<160x128xf32, #tpu.memory_space<vmem>>, vector<160x128xf32>
    %13 = arith.addf %11, %12 : vector<160x128xf32>
    %c0_12 = arith.constant 0 : index
    %14 = memref.load %arg7[%c0_12] : memref<1xf32, #tpu.memory_space<smem>>
    %cst = arith.constant 0.000000e+00 : f32
    %15 = vector.broadcast %cst : f32 to vector<160x128xf32>
    %16 = arith.cmpf ogt, %13, %15 : vector<160x128xf32>
    %17 = vector.broadcast %14 : f32 to vector<160x128xf32>
    %18 = arith.mulf %17, %13 : vector<160x128xf32>
    %19 = arith.select %16, %13, %18 : vector<160x128xi1>, vector<160x128xf32>
    %20 = arith.truncf %19 : vector<160x128xf32> to vector<160x128xbf16>
    %c0_13 = arith.constant 0 : index
    %c0_14 = arith.constant 0 : index
    %c0_15 = arith.constant 0 : index
    %21 = vector.load %arg8[%c0_13, %c0_14, %c0_15] : memref<1x160x128xbf16, #tpu.memory_space<vmem>>, vector<1x160x128xbf16>
    %22 = vector.shape_cast %21 : vector<1x160x128xbf16> to vector<160x128xbf16>
    %23 = vector.shape_cast %20 : vector<160x128xbf16> to vector<1x160x128xbf16>
    tpu.vector_store %arg8[%c0_13, %c0_14, %c0_15], %23 {strides = array<i32>} : memref<1x160x128xbf16, #tpu.memory_space<vmem>>, vector<1x160x128xbf16>,
    return
  }
  func.func @transform_0(%arg0: i32, %arg1: i32) -> (i32, i32, i32) {
    %c0_i32 = arith.constant 0 : i32
    %c0_i32_0 = arith.constant 0 : i32
    return %arg0, %arg1, %c0_i32 : i32, i32, i32
  }
  func.func @transform_1(%arg0: i32, %arg1: i32) -> (i32, i32, i32) {
    %c0_i32 = arith.constant 0 : i32
    %c0_i32_0 = arith.constant 0 : i32
    %c0_i32_1 = arith.constant 0 : i32
    return %arg0, %c0_i32, %c0_i32_0 : i32, i32, i32
  }
  func.func @transform_2(%arg0: i32, %arg1: i32) -> (i32, i32, i32) {
    %c0_i32 = arith.constant 0 : i32
    %c0_i32_0 = arith.constant 0 : i32
    %c0_i32_1 = arith.constant 0 : i32
    return %arg0, %c0_i32, %c0_i32_0 : i32, i32, i32
  }
  func.func @transform_3(%arg0: i32, %arg1: i32) -> (i32, i32) {
    %c0_i32 = arith.constant 0 : i32
    %c0_i32_0 = arith.constant 0 : i32
    return %arg1, %c0_i32 : i32, i32
  }
  func.func @transform_4(%arg0: i32, %arg1: i32) -> (i32, i32) {
    %c0_i32 = arith.constant 0 : i32
    %c0_i32_0 = arith.constant 0 : i32
    return %arg1, %c0_i32 : i32, i32
  }
  func.func @transform_5(%arg0: i32, %arg1: i32) -> i32 {
    %c0_i32 = arith.constant 0 : i32
    %c0_i32_0 = arith.constant 0 : i32
    return %c0_i32 : i32
  }
  func.func @transform_6(%arg0: i32, %arg1: i32) -> (i32, i32, i32) {
    %c0_i32 = arith.constant 0 : i32
    %c0_i32_0 = arith.constant 0 : i32
    return %arg0, %arg1, %c0_i32 : i32, i32, i32
  }
}

module attributes {stable_mosaic.version = 11 : i64} {
  func.func @kernel(%arg0: i32, %arg1: i32, %arg2: memref<1x160x128xbf16, #tpu.memory_space<vmem>>, %arg3: memref<1x160x128xbf16, #tpu.memory_space<vmem>>, %arg4: memref<128x128xbf16, #tpu.memory_space<vmem>>, %arg5: memref<128x128xbf16, #tpu.memory_space<vmem>>, %arg6: memref<1x128xf32, #tpu.memory_space<vmem>>, %arg7: memref<1x160x128xf32, #tpu.memory_space<vmem>>, %arg8: memref<1x1x1xf32, #tpu.memory_space<vmem>>, %arg9: memref<1x1x1xf32, #tpu.memory_space<vmem>>, %arg10: memref<1x1xf32, #tpu.memory_space<vmem>>, %arg11: memref<1x1xf32, #tpu.memory_space<vmem>>) attributes {dimension_semantics = [#tpu.dimension_semantics<parallel>, #tpu.dimension_semantics<arbitrary>], iteration_bounds = array<i64: 2, 1>, scalar_prefetch = 0 : i64, scratch_operands = 2 : i64, tpu.core_type = #tpu.core_type<tc>, window_params = [{transform_indices = @transform_0, window_bounds = array<i64: 1, 160, 128>}, {transform_indices = @transform_1, window_bounds = array<i64: 1, 160, 128>}, {pipeline_mode = #tpu.pipeline_mode<synchronous>, transform_indices = @transform_2, window_bounds = array<i64: 128, 128>}, {pipeline_mode = #tpu.pipeline_mode<synchronous>, transform_indices = @transform_3, window_bounds = array<i64: 128, 128>}, {pipeline_mode = #tpu.pipeline_mode<synchronous>, transform_indices = @transform_4, window_bounds = array<i64: 1, 128>}, {transform_indices = @transform_5, window_bounds = array<i64: 1, 160, 128>}, {transform_indices = @transform_6, window_bounds = array<i64: 1, 1, 1>}, {transform_indices = @transform_7, window_bounds = array<i64: 1, 1, 1>}]} {
    %c0_i32 = arith.constant 0 : i32
    %0 = arith.cmpi eq, %arg1, %c0_i32 : i32
    %1 = arith.extui %0 : i1 to i32
    %c0_i32_0 = arith.constant 0 : i32
    %2 = arith.cmpi ne, %1, %c0_i32_0 : i32
    scf.if %2 {
      %cst_29 = arith.constant 0.000000e+00 : f32
      %46 = vector.broadcast %cst_29 : f32 to vector<1x1xf32>
      %c0_30 = arith.constant 0 : index
      %c0_31 = arith.constant 0 : index
      %47 = vector.load %arg10[%c0_30, %c0_31] : memref<1x1xf32, #tpu.memory_space<vmem>>, vector<1x1xf32>
      tpu.vector_store %arg10[%c0_30, %c0_31], %46 {strides = array<i32>} : memref<1x1xf32, #tpu.memory_space<vmem>>, vector<1x1xf32>,
      %cst_32 = arith.constant 0.000000e+00 : f32
      %48 = vector.broadcast %cst_32 : f32 to vector<1x1xf32>
      %c0_33 = arith.constant 0 : index
      %c0_34 = arith.constant 0 : index
      %49 = vector.load %arg11[%c0_33, %c0_34] : memref<1x1xf32, #tpu.memory_space<vmem>>, vector<1x1xf32>
      tpu.vector_store %arg11[%c0_33, %c0_34], %48 {strides = array<i32>} : memref<1x1xf32, #tpu.memory_space<vmem>>, vector<1x1xf32>,
    } else {
    }
    %c0 = arith.constant 0 : index
    %c0_1 = arith.constant 0 : index
    %c0_2 = arith.constant 0 : index
    %3 = vector.load %arg2[%c0, %c0_1, %c0_2] : memref<1x160x128xbf16, #tpu.memory_space<vmem>>, vector<1x160x128xbf16>
    %4 = vector.shape_cast %3 : vector<1x160x128xbf16> to vector<160x128xbf16>
    %c0_3 = arith.constant 0 : index
    %c0_4 = arith.constant 0 : index
    %5 = vector.load %arg4[%c0_3, %c0_4] : memref<128x128xbf16, #tpu.memory_space<vmem>>, vector<128x128xbf16>
    %cst = arith.constant dense<0.000000e+00> : vector<160x128xf32>
    %6 = tpu.matmul %4, %5, %cst {dimension_numbers = #tpu.dot_dimension_numbers<[1], [0], [0], [1], [0, 0, 1, 1], [], []>} : vector<160x128xbf16>, vector<128x128xbf16>, vector<160x128xf32> -> vector<160x128xf32>
    %c0_5 = arith.constant 0 : index
    %c0_6 = arith.constant 0 : index
    %c0_7 = arith.constant 0 : index
    %7 = vector.load %arg3[%c0_5, %c0_6, %c0_7] : memref<1x160x128xbf16, #tpu.memory_space<vmem>>, vector<1x160x128xbf16>
    %8 = vector.shape_cast %7 : vector<1x160x128xbf16> to vector<160x128xbf16>
    %c0_8 = arith.constant 0 : index
    %c0_9 = arith.constant 0 : index
    %9 = vector.load %arg5[%c0_8, %c0_9] : memref<128x128xbf16, #tpu.memory_space<vmem>>, vector<128x128xbf16>
    %cst_10 = arith.constant dense<0.000000e+00> : vector<160x128xf32>
    %10 = tpu.matmul %8, %9, %cst_10 {dimension_numbers = #tpu.dot_dimension_numbers<[1], [0], [0], [1], [0, 0, 1, 1], [], []>} : vector<160x128xbf16>, vector<128x128xbf16>, vector<160x128xf32> -> vector<160x128xf32>
    %11 = arith.addf %6, %10 : vector<160x128xf32>
    %c0_11 = arith.constant 0 : index
    %c0_12 = arith.constant 0 : index
    %12 = vector.load %arg6[%c0_11, %c0_12] : memref<1x128xf32, #tpu.memory_space<vmem>>, vector<1x128xf32>
    %13 = vector.broadcast %12 : vector<1x128xf32> to vector<160x128xf32>
    %14 = arith.addf %11, %13 : vector<160x128xf32>
    %15 = tpu.iota {dimensions = array<i32: 0>} : vector<160x128xi32>
    %c160_i32 = arith.constant 160 : i32
    %16 = arith.muli %arg1, %c160_i32 : i32
    %17 = vector.broadcast %16 : i32 to vector<160x128xi32>
    %18 = arith.addi %15, %17 : vector<160x128xi32>
    %c153_i32 = arith.constant 153 : i32
    %19 = vector.broadcast %c153_i32 : i32 to vector<160x128xi32>
    %20 = arith.cmpi slt, %18, %19 : vector<160x128xi32>
    %cst_13 = arith.constant 0.000000e+00 : f32
    %21 = vector.broadcast %cst_13 : f32 to vector<160x128xf32>
    %22 = arith.select %20, %14, %21 : vector<160x128xi1>, vector<160x128xf32>
    %c0_14 = arith.constant 0 : index
    %c0_15 = arith.constant 0 : index
    %23 = vector.load %arg10[%c0_14, %c0_15] : memref<1x1xf32, #tpu.memory_space<vmem>>, vector<1x1xf32>
    %24 = vector.shape_cast %22 : vector<160x128xf32> to vector<1x160x128xf32>
    %cst_16 = arith.constant dense<0.000000e+00> : vector<1xf32>
    %25 = vector.multi_reduction <add>, %24, %cst_16 [1, 2] : vector<1x160x128xf32> to vector<1xf32>
    %26 = vector.shape_cast %25 : vector<1xf32> to vector<1x1x1xf32>
    %27 = vector.extract %26[0, 0, 0] : f32 from vector<1x1x1xf32>
    %28 = vector.broadcast %27 : f32 to vector<1x1xf32>
    %29 = arith.addf %23, %28 : vector<1x1xf32>
    %c0_17 = arith.constant 0 : index
    %c0_18 = arith.constant 0 : index
    %30 = vector.load %arg10[%c0_17, %c0_18] : memref<1x1xf32, #tpu.memory_space<vmem>>, vector<1x1xf32>
    tpu.vector_store %arg10[%c0_17, %c0_18], %29 {strides = array<i32>} : memref<1x1xf32, #tpu.memory_space<vmem>>, vector<1x1xf32>,
    %c0_19 = arith.constant 0 : index
    %c0_20 = arith.constant 0 : index
    %31 = vector.load %arg11[%c0_19, %c0_20] : memref<1x1xf32, #tpu.memory_space<vmem>>, vector<1x1xf32>
    %32 = arith.mulf %22, %22 : vector<160x128xf32>
    %33 = vector.shape_cast %32 : vector<160x128xf32> to vector<1x160x128xf32>
    %cst_21 = arith.constant dense<0.000000e+00> : vector<1xf32>
    %34 = vector.multi_reduction <add>, %33, %cst_21 [1, 2] : vector<1x160x128xf32> to vector<1xf32>
    %35 = vector.shape_cast %34 : vector<1xf32> to vector<1x1x1xf32>
    %36 = vector.extract %35[0, 0, 0] : f32 from vector<1x1x1xf32>
    %37 = vector.broadcast %36 : f32 to vector<1x1xf32>
    %38 = arith.addf %31, %37 : vector<1x1xf32>
    %c0_22 = arith.constant 0 : index
    %c0_23 = arith.constant 0 : index
    %39 = vector.load %arg11[%c0_22, %c0_23] : memref<1x1xf32, #tpu.memory_space<vmem>>, vector<1x1xf32>
    tpu.vector_store %arg11[%c0_22, %c0_23], %38 {strides = array<i32>} : memref<1x1xf32, #tpu.memory_space<vmem>>, vector<1x1xf32>,
    %c0_24 = arith.constant 0 : index
    %c0_25 = arith.constant 0 : index
    %c0_26 = arith.constant 0 : index
    %40 = vector.load %arg7[%c0_24, %c0_25, %c0_26] : memref<1x160x128xf32, #tpu.memory_space<vmem>>, vector<1x160x128xf32>
    %41 = vector.shape_cast %40 : vector<1x160x128xf32> to vector<160x128xf32>
    %42 = vector.shape_cast %14 : vector<160x128xf32> to vector<1x160x128xf32>
    tpu.vector_store %arg7[%c0_24, %c0_25, %c0_26], %42 {strides = array<i32>} : memref<1x160x128xf32, #tpu.memory_space<vmem>>, vector<1x160x128xf32>,
    %c0_i32_27 = arith.constant 0 : i32
    %43 = arith.cmpi eq, %arg1, %c0_i32_27 : i32
    %44 = arith.extui %43 : i1 to i32
    %c0_i32_28 = arith.constant 0 : i32
    %45 = arith.cmpi ne, %44, %c0_i32_28 : i32
    scf.if %45 {
      %c0_29 = arith.constant 0 : index
      %c0_30 = arith.constant 0 : index
      %46 = vector.load %arg10[%c0_29, %c0_30] : memref<1x1xf32, #tpu.memory_space<vmem>>, vector<1x1xf32>
      %cst_31 = arith.constant 1.958400e+04 : f32
      %47 = vector.broadcast %cst_31 : f32 to vector<1x1xf32>
      %48 = arith.divf %46, %47 : vector<1x1xf32>
      %c0_32 = arith.constant 0 : index
      %c0_33 = arith.constant 0 : index
      %49 = vector.load %arg11[%c0_32, %c0_33] : memref<1x1xf32, #tpu.memory_space<vmem>>, vector<1x1xf32>
      %cst_34 = arith.constant 1.958400e+04 : f32
      %50 = vector.broadcast %cst_34 : f32 to vector<1x1xf32>
      %51 = arith.divf %49, %50 : vector<1x1xf32>
      %52 = arith.mulf %48, %48 : vector<1x1xf32>
      %53 = arith.subf %51, %52 : vector<1x1xf32>
      %c0_35 = arith.constant 0 : index
      %c0_36 = arith.constant 0 : index
      %c0_37 = arith.constant 0 : index
      %54 = vector.load %arg8[%c0_35, %c0_36, %c0_37] : memref<1x1x1xf32, #tpu.memory_space<vmem>>, vector<1x1x1xf32>
      %55 = vector.shape_cast %54 : vector<1x1x1xf32> to vector<1x1xf32>
      %56 = vector.shape_cast %48 : vector<1x1xf32> to vector<1x1x1xf32>
      tpu.vector_store %arg8[%c0_35, %c0_36, %c0_37], %56 {strides = array<i32>} : memref<1x1x1xf32, #tpu.memory_space<vmem>>, vector<1x1x1xf32>,
      %cst_38 = arith.constant 9.99999974E-6 : f32
      %57 = vector.broadcast %cst_38 : f32 to vector<1x1xf32>
      %58 = arith.addf %53, %57 : vector<1x1xf32>
      %59 = math.rsqrt %58 : vector<1x1xf32>
      %c0_39 = arith.constant 0 : index
      %c0_40 = arith.constant 0 : index
      %c0_41 = arith.constant 0 : index
      %60 = vector.load %arg9[%c0_39, %c0_40, %c0_41] : memref<1x1x1xf32, #tpu.memory_space<vmem>>, vector<1x1x1xf32>
      %61 = vector.shape_cast %60 : vector<1x1x1xf32> to vector<1x1xf32>
      %62 = vector.shape_cast %59 : vector<1x1xf32> to vector<1x1x1xf32>
      tpu.vector_store %arg9[%c0_39, %c0_40, %c0_41], %62 {strides = array<i32>} : memref<1x1x1xf32, #tpu.memory_space<vmem>>, vector<1x1x1xf32>,
    } else {
    }
    return
  }
  func.func @transform_0(%arg0: i32, %arg1: i32) -> (i32, i32, i32) {
    %c0_i32 = arith.constant 0 : i32
    %c0_i32_0 = arith.constant 0 : i32
    return %arg0, %arg1, %c0_i32 : i32, i32, i32
  }
  func.func @transform_1(%arg0: i32, %arg1: i32) -> (i32, i32, i32) {
    %c0_i32 = arith.constant 0 : i32
    %c0_i32_0 = arith.constant 0 : i32
    return %arg0, %arg1, %c0_i32 : i32, i32, i32
  }
  func.func @transform_2(%arg0: i32, %arg1: i32) -> (i32, i32) {
    %c0_i32 = arith.constant 0 : i32
    %c0_i32_0 = arith.constant 0 : i32
    %c0_i32_1 = arith.constant 0 : i32
    return %c0_i32, %c0_i32_0 : i32, i32
  }
  func.func @transform_3(%arg0: i32, %arg1: i32) -> (i32, i32) {
    %c0_i32 = arith.constant 0 : i32
    %c0_i32_0 = arith.constant 0 : i32
    %c0_i32_1 = arith.constant 0 : i32
    return %c0_i32, %c0_i32_0 : i32, i32
  }
  func.func @transform_4(%arg0: i32, %arg1: i32) -> (i32, i32) {
    %c0_i32 = arith.constant 0 : i32
    %c0_i32_0 = arith.constant 0 : i32
    %c0_i32_1 = arith.constant 0 : i32
    return %c0_i32, %c0_i32_0 : i32, i32
  }
  func.func @transform_5(%arg0: i32, %arg1: i32) -> (i32, i32, i32) {
    %c0_i32 = arith.constant 0 : i32
    %c0_i32_0 = arith.constant 0 : i32
    return %arg0, %arg1, %c0_i32 : i32, i32, i32
  }
  func.func @transform_6(%arg0: i32, %arg1: i32) -> (i32, i32, i32) {
    %c0_i32 = arith.constant 0 : i32
    %c0_i32_0 = arith.constant 0 : i32
    %c0_i32_1 = arith.constant 0 : i32
    return %arg0, %c0_i32, %c0_i32_0 : i32, i32, i32
  }
  func.func @transform_7(%arg0: i32, %arg1: i32) -> (i32, i32, i32) {
    %c0_i32 = arith.constant 0 : i32
    %c0_i32_0 = arith.constant 0 : i32
    %c0_i32_1 = arith.constant 0 : i32
    return %arg0, %c0_i32, %c0_i32_0 : i32, i32, i32
  }
}

module attributes {stable_mosaic.version = 11 : i64} {
  func.func @kernel(%arg0: i32, %arg1: i32, %arg2: memref<1x160x128xbf16, #tpu.memory_space<vmem>>, %arg3: memref<1x160x128xbf16, #tpu.memory_space<vmem>>, %arg4: memref<1x160x128xbf16, #tpu.memory_space<vmem>>, %arg5: memref<128x128xbf16, #tpu.memory_space<vmem>>, %arg6: memref<128x128xbf16, #tpu.memory_space<vmem>>, %arg7: memref<128x128xbf16, #tpu.memory_space<vmem>>, %arg8: memref<1x128xf32, #tpu.memory_space<vmem>>, %arg9: memref<1x160x128xf32, #tpu.memory_space<vmem>>) attributes {dimension_semantics = [#tpu.dimension_semantics<parallel>, #tpu.dimension_semantics<parallel>], iteration_bounds = array<i64: 2, 1>, scalar_prefetch = 0 : i64, scratch_operands = 0 : i64, tpu.core_type = #tpu.core_type<tc>, window_params = [{transform_indices = @transform_0, window_bounds = array<i64: 1, 160, 128>}, {transform_indices = @transform_1, window_bounds = array<i64: 1, 160, 128>}, {transform_indices = @transform_2, window_bounds = array<i64: 1, 160, 128>}, {pipeline_mode = #tpu.pipeline_mode<synchronous>, transform_indices = @transform_3, window_bounds = array<i64: 128, 128>}, {pipeline_mode = #tpu.pipeline_mode<synchronous>, transform_indices = @transform_4, window_bounds = array<i64: 128, 128>}, {pipeline_mode = #tpu.pipeline_mode<synchronous>, transform_indices = @transform_5, window_bounds = array<i64: 128, 128>}, {pipeline_mode = #tpu.pipeline_mode<synchronous>, transform_indices = @transform_6, window_bounds = array<i64: 1, 128>}, {transform_indices = @transform_7, window_bounds = array<i64: 1, 160, 128>}]} {
    %c0 = arith.constant 0 : index
    %c0_0 = arith.constant 0 : index
    %c0_1 = arith.constant 0 : index
    %0 = vector.load %arg2[%c0, %c0_0, %c0_1] : memref<1x160x128xbf16, #tpu.memory_space<vmem>>, vector<1x160x128xbf16>
    %1 = vector.shape_cast %0 : vector<1x160x128xbf16> to vector<160x128xbf16>
    %c0_2 = arith.constant 0 : index
    %c0_3 = arith.constant 0 : index
    %2 = vector.load %arg5[%c0_2, %c0_3] : memref<128x128xbf16, #tpu.memory_space<vmem>>, vector<128x128xbf16>
    %cst = arith.constant dense<0.000000e+00> : vector<160x128xf32>
    %3 = tpu.matmul %1, %2, %cst {dimension_numbers = #tpu.dot_dimension_numbers<[1], [0], [0], [1], [0, 0, 1, 1], [], []>} : vector<160x128xbf16>, vector<128x128xbf16>, vector<160x128xf32> -> vector<160x128xf32>
    %c0_4 = arith.constant 0 : index
    %c0_5 = arith.constant 0 : index
    %c0_6 = arith.constant 0 : index
    %4 = vector.load %arg3[%c0_4, %c0_5, %c0_6] : memref<1x160x128xbf16, #tpu.memory_space<vmem>>, vector<1x160x128xbf16>
    %5 = vector.shape_cast %4 : vector<1x160x128xbf16> to vector<160x128xbf16>
    %c0_7 = arith.constant 0 : index
    %c0_8 = arith.constant 0 : index
    %6 = vector.load %arg6[%c0_7, %c0_8] : memref<128x128xbf16, #tpu.memory_space<vmem>>, vector<128x128xbf16>
    %cst_9 = arith.constant dense<0.000000e+00> : vector<160x128xf32>
    %7 = tpu.matmul %5, %6, %cst_9 {dimension_numbers = #tpu.dot_dimension_numbers<[1], [0], [0], [1], [0, 0, 1, 1], [], []>} : vector<160x128xbf16>, vector<128x128xbf16>, vector<160x128xf32> -> vector<160x128xf32>
    %8 = arith.addf %3, %7 : vector<160x128xf32>
    %c0_10 = arith.constant 0 : index
    %c0_11 = arith.constant 0 : index
    %c0_12 = arith.constant 0 : index
    %9 = vector.load %arg4[%c0_10, %c0_11, %c0_12] : memref<1x160x128xbf16, #tpu.memory_space<vmem>>, vector<1x160x128xbf16>
    %10 = vector.shape_cast %9 : vector<1x160x128xbf16> to vector<160x128xbf16>
    %c0_13 = arith.constant 0 : index
    %c0_14 = arith.constant 0 : index
    %11 = vector.load %arg7[%c0_13, %c0_14] : memref<128x128xbf16, #tpu.memory_space<vmem>>, vector<128x128xbf16>
    %cst_15 = arith.constant dense<0.000000e+00> : vector<160x128xf32>
    %12 = tpu.matmul %10, %11, %cst_15 {dimension_numbers = #tpu.dot_dimension_numbers<[1], [0], [0], [1], [0, 0, 1, 1], [], []>} : vector<160x128xbf16>, vector<128x128xbf16>, vector<160x128xf32> -> vector<160x128xf32>
    %13 = arith.addf %8, %12 : vector<160x128xf32>
    %c0_16 = arith.constant 0 : index
    %c0_17 = arith.constant 0 : index
    %14 = vector.load %arg8[%c0_16, %c0_17] : memref<1x128xf32, #tpu.memory_space<vmem>>, vector<1x128xf32>
    %15 = vector.broadcast %14 : vector<1x128xf32> to vector<160x128xf32>
    %16 = arith.addf %13, %15 : vector<160x128xf32>
    %c0_18 = arith.constant 0 : index
    %c0_19 = arith.constant 0 : index
    %c0_20 = arith.constant 0 : index
    %17 = vector.load %arg9[%c0_18, %c0_19, %c0_20] : memref<1x160x128xf32, #tpu.memory_space<vmem>>, vector<1x160x128xf32>
    %18 = vector.shape_cast %17 : vector<1x160x128xf32> to vector<160x128xf32>
    %19 = vector.shape_cast %16 : vector<160x128xf32> to vector<1x160x128xf32>
    tpu.vector_store %arg9[%c0_18, %c0_19, %c0_20], %19 {strides = array<i32>} : memref<1x160x128xf32, #tpu.memory_space<vmem>>, vector<1x160x128xf32>,
    return
  }
  func.func @transform_0(%arg0: i32, %arg1: i32) -> (i32, i32, i32) {
    %c0_i32 = arith.constant 0 : i32
    %c0_i32_0 = arith.constant 0 : i32
    return %arg0, %arg1, %c0_i32 : i32, i32, i32
  }
  func.func @transform_1(%arg0: i32, %arg1: i32) -> (i32, i32, i32) {
    %c0_i32 = arith.constant 0 : i32
    %c0_i32_0 = arith.constant 0 : i32
    return %arg0, %arg1, %c0_i32 : i32, i32, i32
  }
  func.func @transform_2(%arg0: i32, %arg1: i32) -> (i32, i32, i32) {
    %c0_i32 = arith.constant 0 : i32
    %c0_i32_0 = arith.constant 0 : i32
    return %arg0, %arg1, %c0_i32 : i32, i32, i32
  }
  func.func @transform_3(%arg0: i32, %arg1: i32) -> (i32, i32) {
    %c0_i32 = arith.constant 0 : i32
    %c0_i32_0 = arith.constant 0 : i32
    %c0_i32_1 = arith.constant 0 : i32
    return %c0_i32, %c0_i32_0 : i32, i32
  }
  func.func @transform_4(%arg0: i32, %arg1: i32) -> (i32, i32) {
    %c0_i32 = arith.constant 0 : i32
    %c0_i32_0 = arith.constant 0 : i32
    %c0_i32_1 = arith.constant 0 : i32
    return %c0_i32, %c0_i32_0 : i32, i32
  }
  func.func @transform_5(%arg0: i32, %arg1: i32) -> (i32, i32) {
    %c0_i32 = arith.constant 0 : i32
    %c0_i32_0 = arith.constant 0 : i32
    %c0_i32_1 = arith.constant 0 : i32
    return %c0_i32, %c0_i32_0 : i32, i32
  }
  func.func @transform_6(%arg0: i32, %arg1: i32) -> (i32, i32) {
    %c0_i32 = arith.constant 0 : i32
    %c0_i32_0 = arith.constant 0 : i32
    %c0_i32_1 = arith.constant 0 : i32
    return %c0_i32, %c0_i32_0 : i32, i32
  }
  func.func @transform_7(%arg0: i32, %arg1: i32) -> (i32, i32, i32) {
    %c0_i32 = arith.constant 0 : i32
    %c0_i32_0 = arith.constant 0 : i32
    return %arg0, %arg1, %c0_i32 : i32, i32, i32
  }
}

</mosaic_0001>

<llo_original>
// kernel: fusionnet_forward.8
$region0: #{fusionnet_forward.8}
  #allocation0 [shape = 'u32[]', space=smem, size = 0x4, offset = 0x4, fixed_abs, tag = 'smem constant byte address 0x4 - core index']
  #allocation1 [shape = 'u32[144,128]{1,0:T(1,128)}', space=vmem, size = 0x12000, scoped, tag = 'internal scratch']
  #allocation2 [shape = 'f32[1]{0:T(128)S(6)}', space=smem, size = 0x200, scoped, tag = 'scoped memory for fusionnet_forward.8']
  %s0 = inlined_call_operand.vmem [shape: f32[2,160,128], index: 0, kind: input, shape index: {}]
  %s1 = inlined_call_operand.vmem [shape: f32[2,1,1], index: 1, kind: input, shape index: {}]
  %s2 = inlined_call_operand.vmem [shape: f32[2,1,1], index: 2, kind: input, shape index: {}]
  %s3 = inlined_call_operand.vmem [shape: f32[160,128], index: 3, kind: input, shape index: {}]
  %s4 = inlined_call_operand.vmem [shape: f32[160,128], index: 4, kind: input, shape index: {}]
  %s5 = inlined_call_operand.<no memory space> [shape: f32[1], index: 5, kind: input, shape index: {}]
  %s6 = inlined_call_operand.vmem [shape: bf16[2,160,128], index: 6, kind: output, shape index: {}]
  %s7 = sld [smem:[#allocation0]]
  $region57: #{fusionnet_forward.8} parent=0
    _
  %s9 = ssub.s32 1, %s7
  %s10 = scalar_select 0, %s9, %s7
  %11 = sst [smem:[#allocation2]] %s5
  loop: start=0, step=1, limit=4
  $region2: #{fusionnet_forward.8} parent=0 // loop_pre_header
    _
  $region3: #{fusionnet_forward.8} parent=0 // loop_header
    %s13 = sphi 0, %s17
    %p14 = scmp.ge.s32.totalorder %s13, 4
    %s20 = sphi 0, %s32
    %s21 = sphi 0, %s28
    %s22 = sphi 0, %s20
    %s23 = sphi 0, %s21
    %s24 = sphi 0, %s22
    %s25 = sphi 0, %s23
    %s37 = sphi 0, %s39
    %s40 = sphi 0, %s37
    %s41 = sphi 0, %s40
    %s57 = sphi 0, %s41
    %s63 = sphi 0, %s65
    %s66 = sphi 0, %s63
    %s67 = sphi 0, %s66
    %s83 = sphi 0, %s67
    %s89 = sphi 0, %s91
    %s92 = sphi 0, %s89
    %s93 = sphi 0, %s92
    %s109 = sphi 0, %s93
    %s115 = sphi 0, %s117
    %s118 = sphi 0, %s115
    %s119 = sphi 0, %s118
    %s135 = sphi 0, %s119
    %s141 = sphi 0, %s143
    %s144 = sphi 0, %s141
    %s145 = sphi 0, %s144
    %s161 = sphi 0, %s145
    %s165 = sphi 0, %s165
    %s167 = sphi 0, %s165
    %s168 = sphi 0, %s167
    %s182 = sphi 0, %s168
    %s190 = sphi 0, %s192
    %s193 = sphi 0, %s190
    %s194 = sphi 0, %s193
    %s210 = sphi 0, %s194
  $region4: #{fusionnet_forward.8} parent=0 // loop_header_branch
    %16 = sbr.rel (%p14) target = $region8
  $region5: #{fusionnet_forward.8} parent=0 // loop_body
    %s18 = ssub.s32 %s13, 1
    %s19 = ssub.s32 %s13, 2
    %s26 = sadd.s32 1, %s21
    %p27 = scmp.ge.s32.totalorder %s26, 1
    %s28 = scalar_select %p27, 0, %s26
    %s29 = sadd.s32 1, %s20
    %s30 = scalar_select %p27, %s29, %s20
    %p31 = scmp.ge.s32.totalorder %s30, 2
    %s32 = scalar_select %p31, 0, %s30
    %s33 = ssub.s32 %s20, %s32
    %s34 = ssub.s32 %s21, %s28
    %s35 = sor.u32 %s33, %s34
    %p36 = scmp.eq.s32.totalorder %s35, 0
    %s38 = sadd.s32 %s37, 1
    %s39 = scalar_select %p36, %s37, %s38
    %p42 = pneg %p36
    %p43 = scmp.eq.s32.totalorder %s13, 1
    %p44 = por %p42, %p43
    %p45 = scmp.ne.s32.totalorder %s37, %s40
    %p46 = scmp.eq.s32.totalorder %s13, 0
    %p47 = por %p45, %p46
    %p48 = scmp.ne.s32.totalorder %s37, %s40
    %p49 = scmp.eq.s32.totalorder %s18, 1
    %p50 = por %p48, %p49
    %p51 = scmp.ne.s32.totalorder %s40, %s41
    %p52 = scmp.eq.s32.totalorder %s18, 0
    %p53 = por %p51, %p52
    %p54 = scmp.ne.s32.totalorder %s40, %s41
    %p55 = scmp.eq.s32.totalorder %s19, 1
    %p56 = por %p54, %p55
    %p58 = scmp.ne.s32.totalorder %s41, %s57
    %p59 = scmp.eq.s32.totalorder %s19, 0
    %p60 = por %p58, %p59
    %s61 = ssub.s32 %s20, %s32
    %p62 = scmp.eq.s32.totalorder %s61, 0
    %s64 = sadd.s32 %s63, 1
    %s65 = scalar_select %p62, %s63, %s64
    %p68 = pneg %p62
    %p69 = scmp.eq.s32.totalorder %s13, 1
    %p70 = por %p68, %p69
    %p71 = scmp.ne.s32.totalorder %s63, %s66
    %p72 = scmp.eq.s32.totalorder %s13, 0
    %p73 = por %p71, %p72
    %p74 = scmp.ne.s32.totalorder %s63, %s66
    %p75 = scmp.eq.s32.totalorder %s18, 1
    %p76 = por %p74, %p75
    %p77 = scmp.ne.s32.totalorder %s66, %s67
    %p78 = scmp.eq.s32.totalorder %s18, 0
    %p79 = por %p77, %p78
    %p80 = scmp.ne.s32.totalorder %s66, %s67
    %p81 = scmp.eq.s32.totalorder %s19, 1
    %p82 = por %p80, %p81
    %p84 = scmp.ne.s32.totalorder %s67, %s83
    %p85 = scmp.eq.s32.totalorder %s19, 0
    %p86 = por %p84, %p85
    %s87 = ssub.s32 %s20, %s32
    %p88 = scmp.eq.s32.totalorder %s87, 0
    %s90 = sadd.s32 %s89, 1
    %s91 = scalar_select %p88, %s89, %s90
    %p94 = pneg %p88
    %p95 = scmp.eq.s32.totalorder %s13, 1
    %p96 = por %p94, %p95
    %p97 = scmp.ne.s32.totalorder %s89, %s92
    %p98 = scmp.eq.s32.totalorder %s13, 0
    %p99 = por %p97, %p98
    %p100 = scmp.ne.s32.totalorder %s89, %s92
    %p101 = scmp.eq.s32.totalorder %s18, 1
    %p102 = por %p100, %p101
    %p103 = scmp.ne.s32.totalorder %s92, %s93
    %p104 = scmp.eq.s32.totalorder %s18, 0
    %p105 = por %p103, %p104
    %p106 = scmp.ne.s32.totalorder %s92, %s93
    %p107 = scmp.eq.s32.totalorder %s19, 1
    %p108 = por %p106, %p107
    %p110 = scmp.ne.s32.totalorder %s93, %s109
    %p111 = scmp.eq.s32.totalorder %s19, 0
    %p112 = por %p110, %p111
    %s113 = ssub.s32 %s21, %s28
    %p114 = scmp.eq.s32.totalorder %s113, 0
    %s116 = sadd.s32 %s115, 1
    %s117 = scalar_select %p114, %s115, %s116
    %p120 = pneg %p114
    %p121 = scmp.eq.s32.totalorder %s13, 1
    %p122 = por %p120, %p121
    %p123 = scmp.ne.s32.totalorder %s115, %s118
    %p124 = scmp.eq.s32.totalorder %s13, 0
    %p125 = por %p123, %p124
    %p126 = scmp.ne.s32.totalorder %s115, %s118
    %p127 = scmp.eq.s32.totalorder %s18, 1
    %p128 = por %p126, %p127
    %p129 = scmp.ne.s32.totalorder %s118, %s119
    %p130 = scmp.eq.s32.totalorder %s18, 0
    %p131 = por %p129, %p130
    %p132 = scmp.ne.s32.totalorder %s118, %s119
    %p133 = scmp.eq.s32.totalorder %s19, 1
    %p134 = por %p132, %p133
    %p136 = scmp.ne.s32.totalorder %s119, %s135
    %p137 = scmp.eq.s32.totalorder %s19, 0
    %p138 = por %p136, %p137
    %s139 = ssub.s32 %s21, %s28
    %p140 = scmp.eq.s32.totalorder %s139, 0
    %s142 = sadd.s32 %s141, 1
    %s143 = scalar_select %p140, %s141, %s142
    %p146 = pneg %p140
    %p147 = scmp.eq.s32.totalorder %s13, 1
    %p148 = por %p146, %p147
    %p149 = scmp.ne.s32.totalorder %s141, %s144
    %p150 = scmp.eq.s32.totalorder %s13, 0
    %p151 = por %p149, %p150
    %p152 = scmp.ne.s32.totalorder %s141, %s144
    %p153 = scmp.eq.s32.totalorder %s18, 1
    %p154 = por %p152, %p153
    %p155 = scmp.ne.s32.totalorder %s144, %s145
    %p156 = scmp.eq.s32.totalorder %s18, 0
    %p157 = por %p155, %p156
    %p158 = scmp.ne.s32.totalorder %s144, %s145
    %p159 = scmp.eq.s32.totalorder %s19, 1
    %p160 = por %p158, %p159
    %p162 = scmp.ne.s32.totalorder %s145, %s161
    %p163 = scmp.eq.s32.totalorder %s19, 0
    %p164 = por %p162, %p163
    %s166 = sadd.s32 %s165, 1
    %p169 = scmp.eq.s32.totalorder %s13, 1
    %p170 = scmp.ne.s32.totalorder %s165, %s167
    %p171 = scmp.eq.s32.totalorder %s13, 0
    %p172 = por %p170, %p171
    %p173 = scmp.ne.s32.totalorder %s165, %s167
    %p174 = scmp.eq.s32.totalorder %s18, 1
    %p175 = por %p173, %p174
    %p176 = scmp.ne.s32.totalorder %s167, %s168
    %p177 = scmp.eq.s32.totalorder %s18, 0
    %p178 = por %p176, %p177
    %p179 = scmp.ne.s32.totalorder %s167, %s168
    %p180 = scmp.eq.s32.totalorder %s19, 1
    %p181 = por %p179, %p180
    %p183 = scmp.ne.s32.totalorder %s168, %s182
    %p184 = scmp.eq.s32.totalorder %s19, 0
    %p185 = por %p183, %p184
    %s186 = ssub.s32 %s20, %s32
    %s187 = ssub.s32 %s21, %s28
    %s188 = sor.u32 %s186, %s187
    %p189 = scmp.eq.s32.totalorder %s188, 0
    %s191 = sadd.s32 %s190, 1
    %s192 = scalar_select %p189, %s190, %s191
    %p195 = pneg %p189
    %p196 = scmp.eq.s32.totalorder %s13, 1
    %p197 = por %p195, %p196
    %p198 = scmp.ne.s32.totalorder %s190, %s193
    %p199 = scmp.eq.s32.totalorder %s13, 0
    %p200 = por %p198, %p199
    %p201 = scmp.ne.s32.totalorder %s190, %s193
    %p202 = scmp.eq.s32.totalorder %s18, 1
    %p203 = por %p201, %p202
    %p204 = scmp.ne.s32.totalorder %s193, %s194
    %p205 = scmp.eq.s32.totalorder %s18, 0
    %p206 = por %p204, %p205
    %p207 = scmp.ne.s32.totalorder %s193, %s194
    %p208 = scmp.eq.s32.totalorder %s19, 1
    %p209 = por %p207, %p208
    %p211 = scmp.ne.s32.totalorder %s194, %s210
    %p212 = scmp.eq.s32.totalorder %s19, 0
    %p213 = por %p211, %p212
    %p214 = scmp.le.s32.totalorder 1, %s13
    %p215 = scmp.lt.s32.totalorder %s13, 3
    %p216 = pnand %p214, %p215
    %p217 = pneg %p216
    // Predicated region
    $region9: #{fusionnet_forward.8} parent=5 // pred_check
      _
    $region10: #{fusionnet_forward.8} parent=5 // pred_check_branch
      %219 = sbr.rel (%p216) target = $region12
    $region11: #{fusionnet_forward.8} parent=5 // pred_region
      %s220 = ssub.s32 %s13, 1
      // Predicated region
      $region13: #{fusionnet_forward.8} parent=11 // pred_check
        %p221 = pneg %p131
      $region14: #{fusionnet_forward.8} parent=11 // pred_check_branch
        %223 = sbr.rel (%p221) target = $region16
      $region15: #{fusionnet_forward.8} parent=11 // pred_region
        %s224 = smul.u32 20, %s23
        %p225 = scmp.lt.s32.totalorder %s224, 19
        %s226 = scalar_select %p225, %s224, 19
        %s227 = smul.addr %s226, 8
        %s228 = scalar_lea.vmem %s3, %s227
        %s229 = smul.u32 20, %s23
      $region16: #{fusionnet_forward.8} parent=11 // pred_fallthru
        _
      // Predicated region
      $region17: #{fusionnet_forward.8} parent=11 // pred_check
        %p230 = pneg %p157
      $region18: #{fusionnet_forward.8} parent=11 // pred_check_branch
        %232 = sbr.rel (%p230) target = $region20
      $region19: #{fusionnet_forward.8} parent=11 // pred_region
        %s233 = smul.u32 20, %s23
        %p234 = scmp.lt.s32.totalorder %s233, 19
        %s235 = scalar_select %p234, %s233, 19
        %s236 = smul.addr %s235, 8
        %s237 = scalar_lea.vmem %s4, %s236
        %s238 = smul.u32 20, %s23
      $region20: #{fusionnet_forward.8} parent=11 // pred_fallthru
        _
      // Predicated region
      $region21: #{fusionnet_forward.8} parent=11 // pred_check
        %p239 = pneg %p178
      $region22: #{fusionnet_forward.8} parent=11 // pred_check_branch
        %241 = sbr.rel (%p239) target = $region24
      $region23: #{fusionnet_forward.8} parent=11 // pred_region
        _
      $region24: #{fusionnet_forward.8} parent=11 // pred_fallthru
        _
    $region12: #{fusionnet_forward.8} parent=5 // pred_fallthru
      _
    %p242 = scmp.lt.s32.totalorder %s13, 2
    // Predicated region
    $region25: #{fusionnet_forward.8} parent=5 // pred_check
      %p243 = pneg %p242
    $region26: #{fusionnet_forward.8} parent=5 // pred_check_branch
      %245 = sbr.rel (%p243) target = $region28
    $region27: #{fusionnet_forward.8} parent=5 // pred_region
      // Predicated region
      $region29: #{fusionnet_forward.8} parent=27 // pred_check
        %p246 = pneg %p47
      $region30: #{fusionnet_forward.8} parent=27 // pred_check_branch
        %248 = sbr.rel (%p246) target = $region32
      $region31: #{fusionnet_forward.8} parent=27 // pred_region
        %s249 = smul.u32 20, %s21
        %p250 = scmp.lt.s32.totalorder %s20, 1
        %s251 = scalar_select %p250, %s20, 1
        %p252 = scmp.lt.s32.totalorder %s249, 19
        %s253 = scalar_select %p252, %s249, 19
        %s254 = smul.addr %s251, 20
        %s255 = sadd.s32 %s253, %s254
        %s256 = smul.addr %s255, 8
        %s257 = scalar_lea.vmem %s0, %s256
        %s258 = smul.u32 20, %s21
      $region32: #{fusionnet_forward.8} parent=27 // pred_fallthru
        _
      // Predicated region
      $region33: #{fusionnet_forward.8} parent=27 // pred_check
        %p259 = pneg %p73
      $region34: #{fusionnet_forward.8} parent=27 // pred_check_branch
        %261 = sbr.rel (%p259) target = $region36
      $region35: #{fusionnet_forward.8} parent=27 // pred_region
        %p262 = scmp.lt.s32.totalorder %s20, 1
        %s263 = scalar_select %p262, %s20, 1
        %s264 = scalar_lea.vmem %s1, %s263
      $region36: #{fusionnet_forward.8} parent=27 // pred_fallthru
        _
      // Predicated region
      $region37: #{fusionnet_forward.8} parent=27 // pred_check
        %p265 = pneg %p99
      $region38: #{fusionnet_forward.8} parent=27 // pred_check_branch
        %267 = sbr.rel (%p265) target = $region40
      $region39: #{fusionnet_forward.8} parent=27 // pred_region
        %p268 = scmp.lt.s32.totalorder %s20, 1
        %s269 = scalar_select %p268, %s20, 1
        %s270 = scalar_lea.vmem %s2, %s269
      $region40: #{fusionnet_forward.8} parent=27 // pred_fallthru
        _
    $region28: #{fusionnet_forward.8} parent=5 // pred_fallthru
      _
    %p271 = scmp.le.s32.totalorder 1, %s13
    %p272 = scmp.lt.s32.totalorder %s13, 3
    %p273 = pnand %p271, %p272
    %p274 = pneg %p273
    // Predicated region
    $region41: #{fusionnet_forward.8} parent=5 // pred_check
      _
    $region42: #{fusionnet_forward.8} parent=5 // pred_check_branch
      %276 = sbr.rel (%p273) target = $region44
    $region43: #{fusionnet_forward.8} parent=5 // pred_region
      %s277 = ssub.s32 %s13, 1
      %s278 = smul.u32 20, %s23
      %p279 = scmp.lt.s32.totalorder %s22, 1
      %s280 = scalar_select %p279, %s22, 1
      %p281 = scmp.lt.s32.totalorder %s278, 19
      %s282 = scalar_select %p281, %s278, 19
      %s283 = smul.addr %s280, 20
      %s284 = sadd.s32 %s282, %s283
      %s285 = smul.addr %s284, 8
      %s286 = scalar_lea.vmem %s0, %s285
      %p287 = pneg %p53
      %p288 = pneg %p50
      %p289 = scmp.lt.s32.totalorder %s22, 1
      %s290 = scalar_select %p289, %s22, 1
      %s291 = scalar_lea.vmem %s1, %s290
      %p292 = pneg %p79
      %p293 = pneg %p76
      %p294 = scmp.lt.s32.totalorder %s22, 1
      %s295 = scalar_select %p294, %s22, 1
      %s296 = scalar_lea.vmem %s2, %s295
      %p297 = pneg %p105
      %p298 = pneg %p102
      %s299 = smul.u32 20, %s23
      %p300 = scmp.lt.s32.totalorder %s299, 19
      %s301 = scalar_select %p300, %s299, 19
      %s302 = smul.addr %s301, 8
      %s303 = scalar_lea.vmem %s3, %s302
      %p304 = pneg %p131
      %p305 = pneg %p128
      %s306 = smul.u32 20, %s23
      %p307 = scmp.lt.s32.totalorder %s306, 19
      %s308 = scalar_select %p307, %s306, 19
      %s309 = smul.addr %s308, 8
      %s310 = scalar_lea.vmem %s4, %s309
      %p311 = pneg %p157
      %p312 = pneg %p154
      %p313 = pneg %p178
      %p314 = pneg %p175
      %p315 = pneg %p206
      %p316 = pneg %p203
      %s317 = smul.u32 20, %s23
      %p318 = scmp.lt.s32.totalorder %s22, 1
      %s319 = scalar_select %p318, %s22, 1
      %p320 = scmp.lt.s32.totalorder %s317, 19
      %s321 = scalar_select %p320, %s317, 19
      %s322 = smul.addr %s319, 20
      %s323 = sadd.s32 %s321, %s322
      %s324 = smul.addr %s323, 4
      %s325 = scalar_lea.vmem %s6, %s324
      %s326 = smul.u32 20, %s23
      %p327 = scmp.lt.s32.totalorder %s22, 1
      %s328 = scalar_select %p327, %s22, 1
      %p329 = scmp.lt.s32.totalorder %s326, 19
      %s330 = scalar_select %p329, %s326, 19
      %s331 = smul.addr %s328, 20
      %s332 = sadd.s32 %s330, %s331
      %s333 = smul.addr %s332, 8
      %s334 = scalar_lea.vmem %s0, %s333
      %s335 = smul.u32 20, %s23
      %p336 = scmp.lt.s32.totalorder %s22, 1
      %s337 = scalar_select %p336, %s22, 1
      %s338 = scalar_lea.vmem %s1, %s337
      %p339 = scmp.lt.s32.totalorder %s22, 1
      %s340 = scalar_select %p339, %s22, 1
      %s341 = scalar_lea.vmem %s2, %s340
      %s342 = smul.u32 20, %s23
      %p343 = scmp.lt.s32.totalorder %s342, 19
      %s344 = scalar_select %p343, %s342, 19
      %s345 = smul.addr %s344, 8
      %s346 = scalar_lea.vmem %s3, %s345
      %s347 = smul.u32 20, %s23
      %s348 = smul.u32 20, %s23
      %p349 = scmp.lt.s32.totalorder %s348, 19
      %s350 = scalar_select %p349, %s348, 19
      %s351 = smul.addr %s350, 8
      %s352 = scalar_lea.vmem %s4, %s351
      %s353 = smul.u32 20, %s23
      %s354 = smul.u32 20, %s23
      %p355 = scmp.lt.s32.totalorder %s22, 1
      %s356 = scalar_select %p355, %s22, 1
      %p357 = scmp.lt.s32.totalorder %s354, 19
      %s358 = scalar_select %p357, %s354, 19
      %s359 = smul.addr %s356, 20
      %s360 = sadd.s32 %s358, %s359
      %s361 = smul.addr %s360, 4
      %s362 = scalar_lea.vmem %s6, %s361
      %s363 = smul.u32 20, %s23
      %v364 = vld [vmem:[%s334] sm:$0xff]
      %v365 = vld [vmem:[%s334 + $0x8] sm:$0xff]
      %v366 = vld [vmem:[%s334 + $0x10] sm:$0xff]
      %v367 = vld [vmem:[%s334 + $0x18] sm:$0xff]
      %v368 = vld [vmem:[%s334 + $0x20] sm:$0xff]
      %v369 = vld [vmem:[%s334 + $0x28] sm:$0xff]
      %v370 = vld [vmem:[%s334 + $0x30] sm:$0xff]
      %v371 = vld [vmem:[%s334 + $0x38] sm:$0xff]
      %v372 = vld [vmem:[%s334 + $0x40] sm:$0xff]
      %v373 = vld [vmem:[%s334 + $0x48] sm:$0xff]
      %v374 = vld [vmem:[%s334 + $0x50] sm:$0xff]
      %v375 = vld [vmem:[%s334 + $0x58] sm:$0xff]
      %v376 = vld [vmem:[%s334 + $0x60] sm:$0xff]
      %v377 = vld [vmem:[%s334 + $0x68] sm:$0xff]
      %v378 = vld [vmem:[%s334 + $0x70] sm:$0xff]
      %v379 = vld [vmem:[%s334 + $0x78] sm:$0xff]
      %v380 = vld [vmem:[%s334 + $0x80] sm:$0xff]
      %v381 = vld [vmem:[%s334 + $0x88] sm:$0xff]
      %v382 = vld [vmem:[%s334 + $0x90] sm:$0xff]
      %v383 = vld [vmem:[%s334 + $0x98] sm:$0xff]
      %v384 = vld [vmem:[%s338] sm:$0x1]
      %v386 = vlaneseq
      %v387 = vshrl.u32 %v386, 7
      %v388 = vsub.s32 0, %v387
      %v389 = vrot.slane %v384, %v388
      %390 = vset.pattern.permute.xlu0 0
      %391 = vperm.xlu0 %390, %v389
      %v392 = vpop.permute.xlu0 %391
      %v394 = vsub.f32 %v364, %v392
      %v395 = vsub.f32 %v365, %v392
      %v396 = vsub.f32 %v366, %v392
      %v397 = vsub.f32 %v367, %v392
      %v398 = vsub.f32 %v368, %v392
      %v399 = vsub.f32 %v369, %v392
      %v400 = vsub.f32 %v370, %v392
      %v401 = vsub.f32 %v371, %v392
      %v402 = vsub.f32 %v372, %v392
      %v403 = vsub.f32 %v373, %v392
      %v404 = vsub.f32 %v374, %v392
      %v405 = vsub.f32 %v375, %v392
      %v406 = vsub.f32 %v376, %v392
      %v407 = vsub.f32 %v377, %v392
      %v408 = vsub.f32 %v378, %v392
      %v409 = vsub.f32 %v379, %v392
      %v410 = vsub.f32 %v380, %v392
      %v411 = vsub.f32 %v381, %v392
      %v412 = vsub.f32 %v382, %v392
      %v413 = vsub.f32 %v383, %v392
      %v414 = vld [vmem:[%s341] sm:$0x1]
      %v416 = vlaneseq
      %v417 = vshrl.u32 %v416, 7
      %v418 = vsub.s32 0, %v417
      %v419 = vrot.slane %v414, %v418
      %420 = vset.pattern.permute.xlu0 0
      %421 = vperm.xlu0 %420, %v419
      %v422 = vpop.permute.xlu0 %421
      %v424 = vmul.f32 %v394, %v422
      %v425 = vmul.f32 %v395, %v422
      %v426 = vmul.f32 %v396, %v422
      %v427 = vmul.f32 %v397, %v422
      %v428 = vmul.f32 %v398, %v422
      %v429 = vmul.f32 %v399, %v422
      %v430 = vmul.f32 %v400, %v422
      %v431 = vmul.f32 %v401, %v422
      %v432 = vmul.f32 %v402, %v422
      %v433 = vmul.f32 %v403, %v422
      %v434 = vmul.f32 %v404, %v422
      %v435 = vmul.f32 %v405, %v422
      %v436 = vmul.f32 %v406, %v422
      %v437 = vmul.f32 %v407, %v422
      %v438 = vmul.f32 %v408, %v422
      %v439 = vmul.f32 %v409, %v422
      %v440 = vmul.f32 %v410, %v422
      %v441 = vmul.f32 %v411, %v422
      %v442 = vmul.f32 %v412, %v422
      %v443 = vmul.f32 %v413, %v422
      %v444 = vld [vmem:[%s346] sm:$0xff]
      %v445 = vld [vmem:[%s346 + $0x8] sm:$0xff]
      %v446 = vld [vmem:[%s346 + $0x10] sm:$0xff]
      %v447 = vld [vmem:[%s346 + $0x18] sm:$0xff]
      %v448 = vld [vmem:[%s346 + $0x20] sm:$0xff]
      %v449 = vld [vmem:[%s346 + $0x28] sm:$0xff]
      %v450 = vld [vmem:[%s346 + $0x30] sm:$0xff]
      %v451 = vld [vmem:[%s346 + $0x38] sm:$0xff]
      %v452 = vld [vmem:[%s346 + $0x40] sm:$0xff]
      %v453 = vld [vmem:[%s346 + $0x48] sm:$0xff]
      %v454 = vld [vmem:[%s346 + $0x50] sm:$0xff]
      %v455 = vld [vmem:[%s346 + $0x58] sm:$0xff]
      %v456 = vld [vmem:[%s346 + $0x60] sm:$0xff]
      %v457 = vld [vmem:[%s346 + $0x68] sm:$0xff]
      %v458 = vld [vmem:[%s346 + $0x70] sm:$0xff]
      %v459 = vld [vmem:[%s346 + $0x78] sm:$0xff]
      %v460 = vld [vmem:[%s346 + $0x80] sm:$0xff]
      %v461 = vld [vmem:[%s346 + $0x88] sm:$0xff]
      %v462 = vld [vmem:[%s346 + $0x90] sm:$0xff]
      %v463 = vld [vmem:[%s346 + $0x98] sm:$0xff]
      %v464 = vmul.f32 %v424, %v444
      %v465 = vmul.f32 %v425, %v445
      %v466 = vmul.f32 %v426, %v446
      %v467 = vmul.f32 %v427, %v447
      %v468 = vmul.f32 %v428, %v448
      %v469 = vmul.f32 %v429, %v449
      %v470 = vmul.f32 %v430, %v450
      %v471 = vmul.f32 %v431, %v451
      %v472 = vmul.f32 %v432, %v452
      %v473 = vmul.f32 %v433, %v453
      %v474 = vmul.f32 %v434, %v454
      %v475 = vmul.f32 %v435, %v455
      %v476 = vmul.f32 %v436, %v456
      %v477 = vmul.f32 %v437, %v457
      %v478 = vmul.f32 %v438, %v458
      %v479 = vmul.f32 %v439, %v459
      %v480 = vmul.f32 %v440, %v460
      %v481 = vmul.f32 %v441, %v461
      %v482 = vmul.f32 %v442, %v462
      %v483 = vmul.f32 %v443, %v463
      %v484 = vld [vmem:[%s352] sm:$0xff]
      %v485 = vld [vmem:[%s352 + $0x8] sm:$0xff]
      %v486 = vld [vmem:[%s352 + $0x10] sm:$0xff]
      %v487 = vld [vmem:[%s352 + $0x18] sm:$0xff]
      %v488 = vld [vmem:[%s352 + $0x20] sm:$0xff]
      %v489 = vld [vmem:[%s352 + $0x28] sm:$0xff]
      %v490 = vld [vmem:[%s352 + $0x30] sm:$0xff]
      %v491 = vld [vmem:[%s352 + $0x38] sm:$0xff]
      %v492 = vld [vmem:[%s352 + $0x40] sm:$0xff]
      %v493 = vld [vmem:[%s352 + $0x48] sm:$0xff]
      %v494 = vld [vmem:[%s352 + $0x50] sm:$0xff]
      %v495 = vld [vmem:[%s352 + $0x58] sm:$0xff]
      %v496 = vld [vmem:[%s352 + $0x60] sm:$0xff]
      %v497 = vld [vmem:[%s352 + $0x68] sm:$0xff]
      %v498 = vld [vmem:[%s352 + $0x70] sm:$0xff]
      %v499 = vld [vmem:[%s352 + $0x78] sm:$0xff]
      %v500 = vld [vmem:[%s352 + $0x80] sm:$0xff]
      %v501 = vld [vmem:[%s352 + $0x88] sm:$0xff]
      %v502 = vld [vmem:[%s352 + $0x90] sm:$0xff]
      %v503 = vld [vmem:[%s352 + $0x98] sm:$0xff]
      %v504 = vadd.f32 %v464, %v484
      %v505 = vadd.f32 %v465, %v485
      %v506 = vadd.f32 %v466, %v486
      %v507 = vadd.f32 %v467, %v487
      %v508 = vadd.f32 %v468, %v488
      %v509 = vadd.f32 %v469, %v489
      %v510 = vadd.f32 %v470, %v490
      %v511 = vadd.f32 %v471, %v491
      %v512 = vadd.f32 %v472, %v492
      %v513 = vadd.f32 %v473, %v493
      %v514 = vadd.f32 %v474, %v494
      %v515 = vadd.f32 %v475, %v495
      %v516 = vadd.f32 %v476, %v496
      %v517 = vadd.f32 %v477, %v497
      %v518 = vadd.f32 %v478, %v498
      %v519 = vadd.f32 %v479, %v499
      %v520 = vadd.f32 %v480, %v500
      %v521 = vadd.f32 %v481, %v501
      %v522 = vadd.f32 %v482, %v502
      %v523 = vadd.f32 %v483, %v503
      %v524 = vpack.c.bf16 %v505, %v504
      %v525 = vpack.c.bf16 %v507, %v506
      %v526 = vpack.c.bf16 %v509, %v508
      %v527 = vpack.c.bf16 %v511, %v510
      %v528 = vpack.c.bf16 %v513, %v512
      %v529 = vpack.c.bf16 %v515, %v514
      %v530 = vpack.c.bf16 %v517, %v516
      %v531 = vpack.c.bf16 %v519, %v518
      %v532 = vpack.c.bf16 %v521, %v520
      %v533 = vpack.c.bf16 %v523, %v522
      %v544 = vunpack.c.l.b16 %v524
      %v545 = vunpack.c.h.b16 %v524
      %v546 = vunpack.c.l.b16 %v525
      %v547 = vunpack.c.h.b16 %v525
      %v548 = vunpack.c.l.b16 %v526
      %v549 = vunpack.c.h.b16 %v526
      %v550 = vunpack.c.l.b16 %v527
      %v551 = vunpack.c.h.b16 %v527
      %v552 = vunpack.c.l.b16 %v528
      %v553 = vunpack.c.h.b16 %v528
      %v554 = vunpack.c.l.b16 %v529
      %v555 = vunpack.c.h.b16 %v529
      %v556 = vunpack.c.l.b16 %v530
      %v557 = vunpack.c.h.b16 %v530
      %v558 = vunpack.c.l.b16 %v531
      %v559 = vunpack.c.h.b16 %v531
      %v560 = vunpack.c.l.b16 %v532
      %v561 = vunpack.c.h.b16 %v532
      %v562 = vunpack.c.l.b16 %v533
      %v563 = vunpack.c.h.b16 %v533
      %v564 = vpack.c.b16 %v544, %v544
      %v565 = vpack.c.b16 %v545, %v545
      %v566 = vpack.c.b16 %v546, %v546
      %v567 = vpack.c.b16 %v547, %v547
      %v568 = vpack.c.b16 %v548, %v548
      %v569 = vpack.c.b16 %v549, %v549
      %v570 = vpack.c.b16 %v550, %v550
      %v571 = vpack.c.b16 %v551, %v551
      %v572 = vpack.c.b16 %v552, %v552
      %v573 = vpack.c.b16 %v553, %v553
      %v574 = vpack.c.b16 %v554, %v554
      %v575 = vpack.c.b16 %v555, %v555
      %v576 = vpack.c.b16 %v556, %v556
      %v577 = vpack.c.b16 %v557, %v557
      %v578 = vpack.c.b16 %v558, %v558
      %v579 = vpack.c.b16 %v559, %v559
      %v580 = vpack.c.b16 %v560, %v560
      %v581 = vpack.c.b16 %v561, %v561
      %v582 = vpack.c.b16 %v562, %v562
      %v583 = vpack.c.b16 %v563, %v563
      %604 = vst [vmem:[%s362] sm:$0xf] %v564
      %605 = vst [vmem:[%s362 + $0x4] sm:$0xf] %v565
      %606 = vst [vmem:[%s362 + $0x8] sm:$0xf] %v566
      %607 = vst [vmem:[%s362 + $0xc] sm:$0xf] %v567
      %608 = vst [vmem:[%s362 + $0x10] sm:$0xf] %v568
      %609 = vst [vmem:[%s362 + $0x14] sm:$0xf] %v569
      %610 = vst [vmem:[%s362 + $0x18] sm:$0xf] %v570
      %611 = vst [vmem:[%s362 + $0x1c] sm:$0xf] %v571
      %612 = vst [vmem:[%s362 + $0x20] sm:$0xf] %v572
      %613 = vst [vmem:[%s362 + $0x24] sm:$0xf] %v573
      %614 = vst [vmem:[%s362 + $0x28] sm:$0xf] %v574
      %615 = vst [vmem:[%s362 + $0x2c] sm:$0xf] %v575
      %616 = vst [vmem:[%s362 + $0x30] sm:$0xf] %v576
      %617 = vst [vmem:[%s362 + $0x34] sm:$0xf] %v577
      %618 = vst [vmem:[%s362 + $0x38] sm:$0xf] %v578
      %619 = vst [vmem:[%s362 + $0x3c] sm:$0xf] %v579
      %620 = vst [vmem:[%s362 + $0x40] sm:$0xf] %v580
      %621 = vst [vmem:[%s362 + $0x44] sm:$0xf] %v581
      %622 = vst [vmem:[%s362 + $0x48] sm:$0xf] %v582
      %623 = vst [vmem:[%s362 + $0x4c] sm:$0xf] %v583
      %s624 = smul.u32 20, %s23
      %p625 = scmp.lt.s32.totalorder %s22, 1
      %s626 = scalar_select %p625, %s22, 1
      %p627 = scmp.lt.s32.totalorder %s624, 19
      %s628 = scalar_select %p627, %s624, 19
      %s629 = smul.addr %s626, 20
      %s630 = sadd.s32 %s628, %s629
      %s631 = smul.addr %s630, 4
      %s632 = scalar_lea.vmem %s6, %s631
      // Predicated region
      $region45: #{fusionnet_forward.8} parent=43 // pred_check
        %p633 = pneg %p203
      $region46: #{fusionnet_forward.8} parent=43 // pred_check_branch
        %635 = sbr.rel (%p633) target = $region48
      $region47: #{fusionnet_forward.8} parent=43 // pred_region
        %s636 = smul.u32 20, %s23
      $region48: #{fusionnet_forward.8} parent=43 // pred_fallthru
        _
    $region44: #{fusionnet_forward.8} parent=5 // pred_fallthru
      _
    %p637 = scmp.le.s32.totalorder 2, %s13
    // Predicated region
    $region49: #{fusionnet_forward.8} parent=5 // pred_check
      %p638 = pneg %p637
    $region50: #{fusionnet_forward.8} parent=5 // pred_check_branch
      %640 = sbr.rel (%p638) target = $region52
    $region51: #{fusionnet_forward.8} parent=5 // pred_region
      %s641 = ssub.s32 %s13, 2
      // Predicated region
      $region53: #{fusionnet_forward.8} parent=51 // pred_check
        %p642 = pneg %p209
      $region54: #{fusionnet_forward.8} parent=51 // pred_check_branch
        %644 = sbr.rel (%p642) target = $region56
      $region55: #{fusionnet_forward.8} parent=51 // pred_region
        %s645 = smul.u32 20, %s25
        %p646 = scmp.lt.s32.totalorder %s24, 1
        %s647 = scalar_select %p646, %s24, 1
        %p648 = scmp.lt.s32.totalorder %s645, 19
        %s649 = scalar_select %p648, %s645, 19
        %s650 = smul.addr %s647, 20
        %s651 = sadd.s32 %s649, %s650
        %s652 = smul.addr %s651, 4
        %s653 = scalar_lea.vmem %s6, %s652
      $region56: #{fusionnet_forward.8} parent=51 // pred_fallthru
        _
    $region52: #{fusionnet_forward.8} parent=5 // pred_fallthru
      _
  $region6: #{fusionnet_forward.8} parent=0 // loop_footer
    %s17 = sadd.s32 1, %s13
  $region7: #{fusionnet_forward.8} parent=0 // loop_footer_branch
    %12 = sbr.rel target = $region3
  $region8: #{fusionnet_forward.8} parent=0 // loop_exit
    _

// kernel: fusionnet_forward.7
$region0: #{fusionnet_forward.7}
  #allocation0 [shape = 'u32[]', space=smem, size = 0x4, offset = 0x4, fixed_abs, tag = 'smem constant byte address 0x4 - core index']
  #allocation1 [shape = 'u32[144,128]{1,0:T(1,128)}', space=vmem, size = 0x12000, scoped, tag = 'internal scratch']
  #allocation2 [shape = 'f32[1,1]{1,0:T(1,128)}', space=vmem, size = 0x200, scoped, tag = 'scratch operand']
  #allocation3 [shape = 'f32[1,1]{1,0:T(1,128)}', space=vmem, size = 0x200, scoped, tag = 'scratch operand']
  %s0 = inlined_call_operand.vmem [shape: bf16[2,160,16], index: 0, kind: input, shape index: {}]
  %s1 = inlined_call_operand.vmem [shape: bf16[16,128], index: 1, kind: input, shape index: {}]
  %s2 = inlined_call_operand.vmem [shape: f32[1,128], index: 2, kind: input, shape index: {}]
  %s3 = inlined_call_operand.vmem [shape: f32[2,160,128], index: 3, kind: output, shape index: {0}]
  %s4 = inlined_call_operand.vmem [shape: f32[2,1,1], index: 4, kind: output, shape index: {1}]
  %s5 = inlined_call_operand.vmem [shape: f32[2,1,1], index: 5, kind: output, shape index: {2}]
  %6 = xla_tuple %s3, %s4, %s5
  %s7 = sld [smem:[#allocation0]]
  $region69: #{fusionnet_forward.7} parent=0
    _
  %s9 = ssub.s32 1, %s7
  %s10 = scalar_select 0, %s9, %s7
  loop: start=0, step=1, limit=4
  $region2: #{fusionnet_forward.7} parent=0 // loop_pre_header
    _
  $region3: #{fusionnet_forward.7} parent=0 // loop_header
    %s12 = sphi 0, %s16
    %p13 = scmp.ge.s32.totalorder %s12, 4
    %s19 = sphi 0, %s31
    %s20 = sphi 0, %s27
    %s21 = sphi 0, %s19
    %s22 = sphi 0, %s20
    %s23 = sphi 0, %s21
    %s24 = sphi 0, %s22
    %s36 = sphi 0, %s38
    %s39 = sphi 0, %s36
    %s40 = sphi 0, %s39
    %s56 = sphi 0, %s40
    %s60 = sphi 0, %s60
    %s62 = sphi 0, %s60
    %s63 = sphi 0, %s62
    %s77 = sphi 0, %s63
    %s81 = sphi 0, %s81
    %s83 = sphi 0, %s81
    %s84 = sphi 0, %s83
    %s98 = sphi 0, %s84
    %s106 = sphi 0, %s108
    %s109 = sphi 0, %s106
    %s110 = sphi 0, %s109
    %s126 = sphi 0, %s110
    %s132 = sphi 0, %s134
    %s135 = sphi 0, %s132
    %s136 = sphi 0, %s135
    %s152 = sphi 0, %s136
    %s158 = sphi 0, %s160
    %s161 = sphi 0, %s158
    %s162 = sphi 0, %s161
    %s178 = sphi 0, %s162
  $region4: #{fusionnet_forward.7} parent=0 // loop_header_branch
    %15 = sbr.rel (%p13) target = $region8
  $region5: #{fusionnet_forward.7} parent=0 // loop_body
    %s17 = ssub.s32 %s12, 1
    %s18 = ssub.s32 %s12, 2
    %s25 = sadd.s32 1, %s20
    %p26 = scmp.ge.s32.totalorder %s25, 1
    %s27 = scalar_select %p26, 0, %s25
    %s28 = sadd.s32 1, %s19
    %s29 = scalar_select %p26, %s28, %s19
    %p30 = scmp.ge.s32.totalorder %s29, 2
    %s31 = scalar_select %p30, 0, %s29
    %s32 = ssub.s32 %s19, %s31
    %s33 = ssub.s32 %s20, %s27
    %s34 = sor.u32 %s32, %s33
    %p35 = scmp.eq.s32.totalorder %s34, 0
    %s37 = sadd.s32 %s36, 1
    %s38 = scalar_select %p35, %s36, %s37
    %p41 = pneg %p35
    %p42 = scmp.eq.s32.totalorder %s12, 1
    %p43 = por %p41, %p42
    %p44 = scmp.ne.s32.totalorder %s36, %s39
    %p45 = scmp.eq.s32.totalorder %s12, 0
    %p46 = por %p44, %p45
    %p47 = scmp.ne.s32.totalorder %s36, %s39
    %p48 = scmp.eq.s32.totalorder %s17, 1
    %p49 = por %p47, %p48
    %p50 = scmp.ne.s32.totalorder %s39, %s40
    %p51 = scmp.eq.s32.totalorder %s17, 0
    %p52 = por %p50, %p51
    %p53 = scmp.ne.s32.totalorder %s39, %s40
    %p54 = scmp.eq.s32.totalorder %s18, 1
    %p55 = por %p53, %p54
    %p57 = scmp.ne.s32.totalorder %s40, %s56
    %p58 = scmp.eq.s32.totalorder %s18, 0
    %p59 = por %p57, %p58
    %s61 = sadd.s32 %s60, 1
    %p64 = scmp.eq.s32.totalorder %s12, 1
    %p65 = scmp.ne.s32.totalorder %s60, %s62
    %p66 = scmp.eq.s32.totalorder %s12, 0
    %p67 = por %p65, %p66
    %p68 = scmp.ne.s32.totalorder %s60, %s62
    %p69 = scmp.eq.s32.totalorder %s17, 1
    %p70 = por %p68, %p69
    %p71 = scmp.ne.s32.totalorder %s62, %s63
    %p72 = scmp.eq.s32.totalorder %s17, 0
    %p73 = por %p71, %p72
    %p74 = scmp.ne.s32.totalorder %s62, %s63
    %p75 = scmp.eq.s32.totalorder %s18, 1
    %p76 = por %p74, %p75
    %p78 = scmp.ne.s32.totalorder %s63, %s77
    %p79 = scmp.eq.s32.totalorder %s18, 0
    %p80 = por %p78, %p79
    %s82 = sadd.s32 %s81, 1
    %p85 = scmp.eq.s32.totalorder %s12, 1
    %p86 = scmp.ne.s32.totalorder %s81, %s83
    %p87 = scmp.eq.s32.totalorder %s12, 0
    %p88 = por %p86, %p87
    %p89 = scmp.ne.s32.totalorder %s81, %s83
    %p90 = scmp.eq.s32.totalorder %s17, 1
    %p91 = por %p89, %p90
    %p92 = scmp.ne.s32.totalorder %s83, %s84
    %p93 = scmp.eq.s32.totalorder %s17, 0
    %p94 = por %p92, %p93
    %p95 = scmp.ne.s32.totalorder %s83, %s84
    %p96 = scmp.eq.s32.totalorder %s18, 1
    %p97 = por %p95, %p96
    %p99 = scmp.ne.s32.totalorder %s84, %s98
    %p100 = scmp.eq.s32.totalorder %s18, 0
    %p101 = por %p99, %p100
    %s102 = ssub.s32 %s19, %s31
    %s103 = ssub.s32 %s20, %s27
    %s104 = sor.u32 %s102, %s103
    %p105 = scmp.eq.s32.totalorder %s104, 0
    %s107 = sadd.s32 %s106, 1
    %s108 = scalar_select %p105, %s106, %s107
    %p111 = pneg %p105
    %p112 = scmp.eq.s32.totalorder %s12, 1
    %p113 = por %p111, %p112
    %p114 = scmp.ne.s32.totalorder %s106, %s109
    %p115 = scmp.eq.s32.totalorder %s12, 0
    %p116 = por %p114, %p115
    %p117 = scmp.ne.s32.totalorder %s106, %s109
    %p118 = scmp.eq.s32.totalorder %s17, 1
    %p119 = por %p117, %p118
    %p120 = scmp.ne.s32.totalorder %s109, %s110
    %p121 = scmp.eq.s32.totalorder %s17, 0
    %p122 = por %p120, %p121
    %p123 = scmp.ne.s32.totalorder %s109, %s110
    %p124 = scmp.eq.s32.totalorder %s18, 1
    %p125 = por %p123, %p124
    %p127 = scmp.ne.s32.totalorder %s110, %s126
    %p128 = scmp.eq.s32.totalorder %s18, 0
    %p129 = por %p127, %p128
    %s130 = ssub.s32 %s19, %s31
    %p131 = scmp.eq.s32.totalorder %s130, 0
    %s133 = sadd.s32 %s132, 1
    %s134 = scalar_select %p131, %s132, %s133
    %p137 = pneg %p131
    %p138 = scmp.eq.s32.totalorder %s12, 1
    %p139 = por %p137, %p138
    %p140 = scmp.ne.s32.totalorder %s132, %s135
    %p141 = scmp.eq.s32.totalorder %s12, 0
    %p142 = por %p140, %p141
    %p143 = scmp.ne.s32.totalorder %s132, %s135
    %p144 = scmp.eq.s32.totalorder %s17, 1
    %p145 = por %p143, %p144
    %p146 = scmp.ne.s32.totalorder %s135, %s136
    %p147 = scmp.eq.s32.totalorder %s17, 0
    %p148 = por %p146, %p147
    %p149 = scmp.ne.s32.totalorder %s135, %s136
    %p150 = scmp.eq.s32.totalorder %s18, 1
    %p151 = por %p149, %p150
    %p153 = scmp.ne.s32.totalorder %s136, %s152
    %p154 = scmp.eq.s32.totalorder %s18, 0
    %p155 = por %p153, %p154
    %s156 = ssub.s32 %s19, %s31
    %p157 = scmp.eq.s32.totalorder %s156, 0
    %s159 = sadd.s32 %s158, 1
    %s160 = scalar_select %p157, %s158, %s159
    %p163 = pneg %p157
    %p164 = scmp.eq.s32.totalorder %s12, 1
    %p165 = por %p163, %p164
    %p166 = scmp.ne.s32.totalorder %s158, %s161
    %p167 = scmp.eq.s32.totalorder %s12, 0
    %p168 = por %p166, %p167
    %p169 = scmp.ne.s32.totalorder %s158, %s161
    %p170 = scmp.eq.s32.totalorder %s17, 1
    %p171 = por %p169, %p170
    %p172 = scmp.ne.s32.totalorder %s161, %s162
    %p173 = scmp.eq.s32.totalorder %s17, 0
    %p174 = por %p172, %p173
    %p175 = scmp.ne.s32.totalorder %s161, %s162
    %p176 = scmp.eq.s32.totalorder %s18, 1
    %p177 = por %p175, %p176
    %p179 = scmp.ne.s32.totalorder %s162, %s178
    %p180 = scmp.eq.s32.totalorder %s18, 0
    %p181 = por %p179, %p180
    %p182 = scmp.le.s32.totalorder 1, %s12
    %p183 = scmp.lt.s32.totalorder %s12, 3
    %p184 = pnand %p182, %p183
    %p185 = pneg %p184
    // Predicated region
    $region9: #{fusionnet_forward.7} parent=5 // pred_check
      _
    $region10: #{fusionnet_forward.7} parent=5 // pred_check_branch
      %187 = sbr.rel (%p184) target = $region12
    $region11: #{fusionnet_forward.7} parent=5 // pred_region
      %s188 = ssub.s32 %s12, 1
      // Predicated region
      $region13: #{fusionnet_forward.7} parent=11 // pred_check
        %p189 = pneg %p73
      $region14: #{fusionnet_forward.7} parent=11 // pred_check_branch
        %191 = sbr.rel (%p189) target = $region16
      $region15: #{fusionnet_forward.7} parent=11 // pred_region
        _
      $region16: #{fusionnet_forward.7} parent=11 // pred_fallthru
        _
      // Predicated region
      $region17: #{fusionnet_forward.7} parent=11 // pred_check
        %p192 = pneg %p94
      $region18: #{fusionnet_forward.7} parent=11 // pred_check_branch
        %194 = sbr.rel (%p192) target = $region20
      $region19: #{fusionnet_forward.7} parent=11 // pred_region
        _
      $region20: #{fusionnet_forward.7} parent=11 // pred_fallthru
        _
    $region12: #{fusionnet_forward.7} parent=5 // pred_fallthru
      _
    %p195 = scmp.lt.s32.totalorder %s12, 2
    // Predicated region
    $region21: #{fusionnet_forward.7} parent=5 // pred_check
      %p196 = pneg %p195
    $region22: #{fusionnet_forward.7} parent=5 // pred_check_branch
      %198 = sbr.rel (%p196) target = $region24
    $region23: #{fusionnet_forward.7} parent=5 // pred_region
      // Predicated region
      $region25: #{fusionnet_forward.7} parent=23 // pred_check
        %p199 = pneg %p46
      $region26: #{fusionnet_forward.7} parent=23 // pred_check_branch
        %201 = sbr.rel (%p199) target = $region28
      $region27: #{fusionnet_forward.7} parent=23 // pred_region
        %s202 = smul.u32 20, %s20
        %p203 = scmp.lt.s32.totalorder %s19, 1
        %s204 = scalar_select %p203, %s19, 1
        %p205 = scmp.lt.s32.totalorder %s202, 19
        %s206 = scalar_select %p205, %s202, 19
        %s207 = smul.addr %s204, 20
        %s208 = sadd.s32 %s206, %s207
        %s209 = smul.addr %s208, 4
        %s210 = scalar_lea.vmem %s0, %s209
        %s211 = smul.u32 20, %s20
      $region28: #{fusionnet_forward.7} parent=23 // pred_fallthru
        _
    $region24: #{fusionnet_forward.7} parent=5 // pred_fallthru
      _
    %p212 = scmp.le.s32.totalorder 1, %s12
    %p213 = scmp.lt.s32.totalorder %s12, 3
    %p214 = pnand %p212, %p213
    %p215 = pneg %p214
    // Predicated region
    $region29: #{fusionnet_forward.7} parent=5 // pred_check
      _
    $region30: #{fusionnet_forward.7} parent=5 // pred_check_branch
      %217 = sbr.rel (%p214) target = $region32
    $region31: #{fusionnet_forward.7} parent=5 // pred_region
      %s218 = ssub.s32 %s12, 1
      %s219 = smul.u32 20, %s22
      %p220 = scmp.lt.s32.totalorder %s21, 1
      %s221 = scalar_select %p220, %s21, 1
      %p222 = scmp.lt.s32.totalorder %s219, 19
      %s223 = scalar_select %p222, %s219, 19
      %s224 = smul.addr %s221, 20
      %s225 = sadd.s32 %s223, %s224
      %s226 = smul.addr %s225, 4
      %s227 = scalar_lea.vmem %s0, %s226
      %p228 = pneg %p52
      %p229 = pneg %p49
      %p230 = pneg %p73
      %p231 = pneg %p70
      %p232 = pneg %p94
      %p233 = pneg %p91
      %p234 = pneg %p122
      %p235 = pneg %p119
      %s236 = smul.u32 20, %s22
      %p237 = scmp.lt.s32.totalorder %s21, 1
      %s238 = scalar_select %p237, %s21, 1
      %p239 = scmp.lt.s32.totalorder %s236, 19
      %s240 = scalar_select %p239, %s236, 19
      %s241 = smul.addr %s238, 20
      %s242 = sadd.s32 %s240, %s241
      %s243 = smul.addr %s242, 8
      %s244 = scalar_lea.vmem %s3, %s243
      %p245 = pneg %p148
      %p246 = pneg %p145
      %p247 = scmp.lt.s32.totalorder %s21, 1
      %s248 = scalar_select %p247, %s21, 1
      %s249 = scalar_lea.vmem %s4, %s248
      %p250 = pneg %p174
      %p251 = pneg %p171
      %p252 = scmp.lt.s32.totalorder %s21, 1
      %s253 = scalar_select %p252, %s21, 1
      %s254 = scalar_lea.vmem %s5, %s253
      %s255 = smul.u32 20, %s22
      %p256 = scmp.lt.s32.totalorder %s21, 1
      %s257 = scalar_select %p256, %s21, 1
      %p258 = scmp.lt.s32.totalorder %s255, 19
      %s259 = scalar_select %p258, %s255, 19
      %s260 = smul.addr %s257, 20
      %s261 = sadd.s32 %s259, %s260
      %s262 = smul.addr %s261, 4
      %s263 = scalar_lea.vmem %s0, %s262
      %s264 = smul.u32 20, %s22
      %s265 = smul.u32 20, %s22
      %p266 = scmp.lt.s32.totalorder %s21, 1
      %s267 = scalar_select %p266, %s21, 1
      %p268 = scmp.lt.s32.totalorder %s265, 19
      %s269 = scalar_select %p268, %s265, 19
      %s270 = smul.addr %s267, 20
      %s271 = sadd.s32 %s269, %s270
      %s272 = smul.addr %s271, 8
      %s273 = scalar_lea.vmem %s3, %s272
      %s274 = smul.u32 20, %s22
      %p275 = scmp.lt.s32.totalorder %s21, 1
      %s276 = scalar_select %p275, %s21, 1
      %s277 = scalar_lea.vmem %s4, %s276
      %p278 = scmp.lt.s32.totalorder %s21, 1
      %s279 = scalar_select %p278, %s21, 1
      %s280 = scalar_lea.vmem %s5, %s279
      %p282 = scmp.eq.s32.totalorder %s22, 0
      // Predicated region
      $region33: #{fusionnet_forward.7} parent=31 // pred_check
        %p283 = pneg %p282
      $region34: #{fusionnet_forward.7} parent=31 // pred_check_branch
        %285 = sbr.rel (%p283) target = $region36
      $region35: #{fusionnet_forward.7} parent=31 // pred_region
        %vm286 = vcmask 0
        %287 = vst.msk [vmem:[#allocation2] sm:$0x1] %vm286, 0.0
        %288 = vst.msk [vmem:[#allocation3] sm:$0x1] %vm286, 0.0
      $region36: #{fusionnet_forward.7} parent=31 // pred_fallthru
        _
      %v289 = vld [vmem:[%s263] sm:$0xf]
      %v290 = vld [vmem:[%s263 + $0x4] sm:$0xf]
      %v291 = vld [vmem:[%s263 + $0x8] sm:$0xf]
      %v292 = vld [vmem:[%s263 + $0xc] sm:$0xf]
      %v293 = vld [vmem:[%s263 + $0x10] sm:$0xf]
      %v294 = vld [vmem:[%s263 + $0x14] sm:$0xf]
      %v295 = vld [vmem:[%s263 + $0x18] sm:$0xf]
      %v296 = vld [vmem:[%s263 + $0x1c] sm:$0xf]
      %v297 = vld [vmem:[%s263 + $0x20] sm:$0xf]
      %v298 = vld [vmem:[%s263 + $0x24] sm:$0xf]
      %v299 = vld [vmem:[%s263 + $0x28] sm:$0xf]
      %v300 = vld [vmem:[%s263 + $0x2c] sm:$0xf]
      %v301 = vld [vmem:[%s263 + $0x30] sm:$0xf]
      %v302 = vld [vmem:[%s263 + $0x34] sm:$0xf]
      %v303 = vld [vmem:[%s263 + $0x38] sm:$0xf]
      %v304 = vld [vmem:[%s263 + $0x3c] sm:$0xf]
      %v305 = vld [vmem:[%s263 + $0x40] sm:$0xf]
      %v306 = vld [vmem:[%s263 + $0x44] sm:$0xf]
      %v307 = vld [vmem:[%s263 + $0x48] sm:$0xf]
      %v308 = vld [vmem:[%s263 + $0x4c] sm:$0xf]
      %v309 = vld [vmem:[%s1] sm:$0xf]
      %v310 = vld [vmem:[%s1 + $0x4] sm:$0xf]
      %v311 = vld [vmem:[%s2] sm:$0x1]
      %v313 = vlaneseq
      %v314 = vshrl.u32 %v313, 7
      %v315 = vsub.s32 0, %v314
      %v316 = vrot.slane %v311, %v315
      %v338 = vunpack.c.l.b16 %v289
      %v339 = vunpack.c.l.b16 %v290
      %v340 = vunpack.c.l.b16 %v291
      %v341 = vunpack.c.l.b16 %v292
      %v342 = vunpack.c.l.b16 %v293
      %v343 = vunpack.c.l.b16 %v294
      %v344 = vunpack.c.l.b16 %v295
      %v345 = vunpack.c.l.b16 %v296
      %v346 = vunpack.c.l.b16 %v297
      %v347 = vunpack.c.l.b16 %v298
      %v348 = vunpack.c.l.b16 %v299
      %v349 = vunpack.c.l.b16 %v300
      %v350 = vunpack.c.l.b16 %v301
      %v351 = vunpack.c.l.b16 %v302
      %v352 = vunpack.c.l.b16 %v303
      %v353 = vunpack.c.l.b16 %v304
      %v354 = vunpack.c.l.b16 %v305
      %v355 = vunpack.c.l.b16 %v306
      %v356 = vunpack.c.l.b16 %v307
      %v357 = vunpack.c.l.b16 %v308
      %v358 = vpack.c.b16 %v339, %v338
      %v359 = vpack.c.b16 %v341, %v340
      %v360 = vpack.c.b16 %v343, %v342
      %v361 = vpack.c.b16 %v345, %v344
      %v362 = vpack.c.b16 %v347, %v346
      %v363 = vpack.c.b16 %v349, %v348
      %v364 = vpack.c.b16 %v351, %v350
      %v365 = vpack.c.b16 %v353, %v352
      %v366 = vpack.c.b16 %v355, %v354
      %v367 = vpack.c.b16 %v357, %v356
      %v370 = vunpack.c.l.b16 %v309
      %v371 = vunpack.c.l.b16 %v310
      %v372 = vpack.c.b16 %v371, %v370
      %vm374 = vcmask 130048
      %v376 = vsel %vm374, %v358, 0
      %v379 = vsel %vm374, %v359, 0
      %v382 = vsel %vm374, %v360, 0
      %v385 = vsel %vm374, %v361, 0
      %v388 = vsel %vm374, %v362, 0
      %v391 = vsel %vm374, %v363, 0
      %v394 = vsel %vm374, %v364, 0
      %v397 = vsel %vm374, %v365, 0
      %v400 = vsel %vm374, %v366, 0
      %v403 = vsel %vm374, %v367, 0
      %405 = vmatprep.subr.bf16.mxu0 0
      %406 = vmatpush1.bf16.msra.mxu0 0
      %407 = vmatprep.subr.bf16.mxu0 0
      %408 = vmatpush1.bf16.msra.mxu0 0
      %409 = vmatprep.subr.bf16.mxu0 0
      %410 = vmatpush1.bf16.msra.mxu0 0
      %411 = vmatprep.subr.bf16.mxu0 0
      %412 = vmatpush1.bf16.msra.mxu0 0
      %413 = vmatprep.subr.bf16.mxu0 0
      %414 = vmatpush1.bf16.msra.mxu0 0
      %415 = vmatprep.subr.bf16.mxu0 0
      %416 = vmatpush1.bf16.msra.mxu0 0
      %417 = vmatprep.subr.bf16.mxu0 0
      %418 = vmatpush1.bf16.msra.mxu0 0
      %419 = vmatprep.subr.bf16.mxu0 0
      %420 = vmatpush1.bf16.msra.mxu0 %v372
      %421 = vmatprep.subr.bf16.mxu0 0
      %422 = vmatpush2.bf16.msra.mxu0 0
      %423 = vmatprep.subr.bf16.mxu0 0
      %424 = vmatpush2.bf16.msra.mxu0 0
      %425 = vmatprep.subr.bf16.mxu0 0
      %426 = vmatpush2.bf16.msra.mxu0 0
      %427 = vmatprep.subr.bf16.mxu0 0
      %428 = vmatpush2.bf16.msra.mxu0 0
      %429 = vmatprep.subr.bf16.mxu0 0
      %430 = vmatpush2.bf16.msra.mxu0 0
      %431 = vmatprep.subr.bf16.mxu0 0
      %432 = vmatpush2.bf16.msra.mxu0 0
      %433 = vmatprep.subr.bf16.mxu0 0
      %434 = vmatpush2.bf16.msra.mxu0 0
      %435 = vmatprep.subr.bf16.mxu0 0
      %436 = vmatpush2.bf16.msra.mxu0 0
      %437 = vmatprep.mubr.bf16.mxu0 0
      %438 = vmatmul.mubr.bf16.gmra.mxu0 %v376
      %v439 = vpop.f32.mrf.mxu0
      %v440 = vadd.f32 %v316, %v439
      %v441 = vpop.f32.mrf.mxu0
      %v442 = vpop.f32.mrf.mxu0
      %v443 = vadd.f32 %v316, %v442
      %v444 = vpop.f32.mrf.mxu0
      %445 = vmatprep.mubr.bf16.mxu0 0
      %446 = vmatmul.mubr.bf16.gmra.mxu0 %v379
      %v447 = vpop.f32.mrf.mxu0
      %v448 = vadd.f32 %v316, %v447
      %v449 = vpop.f32.mrf.mxu0
      %v450 = vpop.f32.mrf.mxu0
      %v451 = vadd.f32 %v316, %v450
      %v452 = vpop.f32.mrf.mxu0
      %453 = vmatprep.mubr.bf16.mxu0 0
      %454 = vmatmul.mubr.bf16.gmra.mxu0 %v382
      %v455 = vpop.f32.mrf.mxu0
      %v456 = vadd.f32 %v316, %v455
      %v457 = vpop.f32.mrf.mxu0
      %v458 = vpop.f32.mrf.mxu0
      %v459 = vadd.f32 %v316, %v458
      %v460 = vpop.f32.mrf.mxu0
      %461 = vmatprep.mubr.bf16.mxu0 0
      %462 = vmatmul.mubr.bf16.gmra.mxu0 %v385
      %v463 = vpop.f32.mrf.mxu0
      %v464 = vadd.f32 %v316, %v463
      %v465 = vpop.f32.mrf.mxu0
      %v466 = vpop.f32.mrf.mxu0
      %v467 = vadd.f32 %v316, %v466
      %v468 = vpop.f32.mrf.mxu0
      %469 = vmatprep.mubr.bf16.mxu0 0
      %470 = vmatmul.mubr.bf16.gmra.mxu0 %v388
      %v471 = vpop.f32.mrf.mxu0
      %v472 = vadd.f32 %v316, %v471
      %v473 = vpop.f32.mrf.mxu0
      %v474 = vpop.f32.mrf.mxu0
      %v475 = vadd.f32 %v316, %v474
      %v476 = vpop.f32.mrf.mxu0
      %477 = vmatprep.mubr.bf16.mxu0 0
      %478 = vmatmul.mubr.bf16.gmra.mxu0 %v391
      %v479 = vpop.f32.mrf.mxu0
      %v480 = vadd.f32 %v316, %v479
      %v481 = vpop.f32.mrf.mxu0
      %v482 = vpop.f32.mrf.mxu0
      %v483 = vadd.f32 %v316, %v482
      %v484 = vpop.f32.mrf.mxu0
      %485 = vmatprep.mubr.bf16.mxu0 0
      %486 = vmatmul.mubr.bf16.gmra.mxu0 %v394
      %v487 = vpop.f32.mrf.mxu0
      %v488 = vadd.f32 %v316, %v487
      %v489 = vpop.f32.mrf.mxu0
      %v490 = vpop.f32.mrf.mxu0
      %v491 = vadd.f32 %v316, %v490
      %v492 = vpop.f32.mrf.mxu0
      %493 = vmatprep.mubr.bf16.mxu0 0
      %494 = vmatmul.mubr.bf16.gmra.mxu0 %v397
      %v495 = vpop.f32.mrf.mxu0
      %v496 = vadd.f32 %v316, %v495
      %v497 = vpop.f32.mrf.mxu0
      %v498 = vpop.f32.mrf.mxu0
      %v499 = vadd.f32 %v316, %v498
      %v500 = vpop.f32.mrf.mxu0
      %501 = vmatprep.mubr.bf16.mxu0 0
      %502 = vmatmul.mubr.bf16.gmra.mxu0 %v400
      %v503 = vpop.f32.mrf.mxu0
      %v504 = vadd.f32 %v316, %v503
      %v505 = vpop.f32.mrf.mxu0
      %v506 = vpop.f32.mrf.mxu0
      %v507 = vadd.f32 %v316, %v506
      %v508 = vpop.f32.mrf.mxu0
      %509 = vmatprep.mubr.bf16.mxu0 0
      %510 = vmatmul.mubr.bf16.gmra.mxu0 %v403
      %v511 = vpop.f32.mrf.mxu0
      %v512 = vadd.f32 %v316, %v511
      %v513 = vpop.f32.mrf.mxu0
      %v514 = vpop.f32.mrf.mxu0
      %v515 = vadd.f32 %v316, %v514
      %v516 = vpop.f32.mrf.mxu0
      %517 = vdwg.mxu0
      %v518 = vlaneseq
      %v519 = vshrl.u32 %v518, 7
      %v520 = vadd.s32 %v519, 8
      %v521 = vadd.s32 %v519, 16
      %v522 = vadd.s32 %v519, 24
      %v523 = vadd.s32 %v519, 32
      %v524 = vadd.s32 %v519, 40
      %v525 = vadd.s32 %v519, 48
      %v526 = vadd.s32 %v519, 56
      %v527 = vadd.s32 %v519, 64
      %v528 = vadd.s32 %v519, 72
      %v529 = vadd.s32 %v519, 80
      %v530 = vadd.s32 %v519, 88
      %v531 = vadd.s32 %v519, 96
      %v532 = vadd.s32 %v519, 104
      %v533 = vadd.s32 %v519, 112
      %v534 = vadd.s32 %v519, 120
      %v535 = vadd.s32 %v519, 128
      %v536 = vadd.s32 %v519, 136
      %v537 = vadd.s32 %v519, 144
      %v538 = vadd.s32 %v519, 152
      %s539 = smul.u32 %s22, 160
      %v540 = vstv %s539
      %v541 = vadd.s32 %v519, %v540
      %v542 = vadd.s32 %v520, %v540
      %v543 = vadd.s32 %v521, %v540
      %v544 = vadd.s32 %v522, %v540
      %v545 = vadd.s32 %v523, %v540
      %v546 = vadd.s32 %v524, %v540
      %v547 = vadd.s32 %v525, %v540
      %v548 = vadd.s32 %v526, %v540
      %v549 = vadd.s32 %v527, %v540
      %v550 = vadd.s32 %v528, %v540
      %v551 = vadd.s32 %v529, %v540
      %v552 = vadd.s32 %v530, %v540
      %v553 = vadd.s32 %v531, %v540
      %v554 = vadd.s32 %v532, %v540
      %v555 = vadd.s32 %v533, %v540
      %v556 = vadd.s32 %v534, %v540
      %v557 = vadd.s32 %v535, %v540
      %v558 = vadd.s32 %v536, %v540
      %v559 = vadd.s32 %v537, %v540
      %v560 = vadd.s32 %v538, %v540
      %vm561 = vcmp.lt.s32.totalorder %v541, 153
      %vm562 = vcmp.lt.s32.totalorder %v542, 153
      %vm563 = vcmp.lt.s32.totalorder %v543, 153
      %vm564 = vcmp.lt.s32.totalorder %v544, 153
      %vm565 = vcmp.lt.s32.totalorder %v545, 153
      %vm566 = vcmp.lt.s32.totalorder %v546, 153
      %vm567 = vcmp.lt.s32.totalorder %v547, 153
      %vm568 = vcmp.lt.s32.totalorder %v548, 153
      %vm569 = vcmp.lt.s32.totalorder %v549, 153
      %vm570 = vcmp.lt.s32.totalorder %v550, 153
      %vm571 = vcmp.lt.s32.totalorder %v551, 153
      %vm572 = vcmp.lt.s32.totalorder %v552, 153
      %vm573 = vcmp.lt.s32.totalorder %v553, 153
      %vm574 = vcmp.lt.s32.totalorder %v554, 153
      %vm575 = vcmp.lt.s32.totalorder %v555, 153
      %vm576 = vcmp.lt.s32.totalorder %v556, 153
      %vm577 = vcmp.lt.s32.totalorder %v557, 153
      %vm578 = vcmp.lt.s32.totalorder %v558, 153
      %vm579 = vcmp.lt.s32.totalorder %v559, 153
      %vm580 = vcmp.lt.s32.totalorder %v560, 153
      %v581 = vsel %vm561, %v440, 0.0
      %v582 = vsel %vm562, %v443, 0.0
      %v583 = vsel %vm563, %v448, 0.0
      %v584 = vsel %vm564, %v451, 0.0
      %v585 = vsel %vm565, %v456, 0.0
      %v586 = vsel %vm566, %v459, 0.0
      %v587 = vsel %vm567, %v464, 0.0
      %v588 = vsel %vm568, %v467, 0.0
      %v589 = vsel %vm569, %v472, 0.0
      %v590 = vsel %vm570, %v475, 0.0
      %v591 = vsel %vm571, %v480, 0.0
      %v592 = vsel %vm572, %v483, 0.0
      %v593 = vsel %vm573, %v488, 0.0
      %v594 = vsel %vm574, %v491, 0.0
      %v595 = vsel %vm575, %v496, 0.0
      %v596 = vsel %vm576, %v499, 0.0
      %v597 = vsel %vm577, %v504, 0.0
      %v598 = vsel %vm578, %v507, 0.0
      %v599 = vsel %vm579, %v512, 0.0
      %v600 = vsel %vm580, %v515, 0.0
      %v601 = vld [vmem:[#allocation2] sm:$0x1]
      %v602 = vadd.f32 %v581, %v582
      %v603 = vadd.f32 %v602, %v583
      %v604 = vadd.f32 %v603, %v584
      %v605 = vadd.f32 %v604, %v585
      %v606 = vadd.f32 %v605, %v586
      %v607 = vadd.f32 %v606, %v587
      %v608 = vadd.f32 %v607, %v588
      %v609 = vadd.f32 %v608, %v589
      %v610 = vadd.f32 %v609, %v590
      %v611 = vadd.f32 %v610, %v591
      %v612 = vadd.f32 %v611, %v592
      %v613 = vadd.f32 %v612, %v593
      %v614 = vadd.f32 %v613, %v594
      %v615 = vadd.f32 %v614, %v595
      %v616 = vadd.f32 %v615, %v596
      %v617 = vadd.f32 %v616, %v597
      %v618 = vadd.f32 %v617, %v598
      %v619 = vadd.f32 %v618, %v599
      %v620 = vadd.f32 %v619, %v600
      %621 = vadd.xlane.f32.xlu0 %v620
      %v622 = vpop.xlane.xlu0 %621
      %v623 = vrot.slane %v622, 4
      %v624 = vadd.f32 %v622, %v623
      %v625 = vrot.slane %v624, 2
      %v626 = vadd.f32 %v624, %v625
      %v627 = vrot.slane %v626, 1
      %v628 = vadd.f32 %v626, %v627
      %s629 = vtos %v628
      %v630 = vstv %s629
      %v631 = vadd.f32 %v601, %v630
      %vm632 = vcmask 0
      %633 = vst.msk [vmem:[#allocation2] sm:$0x1] %vm632, %v631
      %v634 = vld [vmem:[#allocation3] sm:$0x1]
      %v635 = vmul.f32 %v581, %v581
      %v636 = vmul.f32 %v582, %v582
      %v637 = vmul.f32 %v583, %v583
      %v638 = vmul.f32 %v584, %v584
      %v639 = vmul.f32 %v585, %v585
      %v640 = vmul.f32 %v586, %v586
      %v641 = vmul.f32 %v587, %v587
      %v642 = vmul.f32 %v588, %v588
      %v643 = vmul.f32 %v589, %v589
      %v644 = vmul.f32 %v590, %v590
      %v645 = vmul.f32 %v591, %v591
      %v646 = vmul.f32 %v592, %v592
      %v647 = vmul.f32 %v593, %v593
      %v648 = vmul.f32 %v594, %v594
      %v649 = vmul.f32 %v595, %v595
      %v650 = vmul.f32 %v596, %v596
      %v651 = vmul.f32 %v597, %v597
      %v652 = vmul.f32 %v598, %v598
      %v653 = vmul.f32 %v599, %v599
      %v654 = vmul.f32 %v600, %v600
      %v655 = vadd.f32 %v635, %v636
      %v656 = vadd.f32 %v655, %v637
      %v657 = vadd.f32 %v656, %v638
      %v658 = vadd.f32 %v657, %v639
      %v659 = vadd.f32 %v658, %v640
      %v660 = vadd.f32 %v659, %v641
      %v661 = vadd.f32 %v660, %v642
      %v662 = vadd.f32 %v661, %v643
      %v663 = vadd.f32 %v662, %v644
      %v664 = vadd.f32 %v663, %v645
      %v665 = vadd.f32 %v664, %v646
      %v666 = vadd.f32 %v665, %v647
      %v667 = vadd.f32 %v666, %v648
      %v668 = vadd.f32 %v667, %v649
      %v669 = vadd.f32 %v668, %v650
      %v670 = vadd.f32 %v669, %v651
      %v671 = vadd.f32 %v670, %v652
      %v672 = vadd.f32 %v671, %v653
      %v673 = vadd.f32 %v672, %v654
      %674 = vadd.xlane.f32.xlu0 %v673
      %v675 = vpop.xlane.xlu0 %674
      %v676 = vrot.slane %v675, 4
      %v677 = vadd.f32 %v675, %v676
      %v678 = vrot.slane %v677, 2
      %v679 = vadd.f32 %v677, %v678
      %v680 = vrot.slane %v679, 1
      %v681 = vadd.f32 %v679, %v680
      %s682 = vtos %v681
      %v683 = vstv %s682
      %v684 = vadd.f32 %v634, %v683
      %685 = vst.msk [vmem:[#allocation3] sm:$0x1] %vm632, %v684
      %686 = vst [vmem:[%s273] sm:$0xff] %v440
      %687 = vst [vmem:[%s273 + $0x8] sm:$0xff] %v443
      %688 = vst [vmem:[%s273 + $0x10] sm:$0xff] %v448
      %689 = vst [vmem:[%s273 + $0x18] sm:$0xff] %v451
      %690 = vst [vmem:[%s273 + $0x20] sm:$0xff] %v456
      %691 = vst [vmem:[%s273 + $0x28] sm:$0xff] %v459
      %692 = vst [vmem:[%s273 + $0x30] sm:$0xff] %v464
      %693 = vst [vmem:[%s273 + $0x38] sm:$0xff] %v467
      %694 = vst [vmem:[%s273 + $0x40] sm:$0xff] %v472
      %695 = vst [vmem:[%s273 + $0x48] sm:$0xff] %v475
      %696 = vst [vmem:[%s273 + $0x50] sm:$0xff] %v480
      %697 = vst [vmem:[%s273 + $0x58] sm:$0xff] %v483
      %698 = vst [vmem:[%s273 + $0x60] sm:$0xff] %v488
      %699 = vst [vmem:[%s273 + $0x68] sm:$0xff] %v491
      %700 = vst [vmem:[%s273 + $0x70] sm:$0xff] %v496
      %701 = vst [vmem:[%s273 + $0x78] sm:$0xff] %v499
      %702 = vst [vmem:[%s273 + $0x80] sm:$0xff] %v504
      %703 = vst [vmem:[%s273 + $0x88] sm:$0xff] %v507
      %704 = vst [vmem:[%s273 + $0x90] sm:$0xff] %v512
      %705 = vst [vmem:[%s273 + $0x98] sm:$0xff] %v515
      // Predicated region
      $region37: #{fusionnet_forward.7} parent=31 // pred_check
        %p706 = pneg %p282
      $region38: #{fusionnet_forward.7} parent=31 // pred_check_branch
        %708 = sbr.rel (%p706) target = $region40
      $region39: #{fusionnet_forward.7} parent=31 // pred_region
        %v709 = vld [vmem:[#allocation2] sm:$0x1]
        %v710 = vrcp.pop 19584.0
        %v711 = vmul.f32 %v709, %v710
        %v712 = vld [vmem:[#allocation3] sm:$0x1]
        %v713 = vmul.f32 %v712, %v710
        %v714 = vmul.f32 %v711, %v711
        %v715 = vsub.f32 %v713, %v714
        %716 = vst.msk [vmem:[%s277] sm:$0x1] %vm632, %v711
        %v717 = vadd.f32 %v715, 1e-05
        %v718 = vrsqrt.pop %v717
        %719 = vst.msk [vmem:[%s280] sm:$0x1] %vm632, %v718
      $region40: #{fusionnet_forward.7} parent=31 // pred_fallthru
        _
      %s720 = smul.u32 20, %s22
      %p721 = scmp.lt.s32.totalorder %s21, 1
      %s722 = scalar_select %p721, %s21, 1
      %p723 = scmp.lt.s32.totalorder %s720, 19
      %s724 = scalar_select %p723, %s720, 19
      %s725 = smul.addr %s722, 20
      %s726 = sadd.s32 %s724, %s725
      %s727 = smul.addr %s726, 8
      %s728 = scalar_lea.vmem %s3, %s727
      %p729 = scmp.lt.s32.totalorder %s21, 1
      %s730 = scalar_select %p729, %s21, 1
      %s731 = scalar_lea.vmem %s4, %s730
      %p732 = scmp.lt.s32.totalorder %s21, 1
      %s733 = scalar_select %p732, %s21, 1
      %s734 = scalar_lea.vmem %s5, %s733
      // Predicated region
      $region41: #{fusionnet_forward.7} parent=31 // pred_check
        %p735 = pneg %p119
      $region42: #{fusionnet_forward.7} parent=31 // pred_check_branch
        %737 = sbr.rel (%p735) target = $region44
      $region43: #{fusionnet_forward.7} parent=31 // pred_region
        %s738 = smul.u32 20, %s22
      $region44: #{fusionnet_forward.7} parent=31 // pred_fallthru
        _
      // Predicated region
      $region45: #{fusionnet_forward.7} parent=31 // pred_check
        %p739 = pneg %p145
      $region46: #{fusionnet_forward.7} parent=31 // pred_check_branch
        %741 = sbr.rel (%p739) target = $region48
      $region47: #{fusionnet_forward.7} parent=31 // pred_region
        _
      $region48: #{fusionnet_forward.7} parent=31 // pred_fallthru
        _
      // Predicated region
      $region49: #{fusionnet_forward.7} parent=31 // pred_check
        %p742 = pneg %p171
      $region50: #{fusionnet_forward.7} parent=31 // pred_check_branch
        %744 = sbr.rel (%p742) target = $region52
      $region51: #{fusionnet_forward.7} parent=31 // pred_region
        _
      $region52: #{fusionnet_forward.7} parent=31 // pred_fallthru
        _
    $region32: #{fusionnet_forward.7} parent=5 // pred_fallthru
      _
    %p745 = scmp.le.s32.totalorder 2, %s12
    // Predicated region
    $region53: #{fusionnet_forward.7} parent=5 // pred_check
      %p746 = pneg %p745
    $region54: #{fusionnet_forward.7} parent=5 // pred_check_branch
      %748 = sbr.rel (%p746) target = $region56
    $region55: #{fusionnet_forward.7} parent=5 // pred_region
      %s749 = ssub.s32 %s12, 2
      // Predicated region
      $region57: #{fusionnet_forward.7} parent=55 // pred_check
        %p750 = pneg %p125
      $region58: #{fusionnet_forward.7} parent=55 // pred_check_branch
        %752 = sbr.rel (%p750) target = $region60
      $region59: #{fusionnet_forward.7} parent=55 // pred_region
        %s753 = smul.u32 20, %s24
        %p754 = scmp.lt.s32.totalorder %s23, 1
        %s755 = scalar_select %p754, %s23, 1
        %p756 = scmp.lt.s32.totalorder %s753, 19
        %s757 = scalar_select %p756, %s753, 19
        %s758 = smul.addr %s755, 20
        %s759 = sadd.s32 %s757, %s758
        %s760 = smul.addr %s759, 8
        %s761 = scalar_lea.vmem %s3, %s760
      $region60: #{fusionnet_forward.7} parent=55 // pred_fallthru
        _
      // Predicated region
      $region61: #{fusionnet_forward.7} parent=55 // pred_check
        %p762 = pneg %p151
      $region62: #{fusionnet_forward.7} parent=55 // pred_check_branch
        %764 = sbr.rel (%p762) target = $region64
      $region63: #{fusionnet_forward.7} parent=55 // pred_region
        %p765 = scmp.lt.s32.totalorder %s23, 1
        %s766 = scalar_select %p765, %s23, 1
        %s767 = scalar_lea.vmem %s4, %s766
      $region64: #{fusionnet_forward.7} parent=55 // pred_fallthru
        _
      // Predicated region
      $region65: #{fusionnet_forward.7} parent=55 // pred_check
        %p768 = pneg %p177
      $region66: #{fusionnet_forward.7} parent=55 // pred_check_branch
        %770 = sbr.rel (%p768) target = $region68
      $region67: #{fusionnet_forward.7} parent=55 // pred_region
        %p771 = scmp.lt.s32.totalorder %s23, 1
        %s772 = scalar_select %p771, %s23, 1
        %s773 = scalar_lea.vmem %s5, %s772
      $region68: #{fusionnet_forward.7} parent=55 // pred_fallthru
        _
    $region56: #{fusionnet_forward.7} parent=5 // pred_fallthru
      _
  $region6: #{fusionnet_forward.7} parent=0 // loop_footer
    %s16 = sadd.s32 1, %s12
  $region7: #{fusionnet_forward.7} parent=0 // loop_footer_branch
    %11 = sbr.rel target = $region3
  $region8: #{fusionnet_forward.7} parent=0 // loop_exit
    _

// kernel: fusionnet_forward.10
$region0: #{fusionnet_forward.10}
  #allocation0 [shape = 'u32[]', space=smem, size = 0x4, offset = 0x4, fixed_abs, tag = 'smem constant byte address 0x4 - core index']
  #allocation1 [shape = 'u32[144,128]{1,0:T(1,128)}', space=vmem, size = 0x12000, scoped, tag = 'internal scratch']
  #allocation2 [shape = 'f32[1]{0:T(128)S(6)}', space=smem, size = 0x200, scoped, tag = 'scoped memory for fusionnet_forward.10']
  %s0 = inlined_call_operand.vmem [shape: f32[2,160,128], index: 0, kind: input, shape index: {}]
  %s1 = inlined_call_operand.vmem [shape: f32[2,1,1], index: 1, kind: input, shape index: {}]
  %s2 = inlined_call_operand.vmem [shape: f32[2,1,1], index: 2, kind: input, shape index: {}]
  %s3 = inlined_call_operand.vmem [shape: f32[160,128], index: 3, kind: input, shape index: {}]
  %s4 = inlined_call_operand.vmem [shape: f32[160,128], index: 4, kind: input, shape index: {}]
  %s5 = inlined_call_operand.<no memory space> [shape: f32[1], index: 5, kind: input, shape index: {}]
  %s6 = inlined_call_operand.vmem [shape: bf16[2,160,128], index: 6, kind: output, shape index: {}]
  %s7 = sld [smem:[#allocation0]]
  $region57: #{fusionnet_forward.10} parent=0
    _
  %s9 = ssub.s32 1, %s7
  %s10 = scalar_select 0, %s9, %s7
  %11 = sst [smem:[#allocation2]] %s5
  loop: start=0, step=1, limit=4
  $region2: #{fusionnet_forward.10} parent=0 // loop_pre_header
    _
  $region3: #{fusionnet_forward.10} parent=0 // loop_header
    %s13 = sphi 0, %s17
    %p14 = scmp.ge.s32.totalorder %s13, 4
    %s20 = sphi 0, %s32
    %s21 = sphi 0, %s28
    %s22 = sphi 0, %s20
    %s23 = sphi 0, %s21
    %s24 = sphi 0, %s22
    %s25 = sphi 0, %s23
    %s37 = sphi 0, %s39
    %s40 = sphi 0, %s37
    %s41 = sphi 0, %s40
    %s57 = sphi 0, %s41
    %s63 = sphi 0, %s65
    %s66 = sphi 0, %s63
    %s67 = sphi 0, %s66
    %s83 = sphi 0, %s67
    %s89 = sphi 0, %s91
    %s92 = sphi 0, %s89
    %s93 = sphi 0, %s92
    %s109 = sphi 0, %s93
    %s115 = sphi 0, %s117
    %s118 = sphi 0, %s115
    %s119 = sphi 0, %s118
    %s135 = sphi 0, %s119
    %s141 = sphi 0, %s143
    %s144 = sphi 0, %s141
    %s145 = sphi 0, %s144
    %s161 = sphi 0, %s145
    %s165 = sphi 0, %s165
    %s167 = sphi 0, %s165
    %s168 = sphi 0, %s167
    %s182 = sphi 0, %s168
    %s190 = sphi 0, %s192
    %s193 = sphi 0, %s190
    %s194 = sphi 0, %s193
    %s210 = sphi 0, %s194
  $region4: #{fusionnet_forward.10} parent=0 // loop_header_branch
    %16 = sbr.rel (%p14) target = $region8
  $region5: #{fusionnet_forward.10} parent=0 // loop_body
    %s18 = ssub.s32 %s13, 1
    %s19 = ssub.s32 %s13, 2
    %s26 = sadd.s32 1, %s21
    %p27 = scmp.ge.s32.totalorder %s26, 1
    %s28 = scalar_select %p27, 0, %s26
    %s29 = sadd.s32 1, %s20
    %s30 = scalar_select %p27, %s29, %s20
    %p31 = scmp.ge.s32.totalorder %s30, 2
    %s32 = scalar_select %p31, 0, %s30
    %s33 = ssub.s32 %s20, %s32
    %s34 = ssub.s32 %s21, %s28
    %s35 = sor.u32 %s33, %s34
    %p36 = scmp.eq.s32.totalorder %s35, 0
    %s38 = sadd.s32 %s37, 1
    %s39 = scalar_select %p36, %s37, %s38
    %p42 = pneg %p36
    %p43 = scmp.eq.s32.totalorder %s13, 1
    %p44 = por %p42, %p43
    %p45 = scmp.ne.s32.totalorder %s37, %s40
    %p46 = scmp.eq.s32.totalorder %s13, 0
    %p47 = por %p45, %p46
    %p48 = scmp.ne.s32.totalorder %s37, %s40
    %p49 = scmp.eq.s32.totalorder %s18, 1
    %p50 = por %p48, %p49
    %p51 = scmp.ne.s32.totalorder %s40, %s41
    %p52 = scmp.eq.s32.totalorder %s18, 0
    %p53 = por %p51, %p52
    %p54 = scmp.ne.s32.totalorder %s40, %s41
    %p55 = scmp.eq.s32.totalorder %s19, 1
    %p56 = por %p54, %p55
    %p58 = scmp.ne.s32.totalorder %s41, %s57
    %p59 = scmp.eq.s32.totalorder %s19, 0
    %p60 = por %p58, %p59
    %s61 = ssub.s32 %s20, %s32
    %p62 = scmp.eq.s32.totalorder %s61, 0
    %s64 = sadd.s32 %s63, 1
    %s65 = scalar_select %p62, %s63, %s64
    %p68 = pneg %p62
    %p69 = scmp.eq.s32.totalorder %s13, 1
    %p70 = por %p68, %p69
    %p71 = scmp.ne.s32.totalorder %s63, %s66
    %p72 = scmp.eq.s32.totalorder %s13, 0
    %p73 = por %p71, %p72
    %p74 = scmp.ne.s32.totalorder %s63, %s66
    %p75 = scmp.eq.s32.totalorder %s18, 1
    %p76 = por %p74, %p75
    %p77 = scmp.ne.s32.totalorder %s66, %s67
    %p78 = scmp.eq.s32.totalorder %s18, 0
    %p79 = por %p77, %p78
    %p80 = scmp.ne.s32.totalorder %s66, %s67
    %p81 = scmp.eq.s32.totalorder %s19, 1
    %p82 = por %p80, %p81
    %p84 = scmp.ne.s32.totalorder %s67, %s83
    %p85 = scmp.eq.s32.totalorder %s19, 0
    %p86 = por %p84, %p85
    %s87 = ssub.s32 %s20, %s32
    %p88 = scmp.eq.s32.totalorder %s87, 0
    %s90 = sadd.s32 %s89, 1
    %s91 = scalar_select %p88, %s89, %s90
    %p94 = pneg %p88
    %p95 = scmp.eq.s32.totalorder %s13, 1
    %p96 = por %p94, %p95
    %p97 = scmp.ne.s32.totalorder %s89, %s92
    %p98 = scmp.eq.s32.totalorder %s13, 0
    %p99 = por %p97, %p98
    %p100 = scmp.ne.s32.totalorder %s89, %s92
    %p101 = scmp.eq.s32.totalorder %s18, 1
    %p102 = por %p100, %p101
    %p103 = scmp.ne.s32.totalorder %s92, %s93
    %p104 = scmp.eq.s32.totalorder %s18, 0
    %p105 = por %p103, %p104
    %p106 = scmp.ne.s32.totalorder %s92, %s93
    %p107 = scmp.eq.s32.totalorder %s19, 1
    %p108 = por %p106, %p107
    %p110 = scmp.ne.s32.totalorder %s93, %s109
    %p111 = scmp.eq.s32.totalorder %s19, 0
    %p112 = por %p110, %p111
    %s113 = ssub.s32 %s21, %s28
    %p114 = scmp.eq.s32.totalorder %s113, 0
    %s116 = sadd.s32 %s115, 1
    %s117 = scalar_select %p114, %s115, %s116
    %p120 = pneg %p114
    %p121 = scmp.eq.s32.totalorder %s13, 1
    %p122 = por %p120, %p121
    %p123 = scmp.ne.s32.totalorder %s115, %s118
    %p124 = scmp.eq.s32.totalorder %s13, 0
    %p125 = por %p123, %p124
    %p126 = scmp.ne.s32.totalorder %s115, %s118
    %p127 = scmp.eq.s32.totalorder %s18, 1
    %p128 = por %p126, %p127
    %p129 = scmp.ne.s32.totalorder %s118, %s119
    %p130 = scmp.eq.s32.totalorder %s18, 0
    %p131 = por %p129, %p130
    %p132 = scmp.ne.s32.totalorder %s118, %s119
    %p133 = scmp.eq.s32.totalorder %s19, 1
    %p134 = por %p132, %p133
    %p136 = scmp.ne.s32.totalorder %s119, %s135
    %p137 = scmp.eq.s32.totalorder %s19, 0
    %p138 = por %p136, %p137
    %s139 = ssub.s32 %s21, %s28
    %p140 = scmp.eq.s32.totalorder %s139, 0
    %s142 = sadd.s32 %s141, 1
    %s143 = scalar_select %p140, %s141, %s142
    %p146 = pneg %p140
    %p147 = scmp.eq.s32.totalorder %s13, 1
    %p148 = por %p146, %p147
    %p149 = scmp.ne.s32.totalorder %s141, %s144
    %p150 = scmp.eq.s32.totalorder %s13, 0
    %p151 = por %p149, %p150
    %p152 = scmp.ne.s32.totalorder %s141, %s144
    %p153 = scmp.eq.s32.totalorder %s18, 1
    %p154 = por %p152, %p153
    %p155 = scmp.ne.s32.totalorder %s144, %s145
    %p156 = scmp.eq.s32.totalorder %s18, 0
    %p157 = por %p155, %p156
    %p158 = scmp.ne.s32.totalorder %s144, %s145
    %p159 = scmp.eq.s32.totalorder %s19, 1
    %p160 = por %p158, %p159
    %p162 = scmp.ne.s32.totalorder %s145, %s161
    %p163 = scmp.eq.s32.totalorder %s19, 0
    %p164 = por %p162, %p163
    %s166 = sadd.s32 %s165, 1
    %p169 = scmp.eq.s32.totalorder %s13, 1
    %p170 = scmp.ne.s32.totalorder %s165, %s167
    %p171 = scmp.eq.s32.totalorder %s13, 0
    %p172 = por %p170, %p171
    %p173 = scmp.ne.s32.totalorder %s165, %s167
    %p174 = scmp.eq.s32.totalorder %s18, 1
    %p175 = por %p173, %p174
    %p176 = scmp.ne.s32.totalorder %s167, %s168
    %p177 = scmp.eq.s32.totalorder %s18, 0
    %p178 = por %p176, %p177
    %p179 = scmp.ne.s32.totalorder %s167, %s168
    %p180 = scmp.eq.s32.totalorder %s19, 1
    %p181 = por %p179, %p180
    %p183 = scmp.ne.s32.totalorder %s168, %s182
    %p184 = scmp.eq.s32.totalorder %s19, 0
    %p185 = por %p183, %p184
    %s186 = ssub.s32 %s20, %s32
    %s187 = ssub.s32 %s21, %s28
    %s188 = sor.u32 %s186, %s187
    %p189 = scmp.eq.s32.totalorder %s188, 0
    %s191 = sadd.s32 %s190, 1
    %s192 = scalar_select %p189, %s190, %s191
    %p195 = pneg %p189
    %p196 = scmp.eq.s32.totalorder %s13, 1
    %p197 = por %p195, %p196
    %p198 = scmp.ne.s32.totalorder %s190, %s193
    %p199 = scmp.eq.s32.totalorder %s13, 0
    %p200 = por %p198, %p199
    %p201 = scmp.ne.s32.totalorder %s190, %s193
    %p202 = scmp.eq.s32.totalorder %s18, 1
    %p203 = por %p201, %p202
    %p204 = scmp.ne.s32.totalorder %s193, %s194
    %p205 = scmp.eq.s32.totalorder %s18, 0
    %p206 = por %p204, %p205
    %p207 = scmp.ne.s32.totalorder %s193, %s194
    %p208 = scmp.eq.s32.totalorder %s19, 1
    %p209 = por %p207, %p208
    %p211 = scmp.ne.s32.totalorder %s194, %s210
    %p212 = scmp.eq.s32.totalorder %s19, 0
    %p213 = por %p211, %p212
    %p214 = scmp.le.s32.totalorder 1, %s13
    %p215 = scmp.lt.s32.totalorder %s13, 3
    %p216 = pnand %p214, %p215
    %p217 = pneg %p216
    // Predicated region
    $region9: #{fusionnet_forward.10} parent=5 // pred_check
      _
    $region10: #{fusionnet_forward.10} parent=5 // pred_check_branch
      %219 = sbr.rel (%p216) target = $region12
    $region11: #{fusionnet_forward.10} parent=5 // pred_region
      %s220 = ssub.s32 %s13, 1
      // Predicated region
      $region13: #{fusionnet_forward.10} parent=11 // pred_check
        %p221 = pneg %p131
      $region14: #{fusionnet_forward.10} parent=11 // pred_check_branch
        %223 = sbr.rel (%p221) target = $region16
      $region15: #{fusionnet_forward.10} parent=11 // pred_region
        %s224 = smul.u32 20, %s23
        %p225 = scmp.lt.s32.totalorder %s224, 19
        %s226 = scalar_select %p225, %s224, 19
        %s227 = smul.addr %s226, 8
        %s228 = scalar_lea.vmem %s3, %s227
        %s229 = smul.u32 20, %s23
      $region16: #{fusionnet_forward.10} parent=11 // pred_fallthru
        _
      // Predicated region
      $region17: #{fusionnet_forward.10} parent=11 // pred_check
        %p230 = pneg %p157
      $region18: #{fusionnet_forward.10} parent=11 // pred_check_branch
        %232 = sbr.rel (%p230) target = $region20
      $region19: #{fusionnet_forward.10} parent=11 // pred_region
        %s233 = smul.u32 20, %s23
        %p234 = scmp.lt.s32.totalorder %s233, 19
        %s235 = scalar_select %p234, %s233, 19
        %s236 = smul.addr %s235, 8
        %s237 = scalar_lea.vmem %s4, %s236
        %s238 = smul.u32 20, %s23
      $region20: #{fusionnet_forward.10} parent=11 // pred_fallthru
        _
      // Predicated region
      $region21: #{fusionnet_forward.10} parent=11 // pred_check
        %p239 = pneg %p178
      $region22: #{fusionnet_forward.10} parent=11 // pred_check_branch
        %241 = sbr.rel (%p239) target = $region24
      $region23: #{fusionnet_forward.10} parent=11 // pred_region
        _
      $region24: #{fusionnet_forward.10} parent=11 // pred_fallthru
        _
    $region12: #{fusionnet_forward.10} parent=5 // pred_fallthru
      _
    %p242 = scmp.lt.s32.totalorder %s13, 2
    // Predicated region
    $region25: #{fusionnet_forward.10} parent=5 // pred_check
      %p243 = pneg %p242
    $region26: #{fusionnet_forward.10} parent=5 // pred_check_branch
      %245 = sbr.rel (%p243) target = $region28
    $region27: #{fusionnet_forward.10} parent=5 // pred_region
      // Predicated region
      $region29: #{fusionnet_forward.10} parent=27 // pred_check
        %p246 = pneg %p47
      $region30: #{fusionnet_forward.10} parent=27 // pred_check_branch
        %248 = sbr.rel (%p246) target = $region32
      $region31: #{fusionnet_forward.10} parent=27 // pred_region
        %s249 = smul.u32 20, %s21
        %p250 = scmp.lt.s32.totalorder %s20, 1
        %s251 = scalar_select %p250, %s20, 1
        %p252 = scmp.lt.s32.totalorder %s249, 19
        %s253 = scalar_select %p252, %s249, 19
        %s254 = smul.addr %s251, 20
        %s255 = sadd.s32 %s253, %s254
        %s256 = smul.addr %s255, 8
        %s257 = scalar_lea.vmem %s0, %s256
        %s258 = smul.u32 20, %s21
      $region32: #{fusionnet_forward.10} parent=27 // pred_fallthru
        _
      // Predicated region
      $region33: #{fusionnet_forward.10} parent=27 // pred_check
        %p259 = pneg %p73
      $region34: #{fusionnet_forward.10} parent=27 // pred_check_branch
        %261 = sbr.rel (%p259) target = $region36
      $region35: #{fusionnet_forward.10} parent=27 // pred_region
        %p262 = scmp.lt.s32.totalorder %s20, 1
        %s263 = scalar_select %p262, %s20, 1
        %s264 = scalar_lea.vmem %s1, %s263
      $region36: #{fusionnet_forward.10} parent=27 // pred_fallthru
        _
      // Predicated region
      $region37: #{fusionnet_forward.10} parent=27 // pred_check
        %p265 = pneg %p99
      $region38: #{fusionnet_forward.10} parent=27 // pred_check_branch
        %267 = sbr.rel (%p265) target = $region40
      $region39: #{fusionnet_forward.10} parent=27 // pred_region
        %p268 = scmp.lt.s32.totalorder %s20, 1
        %s269 = scalar_select %p268, %s20, 1
        %s270 = scalar_lea.vmem %s2, %s269
      $region40: #{fusionnet_forward.10} parent=27 // pred_fallthru
        _
    $region28: #{fusionnet_forward.10} parent=5 // pred_fallthru
      _
    %p271 = scmp.le.s32.totalorder 1, %s13
    %p272 = scmp.lt.s32.totalorder %s13, 3
    %p273 = pnand %p271, %p272
    %p274 = pneg %p273
    // Predicated region
    $region41: #{fusionnet_forward.10} parent=5 // pred_check
      _
    $region42: #{fusionnet_forward.10} parent=5 // pred_check_branch
      %276 = sbr.rel (%p273) target = $region44
    $region43: #{fusionnet_forward.10} parent=5 // pred_region
      %s277 = ssub.s32 %s13, 1
      %s278 = smul.u32 20, %s23
      %p279 = scmp.lt.s32.totalorder %s22, 1
      %s280 = scalar_select %p279, %s22, 1
      %p281 = scmp.lt.s32.totalorder %s278, 19
      %s282 = scalar_select %p281, %s278, 19
      %s283 = smul.addr %s280, 20
      %s284 = sadd.s32 %s282, %s283
      %s285 = smul.addr %s284, 8
      %s286 = scalar_lea.vmem %s0, %s285
      %p287 = pneg %p53
      %p288 = pneg %p50
      %p289 = scmp.lt.s32.totalorder %s22, 1
      %s290 = scalar_select %p289, %s22, 1
      %s291 = scalar_lea.vmem %s1, %s290
      %p292 = pneg %p79
      %p293 = pneg %p76
      %p294 = scmp.lt.s32.totalorder %s22, 1
      %s295 = scalar_select %p294, %s22, 1
      %s296 = scalar_lea.vmem %s2, %s295
      %p297 = pneg %p105
      %p298 = pneg %p102
      %s299 = smul.u32 20, %s23
      %p300 = scmp.lt.s32.totalorder %s299, 19
      %s301 = scalar_select %p300, %s299, 19
      %s302 = smul.addr %s301, 8
      %s303 = scalar_lea.vmem %s3, %s302
      %p304 = pneg %p131
      %p305 = pneg %p128
      %s306 = smul.u32 20, %s23
      %p307 = scmp.lt.s32.totalorder %s306, 19
      %s308 = scalar_select %p307, %s306, 19
      %s309 = smul.addr %s308, 8
      %s310 = scalar_lea.vmem %s4, %s309
      %p311 = pneg %p157
      %p312 = pneg %p154
      %p313 = pneg %p178
      %p314 = pneg %p175
      %p315 = pneg %p206
      %p316 = pneg %p203
      %s317 = smul.u32 20, %s23
      %p318 = scmp.lt.s32.totalorder %s22, 1
      %s319 = scalar_select %p318, %s22, 1
      %p320 = scmp.lt.s32.totalorder %s317, 19
      %s321 = scalar_select %p320, %s317, 19
      %s322 = smul.addr %s319, 20
      %s323 = sadd.s32 %s321, %s322
      %s324 = smul.addr %s323, 4
      %s325 = scalar_lea.vmem %s6, %s324
      %s326 = smul.u32 20, %s23
      %p327 = scmp.lt.s32.totalorder %s22, 1
      %s328 = scalar_select %p327, %s22, 1
      %p329 = scmp.lt.s32.totalorder %s326, 19
      %s330 = scalar_select %p329, %s326, 19
      %s331 = smul.addr %s328, 20
      %s332 = sadd.s32 %s330, %s331
      %s333 = smul.addr %s332, 8
      %s334 = scalar_lea.vmem %s0, %s333
      %s335 = smul.u32 20, %s23
      %p336 = scmp.lt.s32.totalorder %s22, 1
      %s337 = scalar_select %p336, %s22, 1
      %s338 = scalar_lea.vmem %s1, %s337
      %p339 = scmp.lt.s32.totalorder %s22, 1
      %s340 = scalar_select %p339, %s22, 1
      %s341 = scalar_lea.vmem %s2, %s340
      %s342 = smul.u32 20, %s23
      %p343 = scmp.lt.s32.totalorder %s342, 19
      %s344 = scalar_select %p343, %s342, 19
      %s345 = smul.addr %s344, 8
      %s346 = scalar_lea.vmem %s3, %s345
      %s347 = smul.u32 20, %s23
      %s348 = smul.u32 20, %s23
      %p349 = scmp.lt.s32.totalorder %s348, 19
      %s350 = scalar_select %p349, %s348, 19
      %s351 = smul.addr %s350, 8
      %s352 = scalar_lea.vmem %s4, %s351
      %s353 = smul.u32 20, %s23
      %s354 = smul.u32 20, %s23
      %p355 = scmp.lt.s32.totalorder %s22, 1
      %s356 = scalar_select %p355, %s22, 1
      %p357 = scmp.lt.s32.totalorder %s354, 19
      %s358 = scalar_select %p357, %s354, 19
      %s359 = smul.addr %s356, 20
      %s360 = sadd.s32 %s358, %s359
      %s361 = smul.addr %s360, 4
      %s362 = scalar_lea.vmem %s6, %s361
      %s363 = smul.u32 20, %s23
      %v364 = vld [vmem:[%s334] sm:$0xff]
      %v365 = vld [vmem:[%s334 + $0x8] sm:$0xff]
      %v366 = vld [vmem:[%s334 + $0x10] sm:$0xff]
      %v367 = vld [vmem:[%s334 + $0x18] sm:$0xff]
      %v368 = vld [vmem:[%s334 + $0x20] sm:$0xff]
      %v369 = vld [vmem:[%s334 + $0x28] sm:$0xff]
      %v370 = vld [vmem:[%s334 + $0x30] sm:$0xff]
      %v371 = vld [vmem:[%s334 + $0x38] sm:$0xff]
      %v372 = vld [vmem:[%s334 + $0x40] sm:$0xff]
      %v373 = vld [vmem:[%s334 + $0x48] sm:$0xff]
      %v374 = vld [vmem:[%s334 + $0x50] sm:$0xff]
      %v375 = vld [vmem:[%s334 + $0x58] sm:$0xff]
      %v376 = vld [vmem:[%s334 + $0x60] sm:$0xff]
      %v377 = vld [vmem:[%s334 + $0x68] sm:$0xff]
      %v378 = vld [vmem:[%s334 + $0x70] sm:$0xff]
      %v379 = vld [vmem:[%s334 + $0x78] sm:$0xff]
      %v380 = vld [vmem:[%s334 + $0x80] sm:$0xff]
      %v381 = vld [vmem:[%s334 + $0x88] sm:$0xff]
      %v382 = vld [vmem:[%s334 + $0x90] sm:$0xff]
      %v383 = vld [vmem:[%s334 + $0x98] sm:$0xff]
      %v384 = vld [vmem:[%s338] sm:$0x1]
      %v386 = vlaneseq
      %v387 = vshrl.u32 %v386, 7
      %v388 = vsub.s32 0, %v387
      %v389 = vrot.slane %v384, %v388
      %390 = vset.pattern.permute.xlu0 0
      %391 = vperm.xlu0 %390, %v389
      %v392 = vpop.permute.xlu0 %391
      %v394 = vsub.f32 %v364, %v392
      %v395 = vsub.f32 %v365, %v392
      %v396 = vsub.f32 %v366, %v392
      %v397 = vsub.f32 %v367, %v392
      %v398 = vsub.f32 %v368, %v392
      %v399 = vsub.f32 %v369, %v392
      %v400 = vsub.f32 %v370, %v392
      %v401 = vsub.f32 %v371, %v392
      %v402 = vsub.f32 %v372, %v392
      %v403 = vsub.f32 %v373, %v392
      %v404 = vsub.f32 %v374, %v392
      %v405 = vsub.f32 %v375, %v392
      %v406 = vsub.f32 %v376, %v392
      %v407 = vsub.f32 %v377, %v392
      %v408 = vsub.f32 %v378, %v392
      %v409 = vsub.f32 %v379, %v392
      %v410 = vsub.f32 %v380, %v392
      %v411 = vsub.f32 %v381, %v392
      %v412 = vsub.f32 %v382, %v392
      %v413 = vsub.f32 %v383, %v392
      %v414 = vld [vmem:[%s341] sm:$0x1]
      %v416 = vlaneseq
      %v417 = vshrl.u32 %v416, 7
      %v418 = vsub.s32 0, %v417
      %v419 = vrot.slane %v414, %v418
      %420 = vset.pattern.permute.xlu0 0
      %421 = vperm.xlu0 %420, %v419
      %v422 = vpop.permute.xlu0 %421
      %v424 = vmul.f32 %v394, %v422
      %v425 = vmul.f32 %v395, %v422
      %v426 = vmul.f32 %v396, %v422
      %v427 = vmul.f32 %v397, %v422
      %v428 = vmul.f32 %v398, %v422
      %v429 = vmul.f32 %v399, %v422
      %v430 = vmul.f32 %v400, %v422
      %v431 = vmul.f32 %v401, %v422
      %v432 = vmul.f32 %v402, %v422
      %v433 = vmul.f32 %v403, %v422
      %v434 = vmul.f32 %v404, %v422
      %v435 = vmul.f32 %v405, %v422
      %v436 = vmul.f32 %v406, %v422
      %v437 = vmul.f32 %v407, %v422
      %v438 = vmul.f32 %v408, %v422
      %v439 = vmul.f32 %v409, %v422
      %v440 = vmul.f32 %v410, %v422
      %v441 = vmul.f32 %v411, %v422
      %v442 = vmul.f32 %v412, %v422
      %v443 = vmul.f32 %v413, %v422
      %v444 = vld [vmem:[%s346] sm:$0xff]
      %v445 = vld [vmem:[%s346 + $0x8] sm:$0xff]
      %v446 = vld [vmem:[%s346 + $0x10] sm:$0xff]
      %v447 = vld [vmem:[%s346 + $0x18] sm:$0xff]
      %v448 = vld [vmem:[%s346 + $0x20] sm:$0xff]
      %v449 = vld [vmem:[%s346 + $0x28] sm:$0xff]
      %v450 = vld [vmem:[%s346 + $0x30] sm:$0xff]
      %v451 = vld [vmem:[%s346 + $0x38] sm:$0xff]
      %v452 = vld [vmem:[%s346 + $0x40] sm:$0xff]
      %v453 = vld [vmem:[%s346 + $0x48] sm:$0xff]
      %v454 = vld [vmem:[%s346 + $0x50] sm:$0xff]
      %v455 = vld [vmem:[%s346 + $0x58] sm:$0xff]
      %v456 = vld [vmem:[%s346 + $0x60] sm:$0xff]
      %v457 = vld [vmem:[%s346 + $0x68] sm:$0xff]
      %v458 = vld [vmem:[%s346 + $0x70] sm:$0xff]
      %v459 = vld [vmem:[%s346 + $0x78] sm:$0xff]
      %v460 = vld [vmem:[%s346 + $0x80] sm:$0xff]
      %v461 = vld [vmem:[%s346 + $0x88] sm:$0xff]
      %v462 = vld [vmem:[%s346 + $0x90] sm:$0xff]
      %v463 = vld [vmem:[%s346 + $0x98] sm:$0xff]
      %v464 = vmul.f32 %v424, %v444
      %v465 = vmul.f32 %v425, %v445
      %v466 = vmul.f32 %v426, %v446
      %v467 = vmul.f32 %v427, %v447
      %v468 = vmul.f32 %v428, %v448
      %v469 = vmul.f32 %v429, %v449
      %v470 = vmul.f32 %v430, %v450
      %v471 = vmul.f32 %v431, %v451
      %v472 = vmul.f32 %v432, %v452
      %v473 = vmul.f32 %v433, %v453
      %v474 = vmul.f32 %v434, %v454
      %v475 = vmul.f32 %v435, %v455
      %v476 = vmul.f32 %v436, %v456
      %v477 = vmul.f32 %v437, %v457
      %v478 = vmul.f32 %v438, %v458
      %v479 = vmul.f32 %v439, %v459
      %v480 = vmul.f32 %v440, %v460
      %v481 = vmul.f32 %v441, %v461
      %v482 = vmul.f32 %v442, %v462
      %v483 = vmul.f32 %v443, %v463
      %v484 = vld [vmem:[%s352] sm:$0xff]
      %v485 = vld [vmem:[%s352 + $0x8] sm:$0xff]
      %v486 = vld [vmem:[%s352 + $0x10] sm:$0xff]
      %v487 = vld [vmem:[%s352 + $0x18] sm:$0xff]
      %v488 = vld [vmem:[%s352 + $0x20] sm:$0xff]
      %v489 = vld [vmem:[%s352 + $0x28] sm:$0xff]
      %v490 = vld [vmem:[%s352 + $0x30] sm:$0xff]
      %v491 = vld [vmem:[%s352 + $0x38] sm:$0xff]
      %v492 = vld [vmem:[%s352 + $0x40] sm:$0xff]
      %v493 = vld [vmem:[%s352 + $0x48] sm:$0xff]
      %v494 = vld [vmem:[%s352 + $0x50] sm:$0xff]
      %v495 = vld [vmem:[%s352 + $0x58] sm:$0xff]
      %v496 = vld [vmem:[%s352 + $0x60] sm:$0xff]
      %v497 = vld [vmem:[%s352 + $0x68] sm:$0xff]
      %v498 = vld [vmem:[%s352 + $0x70] sm:$0xff]
      %v499 = vld [vmem:[%s352 + $0x78] sm:$0xff]
      %v500 = vld [vmem:[%s352 + $0x80] sm:$0xff]
      %v501 = vld [vmem:[%s352 + $0x88] sm:$0xff]
      %v502 = vld [vmem:[%s352 + $0x90] sm:$0xff]
      %v503 = vld [vmem:[%s352 + $0x98] sm:$0xff]
      %v504 = vadd.f32 %v464, %v484
      %v505 = vadd.f32 %v465, %v485
      %v506 = vadd.f32 %v466, %v486
      %v507 = vadd.f32 %v467, %v487
      %v508 = vadd.f32 %v468, %v488
      %v509 = vadd.f32 %v469, %v489
      %v510 = vadd.f32 %v470, %v490
      %v511 = vadd.f32 %v471, %v491
      %v512 = vadd.f32 %v472, %v492
      %v513 = vadd.f32 %v473, %v493
      %v514 = vadd.f32 %v474, %v494
      %v515 = vadd.f32 %v475, %v495
      %v516 = vadd.f32 %v476, %v496
      %v517 = vadd.f32 %v477, %v497
      %v518 = vadd.f32 %v478, %v498
      %v519 = vadd.f32 %v479, %v499
      %v520 = vadd.f32 %v480, %v500
      %v521 = vadd.f32 %v481, %v501
      %v522 = vadd.f32 %v482, %v502
      %v523 = vadd.f32 %v483, %v503
      %s524 = sld [smem:[#allocation2]]
      %vm525 = vcmp.gt.f32.partialorder %v504, 0.0
      %vm526 = vcmp.gt.f32.partialorder %v505, 0.0
      %vm527 = vcmp.gt.f32.partialorder %v506, 0.0
      %vm528 = vcmp.gt.f32.partialorder %v507, 0.0
      %vm529 = vcmp.gt.f32.partialorder %v508, 0.0
      %vm530 = vcmp.gt.f32.partialorder %v509, 0.0
      %vm531 = vcmp.gt.f32.partialorder %v510, 0.0
      %vm532 = vcmp.gt.f32.partialorder %v511, 0.0
      %vm533 = vcmp.gt.f32.partialorder %v512, 0.0
      %vm534 = vcmp.gt.f32.partialorder %v513, 0.0
      %vm535 = vcmp.gt.f32.partialorder %v514, 0.0
      %vm536 = vcmp.gt.f32.partialorder %v515, 0.0
      %vm537 = vcmp.gt.f32.partialorder %v516, 0.0
      %vm538 = vcmp.gt.f32.partialorder %v517, 0.0
      %vm539 = vcmp.gt.f32.partialorder %v518, 0.0
      %vm540 = vcmp.gt.f32.partialorder %v519, 0.0
      %vm541 = vcmp.gt.f32.partialorder %v520, 0.0
      %vm542 = vcmp.gt.f32.partialorder %v521, 0.0
      %vm543 = vcmp.gt.f32.partialorder %v522, 0.0
      %vm544 = vcmp.gt.f32.partialorder %v523, 0.0
      %v545 = vstv %s524
      %v546 = vmul.f32 %v545, %v504
      %v547 = vmul.f32 %v545, %v505
      %v548 = vmul.f32 %v545, %v506
      %v549 = vmul.f32 %v545, %v507
      %v550 = vmul.f32 %v545, %v508
      %v551 = vmul.f32 %v545, %v509
      %v552 = vmul.f32 %v545, %v510
      %v553 = vmul.f32 %v545, %v511
      %v554 = vmul.f32 %v545, %v512
      %v555 = vmul.f32 %v545, %v513
      %v556 = vmul.f32 %v545, %v514
      %v557 = vmul.f32 %v545, %v515
      %v558 = vmul.f32 %v545, %v516
      %v559 = vmul.f32 %v545, %v517
      %v560 = vmul.f32 %v545, %v518
      %v561 = vmul.f32 %v545, %v519
      %v562 = vmul.f32 %v545, %v520
      %v563 = vmul.f32 %v545, %v521
      %v564 = vmul.f32 %v545, %v522
      %v565 = vmul.f32 %v545, %v523
      %v566 = vsel %vm525, %v504, %v546
      %v567 = vsel %vm526, %v505, %v547
      %v568 = vsel %vm527, %v506, %v548
      %v569 = vsel %vm528, %v507, %v549
      %v570 = vsel %vm529, %v508, %v550
      %v571 = vsel %vm530, %v509, %v551
      %v572 = vsel %vm531, %v510, %v552
      %v573 = vsel %vm532, %v511, %v553
      %v574 = vsel %vm533, %v512, %v554
      %v575 = vsel %vm534, %v513, %v555
      %v576 = vsel %vm535, %v514, %v556
      %v577 = vsel %vm536, %v515, %v557
      %v578 = vsel %vm537, %v516, %v558
      %v579 = vsel %vm538, %v517, %v559
      %v580 = vsel %vm539, %v518, %v560
      %v581 = vsel %vm540, %v519, %v561
      %v582 = vsel %vm541, %v520, %v562
      %v583 = vsel %vm542, %v521, %v563
      %v584 = vsel %vm543, %v522, %v564
      %v585 = vsel %vm544, %v523, %v565
      %v586 = vpack.c.bf16 %v567, %v566
      %v587 = vpack.c.bf16 %v569, %v568
      %v588 = vpack.c.bf16 %v571, %v570
      %v589 = vpack.c.bf16 %v573, %v572
      %v590 = vpack.c.bf16 %v575, %v574
      %v591 = vpack.c.bf16 %v577, %v576
      %v592 = vpack.c.bf16 %v579, %v578
      %v593 = vpack.c.bf16 %v581, %v580
      %v594 = vpack.c.bf16 %v583, %v582
      %v595 = vpack.c.bf16 %v585, %v584
      %v606 = vunpack.c.l.b16 %v586
      %v607 = vunpack.c.h.b16 %v586
      %v608 = vunpack.c.l.b16 %v587
      %v609 = vunpack.c.h.b16 %v587
      %v610 = vunpack.c.l.b16 %v588
      %v611 = vunpack.c.h.b16 %v588
      %v612 = vunpack.c.l.b16 %v589
      %v613 = vunpack.c.h.b16 %v589
      %v614 = vunpack.c.l.b16 %v590
      %v615 = vunpack.c.h.b16 %v590
      %v616 = vunpack.c.l.b16 %v591
      %v617 = vunpack.c.h.b16 %v591
      %v618 = vunpack.c.l.b16 %v592
      %v619 = vunpack.c.h.b16 %v592
      %v620 = vunpack.c.l.b16 %v593
      %v621 = vunpack.c.h.b16 %v593
      %v622 = vunpack.c.l.b16 %v594
      %v623 = vunpack.c.h.b16 %v594
      %v624 = vunpack.c.l.b16 %v595
      %v625 = vunpack.c.h.b16 %v595
      %v626 = vpack.c.b16 %v606, %v606
      %v627 = vpack.c.b16 %v607, %v607
      %v628 = vpack.c.b16 %v608, %v608
      %v629 = vpack.c.b16 %v609, %v609
      %v630 = vpack.c.b16 %v610, %v610
      %v631 = vpack.c.b16 %v611, %v611
      %v632 = vpack.c.b16 %v612, %v612
      %v633 = vpack.c.b16 %v613, %v613
      %v634 = vpack.c.b16 %v614, %v614
      %v635 = vpack.c.b16 %v615, %v615
      %v636 = vpack.c.b16 %v616, %v616
      %v637 = vpack.c.b16 %v617, %v617
      %v638 = vpack.c.b16 %v618, %v618
      %v639 = vpack.c.b16 %v619, %v619
      %v640 = vpack.c.b16 %v620, %v620
      %v641 = vpack.c.b16 %v621, %v621
      %v642 = vpack.c.b16 %v622, %v622
      %v643 = vpack.c.b16 %v623, %v623
      %v644 = vpack.c.b16 %v624, %v624
      %v645 = vpack.c.b16 %v625, %v625
      %666 = vst [vmem:[%s362] sm:$0xf] %v626
      %667 = vst [vmem:[%s362 + $0x4] sm:$0xf] %v627
      %668 = vst [vmem:[%s362 + $0x8] sm:$0xf] %v628
      %669 = vst [vmem:[%s362 + $0xc] sm:$0xf] %v629
      %670 = vst [vmem:[%s362 + $0x10] sm:$0xf] %v630
      %671 = vst [vmem:[%s362 + $0x14] sm:$0xf] %v631
      %672 = vst [vmem:[%s362 + $0x18] sm:$0xf] %v632
      %673 = vst [vmem:[%s362 + $0x1c] sm:$0xf] %v633
      %674 = vst [vmem:[%s362 + $0x20] sm:$0xf] %v634
      %675 = vst [vmem:[%s362 + $0x24] sm:$0xf] %v635
      %676 = vst [vmem:[%s362 + $0x28] sm:$0xf] %v636
      %677 = vst [vmem:[%s362 + $0x2c] sm:$0xf] %v637
      %678 = vst [vmem:[%s362 + $0x30] sm:$0xf] %v638
      %679 = vst [vmem:[%s362 + $0x34] sm:$0xf] %v639
      %680 = vst [vmem:[%s362 + $0x38] sm:$0xf] %v640
      %681 = vst [vmem:[%s362 + $0x3c] sm:$0xf] %v641
      %682 = vst [vmem:[%s362 + $0x40] sm:$0xf] %v642
      %683 = vst [vmem:[%s362 + $0x44] sm:$0xf] %v643
      %684 = vst [vmem:[%s362 + $0x48] sm:$0xf] %v644
      %685 = vst [vmem:[%s362 + $0x4c] sm:$0xf] %v645
      %s686 = smul.u32 20, %s23
      %p687 = scmp.lt.s32.totalorder %s22, 1
      %s688 = scalar_select %p687, %s22, 1
      %p689 = scmp.lt.s32.totalorder %s686, 19
      %s690 = scalar_select %p689, %s686, 19
      %s691 = smul.addr %s688, 20
      %s692 = sadd.s32 %s690, %s691
      %s693 = smul.addr %s692, 4
      %s694 = scalar_lea.vmem %s6, %s693
      // Predicated region
      $region45: #{fusionnet_forward.10} parent=43 // pred_check
        %p695 = pneg %p203
      $region46: #{fusionnet_forward.10} parent=43 // pred_check_branch
        %697 = sbr.rel (%p695) target = $region48
      $region47: #{fusionnet_forward.10} parent=43 // pred_region
        %s698 = smul.u32 20, %s23
      $region48: #{fusionnet_forward.10} parent=43 // pred_fallthru
        _
    $region44: #{fusionnet_forward.10} parent=5 // pred_fallthru
      _
    %p699 = scmp.le.s32.totalorder 2, %s13
    // Predicated region
    $region49: #{fusionnet_forward.10} parent=5 // pred_check
      %p700 = pneg %p699
    $region50: #{fusionnet_forward.10} parent=5 // pred_check_branch
      %702 = sbr.rel (%p700) target = $region52
    $region51: #{fusionnet_forward.10} parent=5 // pred_region
      %s703 = ssub.s32 %s13, 2
      // Predicated region
      $region53: #{fusionnet_forward.10} parent=51 // pred_check
        %p704 = pneg %p209
      $region54: #{fusionnet_forward.10} parent=51 // pred_check_branch
        %706 = sbr.rel (%p704) target = $region56
      $region55: #{fusionnet_forward.10} parent=51 // pred_region
        %s707 = smul.u32 20, %s25
        %p708 = scmp.lt.s32.totalorder %s24, 1
        %s709 = scalar_select %p708, %s24, 1
        %p710 = scmp.lt.s32.totalorder %s707, 19
        %s711 = scalar_select %p710, %s707, 19
        %s712 = smul.addr %s709, 20
        %s713 = sadd.s32 %s711, %s712
        %s714 = smul.addr %s713, 4
        %s715 = scalar_lea.vmem %s6, %s714
      $region56: #{fusionnet_forward.10} parent=51 // pred_fallthru
        _
    $region52: #{fusionnet_forward.10} parent=5 // pred_fallthru
      _
  $region6: #{fusionnet_forward.10} parent=0 // loop_footer
    %s17 = sadd.s32 1, %s13
  $region7: #{fusionnet_forward.10} parent=0 // loop_footer_branch
    %12 = sbr.rel target = $region3
  $region8: #{fusionnet_forward.10} parent=0 // loop_exit
    _

// kernel: fusionnet_forward.9
$region0: #{fusionnet_forward.9}
  #allocation0 [shape = 'u32[]', space=smem, size = 0x4, offset = 0x4, fixed_abs, tag = 'smem constant byte address 0x4 - core index']
  #allocation1 [shape = 'u32[144,128]{1,0:T(1,128)}', space=vmem, size = 0x12000, scoped, tag = 'internal scratch']
  #allocation2 [shape = 'f32[1,1]{1,0:T(1,128)}', space=vmem, size = 0x200, scoped, tag = 'scratch operand']
  #allocation3 [shape = 'f32[1,1]{1,0:T(1,128)}', space=vmem, size = 0x200, scoped, tag = 'scratch operand']
  %s0 = inlined_call_operand.vmem [shape: bf16[2,160,128], index: 0, kind: input, shape index: {}]
  %s1 = inlined_call_operand.vmem [shape: bf16[128,128], index: 1, kind: input, shape index: {}]
  %s2 = inlined_call_operand.vmem [shape: f32[1,128], index: 2, kind: input, shape index: {}]
  %s3 = inlined_call_operand.vmem [shape: f32[2,160,128], index: 3, kind: output, shape index: {0}]
  %s4 = inlined_call_operand.vmem [shape: f32[2,1,1], index: 4, kind: output, shape index: {1}]
  %s5 = inlined_call_operand.vmem [shape: f32[2,1,1], index: 5, kind: output, shape index: {2}]
  %6 = xla_tuple %s3, %s4, %s5
  %s7 = sld [smem:[#allocation0]]
  $region69: #{fusionnet_forward.9} parent=0
    _
  %s9 = ssub.s32 1, %s7
  %s10 = scalar_select 0, %s9, %s7
  loop: start=0, step=1, limit=4
  $region2: #{fusionnet_forward.9} parent=0 // loop_pre_header
    _
  $region3: #{fusionnet_forward.9} parent=0 // loop_header
    %s12 = sphi 0, %s16
    %p13 = scmp.ge.s32.totalorder %s12, 4
    %s19 = sphi 0, %s31
    %s20 = sphi 0, %s27
    %s21 = sphi 0, %s19
    %s22 = sphi 0, %s20
    %s23 = sphi 0, %s21
    %s24 = sphi 0, %s22
    %s36 = sphi 0, %s38
    %s39 = sphi 0, %s36
    %s40 = sphi 0, %s39
    %s56 = sphi 0, %s40
    %s60 = sphi 0, %s60
    %s62 = sphi 0, %s60
    %s63 = sphi 0, %s62
    %s77 = sphi 0, %s63
    %s81 = sphi 0, %s81
    %s83 = sphi 0, %s81
    %s84 = sphi 0, %s83
    %s98 = sphi 0, %s84
    %s106 = sphi 0, %s108
    %s109 = sphi 0, %s106
    %s110 = sphi 0, %s109
    %s126 = sphi 0, %s110
    %s132 = sphi 0, %s134
    %s135 = sphi 0, %s132
    %s136 = sphi 0, %s135
    %s152 = sphi 0, %s136
    %s158 = sphi 0, %s160
    %s161 = sphi 0, %s158
    %s162 = sphi 0, %s161
    %s178 = sphi 0, %s162
  $region4: #{fusionnet_forward.9} parent=0 // loop_header_branch
    %15 = sbr.rel (%p13) target = $region8
  $region5: #{fusionnet_forward.9} parent=0 // loop_body
    %s17 = ssub.s32 %s12, 1
    %s18 = ssub.s32 %s12, 2
    %s25 = sadd.s32 1, %s20
    %p26 = scmp.ge.s32.totalorder %s25, 1
    %s27 = scalar_select %p26, 0, %s25
    %s28 = sadd.s32 1, %s19
    %s29 = scalar_select %p26, %s28, %s19
    %p30 = scmp.ge.s32.totalorder %s29, 2
    %s31 = scalar_select %p30, 0, %s29
    %s32 = ssub.s32 %s19, %s31
    %s33 = ssub.s32 %s20, %s27
    %s34 = sor.u32 %s32, %s33
    %p35 = scmp.eq.s32.totalorder %s34, 0
    %s37 = sadd.s32 %s36, 1
    %s38 = scalar_select %p35, %s36, %s37
    %p41 = pneg %p35
    %p42 = scmp.eq.s32.totalorder %s12, 1
    %p43 = por %p41, %p42
    %p44 = scmp.ne.s32.totalorder %s36, %s39
    %p45 = scmp.eq.s32.totalorder %s12, 0
    %p46 = por %p44, %p45
    %p47 = scmp.ne.s32.totalorder %s36, %s39
    %p48 = scmp.eq.s32.totalorder %s17, 1
    %p49 = por %p47, %p48
    %p50 = scmp.ne.s32.totalorder %s39, %s40
    %p51 = scmp.eq.s32.totalorder %s17, 0
    %p52 = por %p50, %p51
    %p53 = scmp.ne.s32.totalorder %s39, %s40
    %p54 = scmp.eq.s32.totalorder %s18, 1
    %p55 = por %p53, %p54
    %p57 = scmp.ne.s32.totalorder %s40, %s56
    %p58 = scmp.eq.s32.totalorder %s18, 0
    %p59 = por %p57, %p58
    %s61 = sadd.s32 %s60, 1
    %p64 = scmp.eq.s32.totalorder %s12, 1
    %p65 = scmp.ne.s32.totalorder %s60, %s62
    %p66 = scmp.eq.s32.totalorder %s12, 0
    %p67 = por %p65, %p66
    %p68 = scmp.ne.s32.totalorder %s60, %s62
    %p69 = scmp.eq.s32.totalorder %s17, 1
    %p70 = por %p68, %p69
    %p71 = scmp.ne.s32.totalorder %s62, %s63
    %p72 = scmp.eq.s32.totalorder %s17, 0
    %p73 = por %p71, %p72
    %p74 = scmp.ne.s32.totalorder %s62, %s63
    %p75 = scmp.eq.s32.totalorder %s18, 1
    %p76 = por %p74, %p75
    %p78 = scmp.ne.s32.totalorder %s63, %s77
    %p79 = scmp.eq.s32.totalorder %s18, 0
    %p80 = por %p78, %p79
    %s82 = sadd.s32 %s81, 1
    %p85 = scmp.eq.s32.totalorder %s12, 1
    %p86 = scmp.ne.s32.totalorder %s81, %s83
    %p87 = scmp.eq.s32.totalorder %s12, 0
    %p88 = por %p86, %p87
    %p89 = scmp.ne.s32.totalorder %s81, %s83
    %p90 = scmp.eq.s32.totalorder %s17, 1
    %p91 = por %p89, %p90
    %p92 = scmp.ne.s32.totalorder %s83, %s84
    %p93 = scmp.eq.s32.totalorder %s17, 0
    %p94 = por %p92, %p93
    %p95 = scmp.ne.s32.totalorder %s83, %s84
    %p96 = scmp.eq.s32.totalorder %s18, 1
    %p97 = por %p95, %p96
    %p99 = scmp.ne.s32.totalorder %s84, %s98
    %p100 = scmp.eq.s32.totalorder %s18, 0
    %p101 = por %p99, %p100
    %s102 = ssub.s32 %s19, %s31
    %s103 = ssub.s32 %s20, %s27
    %s104 = sor.u32 %s102, %s103
    %p105 = scmp.eq.s32.totalorder %s104, 0
    %s107 = sadd.s32 %s106, 1
    %s108 = scalar_select %p105, %s106, %s107
    %p111 = pneg %p105
    %p112 = scmp.eq.s32.totalorder %s12, 1
    %p113 = por %p111, %p112
    %p114 = scmp.ne.s32.totalorder %s106, %s109
    %p115 = scmp.eq.s32.totalorder %s12, 0
    %p116 = por %p114, %p115
    %p117 = scmp.ne.s32.totalorder %s106, %s109
    %p118 = scmp.eq.s32.totalorder %s17, 1
    %p119 = por %p117, %p118
    %p120 = scmp.ne.s32.totalorder %s109, %s110
    %p121 = scmp.eq.s32.totalorder %s17, 0
    %p122 = por %p120, %p121
    %p123 = scmp.ne.s32.totalorder %s109, %s110
    %p124 = scmp.eq.s32.totalorder %s18, 1
    %p125 = por %p123, %p124
    %p127 = scmp.ne.s32.totalorder %s110, %s126
    %p128 = scmp.eq.s32.totalorder %s18, 0
    %p129 = por %p127, %p128
    %s130 = ssub.s32 %s19, %s31
    %p131 = scmp.eq.s32.totalorder %s130, 0
    %s133 = sadd.s32 %s132, 1
    %s134 = scalar_select %p131, %s132, %s133
    %p137 = pneg %p131
    %p138 = scmp.eq.s32.totalorder %s12, 1
    %p139 = por %p137, %p138
    %p140 = scmp.ne.s32.totalorder %s132, %s135
    %p141 = scmp.eq.s32.totalorder %s12, 0
    %p142 = por %p140, %p141
    %p143 = scmp.ne.s32.totalorder %s132, %s135
    %p144 = scmp.eq.s32.totalorder %s17, 1
    %p145 = por %p143, %p144
    %p146 = scmp.ne.s32.totalorder %s135, %s136
    %p147 = scmp.eq.s32.totalorder %s17, 0
    %p148 = por %p146, %p147
    %p149 = scmp.ne.s32.totalorder %s135, %s136
    %p150 = scmp.eq.s32.totalorder %s18, 1
    %p151 = por %p149, %p150
    %p153 = scmp.ne.s32.totalorder %s136, %s152
    %p154 = scmp.eq.s32.totalorder %s18, 0
    %p155 = por %p153, %p154
    %s156 = ssub.s32 %s19, %s31
    %p157 = scmp.eq.s32.totalorder %s156, 0
    %s159 = sadd.s32 %s158, 1
    %s160 = scalar_select %p157, %s158, %s159
    %p163 = pneg %p157
    %p164 = scmp.eq.s32.totalorder %s12, 1
    %p165 = por %p163, %p164
    %p166 = scmp.ne.s32.totalorder %s158, %s161
    %p167 = scmp.eq.s32.totalorder %s12, 0
    %p168 = por %p166, %p167
    %p169 = scmp.ne.s32.totalorder %s158, %s161
    %p170 = scmp.eq.s32.totalorder %s17, 1
    %p171 = por %p169, %p170
    %p172 = scmp.ne.s32.totalorder %s161, %s162
    %p173 = scmp.eq.s32.totalorder %s17, 0
    %p174 = por %p172, %p173
    %p175 = scmp.ne.s32.totalorder %s161, %s162
    %p176 = scmp.eq.s32.totalorder %s18, 1
    %p177 = por %p175, %p176
    %p179 = scmp.ne.s32.totalorder %s162, %s178
    %p180 = scmp.eq.s32.totalorder %s18, 0
    %p181 = por %p179, %p180
    %p182 = scmp.le.s32.totalorder 1, %s12
    %p183 = scmp.lt.s32.totalorder %s12, 3
    %p184 = pnand %p182, %p183
    %p185 = pneg %p184
    // Predicated region
    $region9: #{fusionnet_forward.9} parent=5 // pred_check
      _
    $region10: #{fusionnet_forward.9} parent=5 // pred_check_branch
      %187 = sbr.rel (%p184) target = $region12
    $region11: #{fusionnet_forward.9} parent=5 // pred_region
      %s188 = ssub.s32 %s12, 1
      // Predicated region
      $region13: #{fusionnet_forward.9} parent=11 // pred_check
        %p189 = pneg %p73
      $region14: #{fusionnet_forward.9} parent=11 // pred_check_branch
        %191 = sbr.rel (%p189) target = $region16
      $region15: #{fusionnet_forward.9} parent=11 // pred_region
        _
      $region16: #{fusionnet_forward.9} parent=11 // pred_fallthru
        _
      // Predicated region
      $region17: #{fusionnet_forward.9} parent=11 // pred_check
        %p192 = pneg %p94
      $region18: #{fusionnet_forward.9} parent=11 // pred_check_branch
        %194 = sbr.rel (%p192) target = $region20
      $region19: #{fusionnet_forward.9} parent=11 // pred_region
        _
      $region20: #{fusionnet_forward.9} parent=11 // pred_fallthru
        _
    $region12: #{fusionnet_forward.9} parent=5 // pred_fallthru
      _
    %p195 = scmp.lt.s32.totalorder %s12, 2
    // Predicated region
    $region21: #{fusionnet_forward.9} parent=5 // pred_check
      %p196 = pneg %p195
    $region22: #{fusionnet_forward.9} parent=5 // pred_check_branch
      %198 = sbr.rel (%p196) target = $region24
    $region23: #{fusionnet_forward.9} parent=5 // pred_region
      // Predicated region
      $region25: #{fusionnet_forward.9} parent=23 // pred_check
        %p199 = pneg %p46
      $region26: #{fusionnet_forward.9} parent=23 // pred_check_branch
        %201 = sbr.rel (%p199) target = $region28
      $region27: #{fusionnet_forward.9} parent=23 // pred_region
        %s202 = smul.u32 20, %s20
        %p203 = scmp.lt.s32.totalorder %s19, 1
        %s204 = scalar_select %p203, %s19, 1
        %p205 = scmp.lt.s32.totalorder %s202, 19
        %s206 = scalar_select %p205, %s202, 19
        %s207 = smul.addr %s204, 20
        %s208 = sadd.s32 %s206, %s207
        %s209 = smul.addr %s208, 4
        %s210 = scalar_lea.vmem %s0, %s209
        %s211 = smul.u32 20, %s20
      $region28: #{fusionnet_forward.9} parent=23 // pred_fallthru
        _
    $region24: #{fusionnet_forward.9} parent=5 // pred_fallthru
      _
    %p212 = scmp.le.s32.totalorder 1, %s12
    %p213 = scmp.lt.s32.totalorder %s12, 3
    %p214 = pnand %p212, %p213
    %p215 = pneg %p214
    // Predicated region
    $region29: #{fusionnet_forward.9} parent=5 // pred_check
      _
    $region30: #{fusionnet_forward.9} parent=5 // pred_check_branch
      %217 = sbr.rel (%p214) target = $region32
    $region31: #{fusionnet_forward.9} parent=5 // pred_region
      %s218 = ssub.s32 %s12, 1
      %s219 = smul.u32 20, %s22
      %p220 = scmp.lt.s32.totalorder %s21, 1
      %s221 = scalar_select %p220, %s21, 1
      %p222 = scmp.lt.s32.totalorder %s219, 19
      %s223 = scalar_select %p222, %s219, 19
      %s224 = smul.addr %s221, 20
      %s225 = sadd.s32 %s223, %s224
      %s226 = smul.addr %s225, 4
      %s227 = scalar_lea.vmem %s0, %s226
      %p228 = pneg %p52
      %p229 = pneg %p49
      %p230 = pneg %p73
      %p231 = pneg %p70
      %p232 = pneg %p94
      %p233 = pneg %p91
      %p234 = pneg %p122
      %p235 = pneg %p119
      %s236 = smul.u32 20, %s22
      %p237 = scmp.lt.s32.totalorder %s21, 1
      %s238 = scalar_select %p237, %s21, 1
      %p239 = scmp.lt.s32.totalorder %s236, 19
      %s240 = scalar_select %p239, %s236, 19
      %s241 = smul.addr %s238, 20
      %s242 = sadd.s32 %s240, %s241
      %s243 = smul.addr %s242, 8
      %s244 = scalar_lea.vmem %s3, %s243
      %p245 = pneg %p148
      %p246 = pneg %p145
      %p247 = scmp.lt.s32.totalorder %s21, 1
      %s248 = scalar_select %p247, %s21, 1
      %s249 = scalar_lea.vmem %s4, %s248
      %p250 = pneg %p174
      %p251 = pneg %p171
      %p252 = scmp.lt.s32.totalorder %s21, 1
      %s253 = scalar_select %p252, %s21, 1
      %s254 = scalar_lea.vmem %s5, %s253
      %s255 = smul.u32 20, %s22
      %p256 = scmp.lt.s32.totalorder %s21, 1
      %s257 = scalar_select %p256, %s21, 1
      %p258 = scmp.lt.s32.totalorder %s255, 19
      %s259 = scalar_select %p258, %s255, 19
      %s260 = smul.addr %s257, 20
      %s261 = sadd.s32 %s259, %s260
      %s262 = smul.addr %s261, 4
      %s263 = scalar_lea.vmem %s0, %s262
      %s264 = smul.u32 20, %s22
      %s265 = smul.u32 20, %s22
      %p266 = scmp.lt.s32.totalorder %s21, 1
      %s267 = scalar_select %p266, %s21, 1
      %p268 = scmp.lt.s32.totalorder %s265, 19
      %s269 = scalar_select %p268, %s265, 19
      %s270 = smul.addr %s267, 20
      %s271 = sadd.s32 %s269, %s270
      %s272 = smul.addr %s271, 8
      %s273 = scalar_lea.vmem %s3, %s272
      %s274 = smul.u32 20, %s22
      %p275 = scmp.lt.s32.totalorder %s21, 1
      %s276 = scalar_select %p275, %s21, 1
      %s277 = scalar_lea.vmem %s4, %s276
      %p278 = scmp.lt.s32.totalorder %s21, 1
      %s279 = scalar_select %p278, %s21, 1
      %s280 = scalar_lea.vmem %s5, %s279
      %p282 = scmp.eq.s32.totalorder %s22, 0
      // Predicated region
      $region33: #{fusionnet_forward.9} parent=31 // pred_check
        %p283 = pneg %p282
      $region34: #{fusionnet_forward.9} parent=31 // pred_check_branch
        %285 = sbr.rel (%p283) target = $region36
      $region35: #{fusionnet_forward.9} parent=31 // pred_region
        %vm286 = vcmask 0
        %287 = vst.msk [vmem:[#allocation2] sm:$0x1] %vm286, 0.0
        %288 = vst.msk [vmem:[#allocation3] sm:$0x1] %vm286, 0.0
      $region36: #{fusionnet_forward.9} parent=31 // pred_fallthru
        _
      %v289 = vld [vmem:[%s263] sm:$0xf]
      %v290 = vld [vmem:[%s263 + $0x4] sm:$0xf]
      %v291 = vld [vmem:[%s263 + $0x8] sm:$0xf]
      %v292 = vld [vmem:[%s263 + $0xc] sm:$0xf]
      %v293 = vld [vmem:[%s263 + $0x10] sm:$0xf]
      %v294 = vld [vmem:[%s263 + $0x14] sm:$0xf]
      %v295 = vld [vmem:[%s263 + $0x18] sm:$0xf]
      %v296 = vld [vmem:[%s263 + $0x1c] sm:$0xf]
      %v297 = vld [vmem:[%s263 + $0x20] sm:$0xf]
      %v298 = vld [vmem:[%s263 + $0x24] sm:$0xf]
      %v299 = vld [vmem:[%s263 + $0x28] sm:$0xf]
      %v300 = vld [vmem:[%s263 + $0x2c] sm:$0xf]
      %v301 = vld [vmem:[%s263 + $0x30] sm:$0xf]
      %v302 = vld [vmem:[%s263 + $0x34] sm:$0xf]
      %v303 = vld [vmem:[%s263 + $0x38] sm:$0xf]
      %v304 = vld [vmem:[%s263 + $0x3c] sm:$0xf]
      %v305 = vld [vmem:[%s263 + $0x40] sm:$0xf]
      %v306 = vld [vmem:[%s263 + $0x44] sm:$0xf]
      %v307 = vld [vmem:[%s263 + $0x48] sm:$0xf]
      %v308 = vld [vmem:[%s263 + $0x4c] sm:$0xf]
      %v309 = vld [vmem:[%s1] sm:$0xf]
      %v310 = vld [vmem:[%s1 + $0x4] sm:$0xf]
      %v311 = vld [vmem:[%s1 + $0x8] sm:$0xf]
      %v312 = vld [vmem:[%s1 + $0xc] sm:$0xf]
      %v313 = vld [vmem:[%s1 + $0x10] sm:$0xf]
      %v314 = vld [vmem:[%s1 + $0x14] sm:$0xf]
      %v315 = vld [vmem:[%s1 + $0x18] sm:$0xf]
      %v316 = vld [vmem:[%s1 + $0x1c] sm:$0xf]
      %v317 = vld [vmem:[%s1 + $0x20] sm:$0xf]
      %v318 = vld [vmem:[%s1 + $0x24] sm:$0xf]
      %v319 = vld [vmem:[%s1 + $0x28] sm:$0xf]
      %v320 = vld [vmem:[%s1 + $0x2c] sm:$0xf]
      %v321 = vld [vmem:[%s1 + $0x30] sm:$0xf]
      %v322 = vld [vmem:[%s1 + $0x34] sm:$0xf]
      %v323 = vld [vmem:[%s1 + $0x38] sm:$0xf]
      %v324 = vld [vmem:[%s1 + $0x3c] sm:$0xf]
      %v325 = vld [vmem:[%s2] sm:$0x1]
      %v327 = vlaneseq
      %v328 = vshrl.u32 %v327, 7
      %v329 = vsub.s32 0, %v328
      %v330 = vrot.slane %v325, %v329
      %v352 = vunpack.c.l.b16 %v289
      %v353 = vunpack.c.l.b16 %v290
      %v354 = vunpack.c.l.b16 %v291
      %v355 = vunpack.c.l.b16 %v292
      %v356 = vunpack.c.l.b16 %v293
      %v357 = vunpack.c.l.b16 %v294
      %v358 = vunpack.c.l.b16 %v295
      %v359 = vunpack.c.l.b16 %v296
      %v360 = vunpack.c.l.b16 %v297
      %v361 = vunpack.c.l.b16 %v298
      %v362 = vunpack.c.l.b16 %v299
      %v363 = vunpack.c.l.b16 %v300
      %v364 = vunpack.c.l.b16 %v301
      %v365 = vunpack.c.l.b16 %v302
      %v366 = vunpack.c.l.b16 %v303
      %v367 = vunpack.c.l.b16 %v304
      %v368 = vunpack.c.l.b16 %v305
      %v369 = vunpack.c.l.b16 %v306
      %v370 = vunpack.c.l.b16 %v307
      %v371 = vunpack.c.l.b16 %v308
      %v372 = vpack.c.b16 %v353, %v352
      %v373 = vpack.c.b16 %v355, %v354
      %v374 = vpack.c.b16 %v357, %v356
      %v375 = vpack.c.b16 %v359, %v358
      %v376 = vpack.c.b16 %v361, %v360
      %v377 = vpack.c.b16 %v363, %v362
      %v378 = vpack.c.b16 %v365, %v364
      %v379 = vpack.c.b16 %v367, %v366
      %v380 = vpack.c.b16 %v369, %v368
      %v381 = vpack.c.b16 %v371, %v370
      %v408 = vunpack.c.l.b16 %v309
      %v409 = vunpack.c.l.b16 %v310
      %v410 = vunpack.c.l.b16 %v311
      %v411 = vunpack.c.l.b16 %v312
      %v412 = vunpack.c.l.b16 %v313
      %v413 = vunpack.c.l.b16 %v314
      %v414 = vunpack.c.l.b16 %v315
      %v415 = vunpack.c.l.b16 %v316
      %v416 = vunpack.c.l.b16 %v317
      %v417 = vunpack.c.l.b16 %v318
      %v418 = vunpack.c.l.b16 %v319
      %v419 = vunpack.c.l.b16 %v320
      %v420 = vunpack.c.l.b16 %v321
      %v421 = vunpack.c.l.b16 %v322
      %v422 = vunpack.c.l.b16 %v323
      %v423 = vunpack.c.l.b16 %v324
      %v424 = vpack.c.b16 %v409, %v408
      %v425 = vpack.c.b16 %v411, %v410
      %v426 = vpack.c.b16 %v413, %v412
      %v427 = vpack.c.b16 %v415, %v414
      %v428 = vpack.c.b16 %v417, %v416
      %v429 = vpack.c.b16 %v419, %v418
      %v430 = vpack.c.b16 %v421, %v420
      %v431 = vpack.c.b16 %v423, %v422
      %440 = vmatprep.subr.bf16.mxu0 0
      %441 = vmatpush1.bf16.msra.mxu0 %v431
      %442 = vmatprep.subr.bf16.mxu0 0
      %443 = vmatpush1.bf16.msra.mxu0 %v430
      %444 = vmatprep.subr.bf16.mxu0 0
      %445 = vmatpush1.bf16.msra.mxu0 %v429
      %446 = vmatprep.subr.bf16.mxu0 0
      %447 = vmatpush1.bf16.msra.mxu0 %v428
      %448 = vmatprep.subr.bf16.mxu0 0
      %449 = vmatpush1.bf16.msra.mxu0 %v427
      %450 = vmatprep.subr.bf16.mxu0 0
      %451 = vmatpush1.bf16.msra.mxu0 %v426
      %452 = vmatprep.subr.bf16.mxu0 0
      %453 = vmatpush1.bf16.msra.mxu0 %v425
      %454 = vmatprep.subr.bf16.mxu0 0
      %455 = vmatpush1.bf16.msra.mxu0 %v424
      %456 = vmatprep.subr.bf16.mxu0 0
      %457 = vmatpush2.bf16.msra.mxu0 0
      %458 = vmatprep.subr.bf16.mxu0 0
      %459 = vmatpush2.bf16.msra.mxu0 0
      %460 = vmatprep.subr.bf16.mxu0 0
      %461 = vmatpush2.bf16.msra.mxu0 0
      %462 = vmatprep.subr.bf16.mxu0 0
      %463 = vmatpush2.bf16.msra.mxu0 0
      %464 = vmatprep.subr.bf16.mxu0 0
      %465 = vmatpush2.bf16.msra.mxu0 0
      %466 = vmatprep.subr.bf16.mxu0 0
      %467 = vmatpush2.bf16.msra.mxu0 0
      %468 = vmatprep.subr.bf16.mxu0 0
      %469 = vmatpush2.bf16.msra.mxu0 0
      %470 = vmatprep.subr.bf16.mxu0 0
      %471 = vmatpush2.bf16.msra.mxu0 0
      %472 = vmatprep.mubr.bf16.mxu0 0
      %473 = vmatmul.mubr.bf16.gmra.mxu0 %v372
      %v474 = vpop.f32.mrf.mxu0
      %v475 = vadd.f32 %v330, %v474
      %v476 = vpop.f32.mrf.mxu0
      %v477 = vpop.f32.mrf.mxu0
      %v478 = vadd.f32 %v330, %v477
      %v479 = vpop.f32.mrf.mxu0
      %480 = vmatprep.mubr.bf16.mxu0 0
      %481 = vmatmul.mubr.bf16.gmra.mxu0 %v373
      %v482 = vpop.f32.mrf.mxu0
      %v483 = vadd.f32 %v330, %v482
      %v484 = vpop.f32.mrf.mxu0
      %v485 = vpop.f32.mrf.mxu0
      %v486 = vadd.f32 %v330, %v485
      %v487 = vpop.f32.mrf.mxu0
      %488 = vmatprep.mubr.bf16.mxu0 0
      %489 = vmatmul.mubr.bf16.gmra.mxu0 %v374
      %v490 = vpop.f32.mrf.mxu0
      %v491 = vadd.f32 %v330, %v490
      %v492 = vpop.f32.mrf.mxu0
      %v493 = vpop.f32.mrf.mxu0
      %v494 = vadd.f32 %v330, %v493
      %v495 = vpop.f32.mrf.mxu0
      %496 = vmatprep.mubr.bf16.mxu0 0
      %497 = vmatmul.mubr.bf16.gmra.mxu0 %v375
      %v498 = vpop.f32.mrf.mxu0
      %v499 = vadd.f32 %v330, %v498
      %v500 = vpop.f32.mrf.mxu0
      %v501 = vpop.f32.mrf.mxu0
      %v502 = vadd.f32 %v330, %v501
      %v503 = vpop.f32.mrf.mxu0
      %504 = vmatprep.mubr.bf16.mxu0 0
      %505 = vmatmul.mubr.bf16.gmra.mxu0 %v376
      %v506 = vpop.f32.mrf.mxu0
      %v507 = vadd.f32 %v330, %v506
      %v508 = vpop.f32.mrf.mxu0
      %v509 = vpop.f32.mrf.mxu0
      %v510 = vadd.f32 %v330, %v509
      %v511 = vpop.f32.mrf.mxu0
      %512 = vmatprep.mubr.bf16.mxu0 0
      %513 = vmatmul.mubr.bf16.gmra.mxu0 %v377
      %v514 = vpop.f32.mrf.mxu0
      %v515 = vadd.f32 %v330, %v514
      %v516 = vpop.f32.mrf.mxu0
      %v517 = vpop.f32.mrf.mxu0
      %v518 = vadd.f32 %v330, %v517
      %v519 = vpop.f32.mrf.mxu0
      %520 = vmatprep.mubr.bf16.mxu0 0
      %521 = vmatmul.mubr.bf16.gmra.mxu0 %v378
      %v522 = vpop.f32.mrf.mxu0
      %v523 = vadd.f32 %v330, %v522
      %v524 = vpop.f32.mrf.mxu0
      %v525 = vpop.f32.mrf.mxu0
      %v526 = vadd.f32 %v330, %v525
      %v527 = vpop.f32.mrf.mxu0
      %528 = vmatprep.mubr.bf16.mxu0 0
      %529 = vmatmul.mubr.bf16.gmra.mxu0 %v379
      %v530 = vpop.f32.mrf.mxu0
      %v531 = vadd.f32 %v330, %v530
      %v532 = vpop.f32.mrf.mxu0
      %v533 = vpop.f32.mrf.mxu0
      %v534 = vadd.f32 %v330, %v533
      %v535 = vpop.f32.mrf.mxu0
      %536 = vmatprep.mubr.bf16.mxu0 0
      %537 = vmatmul.mubr.bf16.gmra.mxu0 %v380
      %v538 = vpop.f32.mrf.mxu0
      %v539 = vadd.f32 %v330, %v538
      %v540 = vpop.f32.mrf.mxu0
      %v541 = vpop.f32.mrf.mxu0
      %v542 = vadd.f32 %v330, %v541
      %v543 = vpop.f32.mrf.mxu0
      %544 = vmatprep.mubr.bf16.mxu0 0
      %545 = vmatmul.mubr.bf16.gmra.mxu0 %v381
      %v546 = vpop.f32.mrf.mxu0
      %v547 = vadd.f32 %v330, %v546
      %v548 = vpop.f32.mrf.mxu0
      %v549 = vpop.f32.mrf.mxu0
      %v550 = vadd.f32 %v330, %v549
      %v551 = vpop.f32.mrf.mxu0
      %552 = vdwg.mxu0
      %v553 = vlaneseq
      %v554 = vshrl.u32 %v553, 7
      %v555 = vadd.s32 %v554, 8
      %v556 = vadd.s32 %v554, 16
      %v557 = vadd.s32 %v554, 24
      %v558 = vadd.s32 %v554, 32
      %v559 = vadd.s32 %v554, 40
      %v560 = vadd.s32 %v554, 48
      %v561 = vadd.s32 %v554, 56
      %v562 = vadd.s32 %v554, 64
      %v563 = vadd.s32 %v554, 72
      %v564 = vadd.s32 %v554, 80
      %v565 = vadd.s32 %v554, 88
      %v566 = vadd.s32 %v554, 96
      %v567 = vadd.s32 %v554, 104
      %v568 = vadd.s32 %v554, 112
      %v569 = vadd.s32 %v554, 120
      %v570 = vadd.s32 %v554, 128
      %v571 = vadd.s32 %v554, 136
      %v572 = vadd.s32 %v554, 144
      %v573 = vadd.s32 %v554, 152
      %s574 = smul.u32 %s22, 160
      %v575 = vstv %s574
      %v576 = vadd.s32 %v554, %v575
      %v577 = vadd.s32 %v555, %v575
      %v578 = vadd.s32 %v556, %v575
      %v579 = vadd.s32 %v557, %v575
      %v580 = vadd.s32 %v558, %v575
      %v581 = vadd.s32 %v559, %v575
      %v582 = vadd.s32 %v560, %v575
      %v583 = vadd.s32 %v561, %v575
      %v584 = vadd.s32 %v562, %v575
      %v585 = vadd.s32 %v563, %v575
      %v586 = vadd.s32 %v564, %v575
      %v587 = vadd.s32 %v565, %v575
      %v588 = vadd.s32 %v566, %v575
      %v589 = vadd.s32 %v567, %v575
      %v590 = vadd.s32 %v568, %v575
      %v591 = vadd.s32 %v569, %v575
      %v592 = vadd.s32 %v570, %v575
      %v593 = vadd.s32 %v571, %v575
      %v594 = vadd.s32 %v572, %v575
      %v595 = vadd.s32 %v573, %v575
      %vm596 = vcmp.lt.s32.totalorder %v576, 153
      %vm597 = vcmp.lt.s32.totalorder %v577, 153
      %vm598 = vcmp.lt.s32.totalorder %v578, 153
      %vm599 = vcmp.lt.s32.totalorder %v579, 153
      %vm600 = vcmp.lt.s32.totalorder %v580, 153
      %vm601 = vcmp.lt.s32.totalorder %v581, 153
      %vm602 = vcmp.lt.s32.totalorder %v582, 153
      %vm603 = vcmp.lt.s32.totalorder %v583, 153
      %vm604 = vcmp.lt.s32.totalorder %v584, 153
      %vm605 = vcmp.lt.s32.totalorder %v585, 153
      %vm606 = vcmp.lt.s32.totalorder %v586, 153
      %vm607 = vcmp.lt.s32.totalorder %v587, 153
      %vm608 = vcmp.lt.s32.totalorder %v588, 153
      %vm609 = vcmp.lt.s32.totalorder %v589, 153
      %vm610 = vcmp.lt.s32.totalorder %v590, 153
      %vm611 = vcmp.lt.s32.totalorder %v591, 153
      %vm612 = vcmp.lt.s32.totalorder %v592, 153
      %vm613 = vcmp.lt.s32.totalorder %v593, 153
      %vm614 = vcmp.lt.s32.totalorder %v594, 153
      %vm615 = vcmp.lt.s32.totalorder %v595, 153
      %v616 = vsel %vm596, %v475, 0.0
      %v617 = vsel %vm597, %v478, 0.0
      %v618 = vsel %vm598, %v483, 0.0
      %v619 = vsel %vm599, %v486, 0.0
      %v620 = vsel %vm600, %v491, 0.0
      %v621 = vsel %vm601, %v494, 0.0
      %v622 = vsel %vm602, %v499, 0.0
      %v623 = vsel %vm603, %v502, 0.0
      %v624 = vsel %vm604, %v507, 0.0
      %v625 = vsel %vm605, %v510, 0.0
      %v626 = vsel %vm606, %v515, 0.0
      %v627 = vsel %vm607, %v518, 0.0
      %v628 = vsel %vm608, %v523, 0.0
      %v629 = vsel %vm609, %v526, 0.0
      %v630 = vsel %vm610, %v531, 0.0
      %v631 = vsel %vm611, %v534, 0.0
      %v632 = vsel %vm612, %v539, 0.0
      %v633 = vsel %vm613, %v542, 0.0
      %v634 = vsel %vm614, %v547, 0.0
      %v635 = vsel %vm615, %v550, 0.0
      %v636 = vld [vmem:[#allocation2] sm:$0x1]
      %v637 = vadd.f32 %v616, %v617
      %v638 = vadd.f32 %v637, %v618
      %v639 = vadd.f32 %v638, %v619
      %v640 = vadd.f32 %v639, %v620
      %v641 = vadd.f32 %v640, %v621
      %v642 = vadd.f32 %v641, %v622
      %v643 = vadd.f32 %v642, %v623
      %v644 = vadd.f32 %v643, %v624
      %v645 = vadd.f32 %v644, %v625
      %v646 = vadd.f32 %v645, %v626
      %v647 = vadd.f32 %v646, %v627
      %v648 = vadd.f32 %v647, %v628
      %v649 = vadd.f32 %v648, %v629
      %v650 = vadd.f32 %v649, %v630
      %v651 = vadd.f32 %v650, %v631
      %v652 = vadd.f32 %v651, %v632
      %v653 = vadd.f32 %v652, %v633
      %v654 = vadd.f32 %v653, %v634
      %v655 = vadd.f32 %v654, %v635
      %656 = vadd.xlane.f32.xlu0 %v655
      %v657 = vpop.xlane.xlu0 %656
      %v658 = vrot.slane %v657, 4
      %v659 = vadd.f32 %v657, %v658
      %v660 = vrot.slane %v659, 2
      %v661 = vadd.f32 %v659, %v660
      %v662 = vrot.slane %v661, 1
      %v663 = vadd.f32 %v661, %v662
      %s664 = vtos %v663
      %v665 = vstv %s664
      %v666 = vadd.f32 %v636, %v665
      %vm667 = vcmask 0
      %668 = vst.msk [vmem:[#allocation2] sm:$0x1] %vm667, %v666
      %v669 = vld [vmem:[#allocation3] sm:$0x1]
      %v670 = vmul.f32 %v616, %v616
      %v671 = vmul.f32 %v617, %v617
      %v672 = vmul.f32 %v618, %v618
      %v673 = vmul.f32 %v619, %v619
      %v674 = vmul.f32 %v620, %v620
      %v675 = vmul.f32 %v621, %v621
      %v676 = vmul.f32 %v622, %v622
      %v677 = vmul.f32 %v623, %v623
      %v678 = vmul.f32 %v624, %v624
      %v679 = vmul.f32 %v625, %v625
      %v680 = vmul.f32 %v626, %v626
      %v681 = vmul.f32 %v627, %v627
      %v682 = vmul.f32 %v628, %v628
      %v683 = vmul.f32 %v629, %v629
      %v684 = vmul.f32 %v630, %v630
      %v685 = vmul.f32 %v631, %v631
      %v686 = vmul.f32 %v632, %v632
      %v687 = vmul.f32 %v633, %v633
      %v688 = vmul.f32 %v634, %v634
      %v689 = vmul.f32 %v635, %v635
      %v690 = vadd.f32 %v670, %v671
      %v691 = vadd.f32 %v690, %v672
      %v692 = vadd.f32 %v691, %v673
      %v693 = vadd.f32 %v692, %v674
      %v694 = vadd.f32 %v693, %v675
      %v695 = vadd.f32 %v694, %v676
      %v696 = vadd.f32 %v695, %v677
      %v697 = vadd.f32 %v696, %v678
      %v698 = vadd.f32 %v697, %v679
      %v699 = vadd.f32 %v698, %v680
      %v700 = vadd.f32 %v699, %v681
      %v701 = vadd.f32 %v700, %v682
      %v702 = vadd.f32 %v701, %v683
      %v703 = vadd.f32 %v702, %v684
      %v704 = vadd.f32 %v703, %v685
      %v705 = vadd.f32 %v704, %v686
      %v706 = vadd.f32 %v705, %v687
      %v707 = vadd.f32 %v706, %v688
      %v708 = vadd.f32 %v707, %v689
      %709 = vadd.xlane.f32.xlu0 %v708
      %v710 = vpop.xlane.xlu0 %709
      %v711 = vrot.slane %v710, 4
      %v712 = vadd.f32 %v710, %v711
      %v713 = vrot.slane %v712, 2
      %v714 = vadd.f32 %v712, %v713
      %v715 = vrot.slane %v714, 1
      %v716 = vadd.f32 %v714, %v715
      %s717 = vtos %v716
      %v718 = vstv %s717
      %v719 = vadd.f32 %v669, %v718
      %720 = vst.msk [vmem:[#allocation3] sm:$0x1] %vm667, %v719
      %721 = vst [vmem:[%s273] sm:$0xff] %v475
      %722 = vst [vmem:[%s273 + $0x8] sm:$0xff] %v478
      %723 = vst [vmem:[%s273 + $0x10] sm:$0xff] %v483
      %724 = vst [vmem:[%s273 + $0x18] sm:$0xff] %v486
      %725 = vst [vmem:[%s273 + $0x20] sm:$0xff] %v491
      %726 = vst [vmem:[%s273 + $0x28] sm:$0xff] %v494
      %727 = vst [vmem:[%s273 + $0x30] sm:$0xff] %v499
      %728 = vst [vmem:[%s273 + $0x38] sm:$0xff] %v502
      %729 = vst [vmem:[%s273 + $0x40] sm:$0xff] %v507
      %730 = vst [vmem:[%s273 + $0x48] sm:$0xff] %v510
      %731 = vst [vmem:[%s273 + $0x50] sm:$0xff] %v515
      %732 = vst [vmem:[%s273 + $0x58] sm:$0xff] %v518
      %733 = vst [vmem:[%s273 + $0x60] sm:$0xff] %v523
      %734 = vst [vmem:[%s273 + $0x68] sm:$0xff] %v526
      %735 = vst [vmem:[%s273 + $0x70] sm:$0xff] %v531
      %736 = vst [vmem:[%s273 + $0x78] sm:$0xff] %v534
      %737 = vst [vmem:[%s273 + $0x80] sm:$0xff] %v539
      %738 = vst [vmem:[%s273 + $0x88] sm:$0xff] %v542
      %739 = vst [vmem:[%s273 + $0x90] sm:$0xff] %v547
      %740 = vst [vmem:[%s273 + $0x98] sm:$0xff] %v550
      // Predicated region
      $region37: #{fusionnet_forward.9} parent=31 // pred_check
        %p741 = pneg %p282
      $region38: #{fusionnet_forward.9} parent=31 // pred_check_branch
        %743 = sbr.rel (%p741) target = $region40
      $region39: #{fusionnet_forward.9} parent=31 // pred_region
        %v744 = vld [vmem:[#allocation2] sm:$0x1]
        %v745 = vrcp.pop 19584.0
        %v746 = vmul.f32 %v744, %v745
        %v747 = vld [vmem:[#allocation3] sm:$0x1]
        %v748 = vmul.f32 %v747, %v745
        %v749 = vmul.f32 %v746, %v746
        %v750 = vsub.f32 %v748, %v749
        %751 = vst.msk [vmem:[%s277] sm:$0x1] %vm667, %v746
        %v752 = vadd.f32 %v750, 1e-05
        %v753 = vrsqrt.pop %v752
        %754 = vst.msk [vmem:[%s280] sm:$0x1] %vm667, %v753
      $region40: #{fusionnet_forward.9} parent=31 // pred_fallthru
        _
      %s755 = smul.u32 20, %s22
      %p756 = scmp.lt.s32.totalorder %s21, 1
      %s757 = scalar_select %p756, %s21, 1
      %p758 = scmp.lt.s32.totalorder %s755, 19
      %s759 = scalar_select %p758, %s755, 19
      %s760 = smul.addr %s757, 20
      %s761 = sadd.s32 %s759, %s760
      %s762 = smul.addr %s761, 8
      %s763 = scalar_lea.vmem %s3, %s762
      %p764 = scmp.lt.s32.totalorder %s21, 1
      %s765 = scalar_select %p764, %s21, 1
      %s766 = scalar_lea.vmem %s4, %s765
      %p767 = scmp.lt.s32.totalorder %s21, 1
      %s768 = scalar_select %p767, %s21, 1
      %s769 = scalar_lea.vmem %s5, %s768
      // Predicated region
      $region41: #{fusionnet_forward.9} parent=31 // pred_check
        %p770 = pneg %p119
      $region42: #{fusionnet_forward.9} parent=31 // pred_check_branch
        %772 = sbr.rel (%p770) target = $region44
      $region43: #{fusionnet_forward.9} parent=31 // pred_region
        %s773 = smul.u32 20, %s22
      $region44: #{fusionnet_forward.9} parent=31 // pred_fallthru
        _
      // Predicated region
      $region45: #{fusionnet_forward.9} parent=31 // pred_check
        %p774 = pneg %p145
      $region46: #{fusionnet_forward.9} parent=31 // pred_check_branch
        %776 = sbr.rel (%p774) target = $region48
      $region47: #{fusionnet_forward.9} parent=31 // pred_region
        _
      $region48: #{fusionnet_forward.9} parent=31 // pred_fallthru
        _
      // Predicated region
      $region49: #{fusionnet_forward.9} parent=31 // pred_check
        %p777 = pneg %p171
      $region50: #{fusionnet_forward.9} parent=31 // pred_check_branch
        %779 = sbr.rel (%p777) target = $region52
      $region51: #{fusionnet_forward.9} parent=31 // pred_region
        _
      $region52: #{fusionnet_forward.9} parent=31 // pred_fallthru
        _
    $region32: #{fusionnet_forward.9} parent=5 // pred_fallthru
      _
    %p780 = scmp.le.s32.totalorder 2, %s12
    // Predicated region
    $region53: #{fusionnet_forward.9} parent=5 // pred_check
      %p781 = pneg %p780
    $region54: #{fusionnet_forward.9} parent=5 // pred_check_branch
      %783 = sbr.rel (%p781) target = $region56
    $region55: #{fusionnet_forward.9} parent=5 // pred_region
      %s784 = ssub.s32 %s12, 2
      // Predicated region
      $region57: #{fusionnet_forward.9} parent=55 // pred_check
        %p785 = pneg %p125
      $region58: #{fusionnet_forward.9} parent=55 // pred_check_branch
        %787 = sbr.rel (%p785) target = $region60
      $region59: #{fusionnet_forward.9} parent=55 // pred_region
        %s788 = smul.u32 20, %s24
        %p789 = scmp.lt.s32.totalorder %s23, 1
        %s790 = scalar_select %p789, %s23, 1
        %p791 = scmp.lt.s32.totalorder %s788, 19
        %s792 = scalar_select %p791, %s788, 19
        %s793 = smul.addr %s790, 20
        %s794 = sadd.s32 %s792, %s793
        %s795 = smul.addr %s794, 8
        %s796 = scalar_lea.vmem %s3, %s795
      $region60: #{fusionnet_forward.9} parent=55 // pred_fallthru
        _
      // Predicated region
      $region61: #{fusionnet_forward.9} parent=55 // pred_check
        %p797 = pneg %p151
      $region62: #{fusionnet_forward.9} parent=55 // pred_check_branch
        %799 = sbr.rel (%p797) target = $region64
      $region63: #{fusionnet_forward.9} parent=55 // pred_region
        %p800 = scmp.lt.s32.totalorder %s23, 1
        %s801 = scalar_select %p800, %s23, 1
        %s802 = scalar_lea.vmem %s4, %s801
      $region64: #{fusionnet_forward.9} parent=55 // pred_fallthru
        _
      // Predicated region
      $region65: #{fusionnet_forward.9} parent=55 // pred_check
        %p803 = pneg %p177
      $region66: #{fusionnet_forward.9} parent=55 // pred_check_branch
        %805 = sbr.rel (%p803) target = $region68
      $region67: #{fusionnet_forward.9} parent=55 // pred_region
        %p806 = scmp.lt.s32.totalorder %s23, 1
        %s807 = scalar_select %p806, %s23, 1
        %s808 = scalar_lea.vmem %s5, %s807
      $region68: #{fusionnet_forward.9} parent=55 // pred_fallthru
        _
    $region56: #{fusionnet_forward.9} parent=5 // pred_fallthru
      _
  $region6: #{fusionnet_forward.9} parent=0 // loop_footer
    %s16 = sadd.s32 1, %s12
  $region7: #{fusionnet_forward.9} parent=0 // loop_footer_branch
    %11 = sbr.rel target = $region3
  $region8: #{fusionnet_forward.9} parent=0 // loop_exit
    _

// kernel: fusionnet_forward.11
$region0: #{fusionnet_forward.11}
  #allocation0 [shape = 'u32[]', space=smem, size = 0x4, offset = 0x4, fixed_abs, tag = 'smem constant byte address 0x4 - core index']
  #allocation1 [shape = 'u32[144,128]{1,0:T(1,128)}', space=vmem, size = 0x12000, scoped, tag = 'internal scratch']
  #allocation2 [shape = 'f32[1,1]{1,0:T(1,128)}', space=vmem, size = 0x200, scoped, tag = 'scratch operand']
  #allocation3 [shape = 'f32[1,1]{1,0:T(1,128)}', space=vmem, size = 0x200, scoped, tag = 'scratch operand']
  %s0 = inlined_call_operand.vmem [shape: bf16[2,160,128], index: 0, kind: input, shape index: {}]
  %s1 = inlined_call_operand.vmem [shape: bf16[2,160,128], index: 1, kind: input, shape index: {}]
  %s2 = inlined_call_operand.vmem [shape: bf16[128,128], index: 2, kind: input, shape index: {}]
  %s3 = inlined_call_operand.vmem [shape: bf16[128,128], index: 3, kind: input, shape index: {}]
  %s4 = inlined_call_operand.vmem [shape: f32[1,128], index: 4, kind: input, shape index: {}]
  %s5 = inlined_call_operand.vmem [shape: f32[2,160,128], index: 5, kind: output, shape index: {0}]
  %s6 = inlined_call_operand.vmem [shape: f32[2,1,1], index: 6, kind: output, shape index: {1}]
  %s7 = inlined_call_operand.vmem [shape: f32[2,1,1], index: 7, kind: output, shape index: {2}]
  %8 = xla_tuple %s5, %s6, %s7
  %s9 = sld [smem:[#allocation0]]
  $region77: #{fusionnet_forward.11} parent=0
    _
  %s11 = ssub.s32 1, %s9
  %s12 = scalar_select 0, %s11, %s9
  loop: start=0, step=1, limit=4
  $region2: #{fusionnet_forward.11} parent=0 // loop_pre_header
    _
  $region3: #{fusionnet_forward.11} parent=0 // loop_header
    %s14 = sphi 0, %s18
    %p15 = scmp.ge.s32.totalorder %s14, 4
    %s21 = sphi 0, %s33
    %s22 = sphi 0, %s29
    %s23 = sphi 0, %s21
    %s24 = sphi 0, %s22
    %s25 = sphi 0, %s23
    %s26 = sphi 0, %s24
    %s38 = sphi 0, %s40
    %s41 = sphi 0, %s38
    %s42 = sphi 0, %s41
    %s58 = sphi 0, %s42
    %s66 = sphi 0, %s68
    %s69 = sphi 0, %s66
    %s70 = sphi 0, %s69
    %s86 = sphi 0, %s70
    %s90 = sphi 0, %s90
    %s92 = sphi 0, %s90
    %s93 = sphi 0, %s92
    %s107 = sphi 0, %s93
    %s111 = sphi 0, %s111
    %s113 = sphi 0, %s111
    %s114 = sphi 0, %s113
    %s128 = sphi 0, %s114
    %s132 = sphi 0, %s132
    %s134 = sphi 0, %s132
    %s135 = sphi 0, %s134
    %s149 = sphi 0, %s135
    %s157 = sphi 0, %s159
    %s160 = sphi 0, %s157
    %s161 = sphi 0, %s160
    %s177 = sphi 0, %s161
    %s183 = sphi 0, %s185
    %s186 = sphi 0, %s183
    %s187 = sphi 0, %s186
    %s203 = sphi 0, %s187
    %s209 = sphi 0, %s211
    %s212 = sphi 0, %s209
    %s213 = sphi 0, %s212
    %s229 = sphi 0, %s213
  $region4: #{fusionnet_forward.11} parent=0 // loop_header_branch
    %17 = sbr.rel (%p15) target = $region8
  $region5: #{fusionnet_forward.11} parent=0 // loop_body
    %s19 = ssub.s32 %s14, 1
    %s20 = ssub.s32 %s14, 2
    %s27 = sadd.s32 1, %s22
    %p28 = scmp.ge.s32.totalorder %s27, 1
    %s29 = scalar_select %p28, 0, %s27
    %s30 = sadd.s32 1, %s21
    %s31 = scalar_select %p28, %s30, %s21
    %p32 = scmp.ge.s32.totalorder %s31, 2
    %s33 = scalar_select %p32, 0, %s31
    %s34 = ssub.s32 %s21, %s33
    %s35 = ssub.s32 %s22, %s29
    %s36 = sor.u32 %s34, %s35
    %p37 = scmp.eq.s32.totalorder %s36, 0
    %s39 = sadd.s32 %s38, 1
    %s40 = scalar_select %p37, %s38, %s39
    %p43 = pneg %p37
    %p44 = scmp.eq.s32.totalorder %s14, 1
    %p45 = por %p43, %p44
    %p46 = scmp.ne.s32.totalorder %s38, %s41
    %p47 = scmp.eq.s32.totalorder %s14, 0
    %p48 = por %p46, %p47
    %p49 = scmp.ne.s32.totalorder %s38, %s41
    %p50 = scmp.eq.s32.totalorder %s19, 1
    %p51 = por %p49, %p50
    %p52 = scmp.ne.s32.totalorder %s41, %s42
    %p53 = scmp.eq.s32.totalorder %s19, 0
    %p54 = por %p52, %p53
    %p55 = scmp.ne.s32.totalorder %s41, %s42
    %p56 = scmp.eq.s32.totalorder %s20, 1
    %p57 = por %p55, %p56
    %p59 = scmp.ne.s32.totalorder %s42, %s58
    %p60 = scmp.eq.s32.totalorder %s20, 0
    %p61 = por %p59, %p60
    %s62 = ssub.s32 %s21, %s33
    %s63 = ssub.s32 %s22, %s29
    %s64 = sor.u32 %s62, %s63
    %p65 = scmp.eq.s32.totalorder %s64, 0
    %s67 = sadd.s32 %s66, 1
    %s68 = scalar_select %p65, %s66, %s67
    %p71 = pneg %p65
    %p72 = scmp.eq.s32.totalorder %s14, 1
    %p73 = por %p71, %p72
    %p74 = scmp.ne.s32.totalorder %s66, %s69
    %p75 = scmp.eq.s32.totalorder %s14, 0
    %p76 = por %p74, %p75
    %p77 = scmp.ne.s32.totalorder %s66, %s69
    %p78 = scmp.eq.s32.totalorder %s19, 1
    %p79 = por %p77, %p78
    %p80 = scmp.ne.s32.totalorder %s69, %s70
    %p81 = scmp.eq.s32.totalorder %s19, 0
    %p82 = por %p80, %p81
    %p83 = scmp.ne.s32.totalorder %s69, %s70
    %p84 = scmp.eq.s32.totalorder %s20, 1
    %p85 = por %p83, %p84
    %p87 = scmp.ne.s32.totalorder %s70, %s86
    %p88 = scmp.eq.s32.totalorder %s20, 0
    %p89 = por %p87, %p88
    %s91 = sadd.s32 %s90, 1
    %p94 = scmp.eq.s32.totalorder %s14, 1
    %p95 = scmp.ne.s32.totalorder %s90, %s92
    %p96 = scmp.eq.s32.totalorder %s14, 0
    %p97 = por %p95, %p96
    %p98 = scmp.ne.s32.totalorder %s90, %s92
    %p99 = scmp.eq.s32.totalorder %s19, 1
    %p100 = por %p98, %p99
    %p101 = scmp.ne.s32.totalorder %s92, %s93
    %p102 = scmp.eq.s32.totalorder %s19, 0
    %p103 = por %p101, %p102
    %p104 = scmp.ne.s32.totalorder %s92, %s93
    %p105 = scmp.eq.s32.totalorder %s20, 1
    %p106 = por %p104, %p105
    %p108 = scmp.ne.s32.totalorder %s93, %s107
    %p109 = scmp.eq.s32.totalorder %s20, 0
    %p110 = por %p108, %p109
    %s112 = sadd.s32 %s111, 1
    %p115 = scmp.eq.s32.totalorder %s14, 1
    %p116 = scmp.ne.s32.totalorder %s111, %s113
    %p117 = scmp.eq.s32.totalorder %s14, 0
    %p118 = por %p116, %p117
    %p119 = scmp.ne.s32.totalorder %s111, %s113
    %p120 = scmp.eq.s32.totalorder %s19, 1
    %p121 = por %p119, %p120
    %p122 = scmp.ne.s32.totalorder %s113, %s114
    %p123 = scmp.eq.s32.totalorder %s19, 0
    %p124 = por %p122, %p123
    %p125 = scmp.ne.s32.totalorder %s113, %s114
    %p126 = scmp.eq.s32.totalorder %s20, 1
    %p127 = por %p125, %p126
    %p129 = scmp.ne.s32.totalorder %s114, %s128
    %p130 = scmp.eq.s32.totalorder %s20, 0
    %p131 = por %p129, %p130
    %s133 = sadd.s32 %s132, 1
    %p136 = scmp.eq.s32.totalorder %s14, 1
    %p137 = scmp.ne.s32.totalorder %s132, %s134
    %p138 = scmp.eq.s32.totalorder %s14, 0
    %p139 = por %p137, %p138
    %p140 = scmp.ne.s32.totalorder %s132, %s134
    %p141 = scmp.eq.s32.totalorder %s19, 1
    %p142 = por %p140, %p141
    %p143 = scmp.ne.s32.totalorder %s134, %s135
    %p144 = scmp.eq.s32.totalorder %s19, 0
    %p145 = por %p143, %p144
    %p146 = scmp.ne.s32.totalorder %s134, %s135
    %p147 = scmp.eq.s32.totalorder %s20, 1
    %p148 = por %p146, %p147
    %p150 = scmp.ne.s32.totalorder %s135, %s149
    %p151 = scmp.eq.s32.totalorder %s20, 0
    %p152 = por %p150, %p151
    %s153 = ssub.s32 %s21, %s33
    %s154 = ssub.s32 %s22, %s29
    %s155 = sor.u32 %s153, %s154
    %p156 = scmp.eq.s32.totalorder %s155, 0
    %s158 = sadd.s32 %s157, 1
    %s159 = scalar_select %p156, %s157, %s158
    %p162 = pneg %p156
    %p163 = scmp.eq.s32.totalorder %s14, 1
    %p164 = por %p162, %p163
    %p165 = scmp.ne.s32.totalorder %s157, %s160
    %p166 = scmp.eq.s32.totalorder %s14, 0
    %p167 = por %p165, %p166
    %p168 = scmp.ne.s32.totalorder %s157, %s160
    %p169 = scmp.eq.s32.totalorder %s19, 1
    %p170 = por %p168, %p169
    %p171 = scmp.ne.s32.totalorder %s160, %s161
    %p172 = scmp.eq.s32.totalorder %s19, 0
    %p173 = por %p171, %p172
    %p174 = scmp.ne.s32.totalorder %s160, %s161
    %p175 = scmp.eq.s32.totalorder %s20, 1
    %p176 = por %p174, %p175
    %p178 = scmp.ne.s32.totalorder %s161, %s177
    %p179 = scmp.eq.s32.totalorder %s20, 0
    %p180 = por %p178, %p179
    %s181 = ssub.s32 %s21, %s33
    %p182 = scmp.eq.s32.totalorder %s181, 0
    %s184 = sadd.s32 %s183, 1
    %s185 = scalar_select %p182, %s183, %s184
    %p188 = pneg %p182
    %p189 = scmp.eq.s32.totalorder %s14, 1
    %p190 = por %p188, %p189
    %p191 = scmp.ne.s32.totalorder %s183, %s186
    %p192 = scmp.eq.s32.totalorder %s14, 0
    %p193 = por %p191, %p192
    %p194 = scmp.ne.s32.totalorder %s183, %s186
    %p195 = scmp.eq.s32.totalorder %s19, 1
    %p196 = por %p194, %p195
    %p197 = scmp.ne.s32.totalorder %s186, %s187
    %p198 = scmp.eq.s32.totalorder %s19, 0
    %p199 = por %p197, %p198
    %p200 = scmp.ne.s32.totalorder %s186, %s187
    %p201 = scmp.eq.s32.totalorder %s20, 1
    %p202 = por %p200, %p201
    %p204 = scmp.ne.s32.totalorder %s187, %s203
    %p205 = scmp.eq.s32.totalorder %s20, 0
    %p206 = por %p204, %p205
    %s207 = ssub.s32 %s21, %s33
    %p208 = scmp.eq.s32.totalorder %s207, 0
    %s210 = sadd.s32 %s209, 1
    %s211 = scalar_select %p208, %s209, %s210
    %p214 = pneg %p208
    %p215 = scmp.eq.s32.totalorder %s14, 1
    %p216 = por %p214, %p215
    %p217 = scmp.ne.s32.totalorder %s209, %s212
    %p218 = scmp.eq.s32.totalorder %s14, 0
    %p219 = por %p217, %p218
    %p220 = scmp.ne.s32.totalorder %s209, %s212
    %p221 = scmp.eq.s32.totalorder %s19, 1
    %p222 = por %p220, %p221
    %p223 = scmp.ne.s32.totalorder %s212, %s213
    %p224 = scmp.eq.s32.totalorder %s19, 0
    %p225 = por %p223, %p224
    %p226 = scmp.ne.s32.totalorder %s212, %s213
    %p227 = scmp.eq.s32.totalorder %s20, 1
    %p228 = por %p226, %p227
    %p230 = scmp.ne.s32.totalorder %s213, %s229
    %p231 = scmp.eq.s32.totalorder %s20, 0
    %p232 = por %p230, %p231
    %p233 = scmp.le.s32.totalorder 1, %s14
    %p234 = scmp.lt.s32.totalorder %s14, 3
    %p235 = pnand %p233, %p234
    %p236 = pneg %p235
    // Predicated region
    $region9: #{fusionnet_forward.11} parent=5 // pred_check
      _
    $region10: #{fusionnet_forward.11} parent=5 // pred_check_branch
      %238 = sbr.rel (%p235) target = $region12
    $region11: #{fusionnet_forward.11} parent=5 // pred_region
      %s239 = ssub.s32 %s14, 1
      // Predicated region
      $region13: #{fusionnet_forward.11} parent=11 // pred_check
        %p240 = pneg %p103
      $region14: #{fusionnet_forward.11} parent=11 // pred_check_branch
        %242 = sbr.rel (%p240) target = $region16
      $region15: #{fusionnet_forward.11} parent=11 // pred_region
        _
      $region16: #{fusionnet_forward.11} parent=11 // pred_fallthru
        _
      // Predicated region
      $region17: #{fusionnet_forward.11} parent=11 // pred_check
        %p243 = pneg %p124
      $region18: #{fusionnet_forward.11} parent=11 // pred_check_branch
        %245 = sbr.rel (%p243) target = $region20
      $region19: #{fusionnet_forward.11} parent=11 // pred_region
        _
      $region20: #{fusionnet_forward.11} parent=11 // pred_fallthru
        _
      // Predicated region
      $region21: #{fusionnet_forward.11} parent=11 // pred_check
        %p246 = pneg %p145
      $region22: #{fusionnet_forward.11} parent=11 // pred_check_branch
        %248 = sbr.rel (%p246) target = $region24
      $region23: #{fusionnet_forward.11} parent=11 // pred_region
        _
      $region24: #{fusionnet_forward.11} parent=11 // pred_fallthru
        _
    $region12: #{fusionnet_forward.11} parent=5 // pred_fallthru
      _
    %p249 = scmp.lt.s32.totalorder %s14, 2
    // Predicated region
    $region25: #{fusionnet_forward.11} parent=5 // pred_check
      %p250 = pneg %p249
    $region26: #{fusionnet_forward.11} parent=5 // pred_check_branch
      %252 = sbr.rel (%p250) target = $region28
    $region27: #{fusionnet_forward.11} parent=5 // pred_region
      // Predicated region
      $region29: #{fusionnet_forward.11} parent=27 // pred_check
        %p253 = pneg %p48
      $region30: #{fusionnet_forward.11} parent=27 // pred_check_branch
        %255 = sbr.rel (%p253) target = $region32
      $region31: #{fusionnet_forward.11} parent=27 // pred_region
        %s256 = smul.u32 20, %s22
        %p257 = scmp.lt.s32.totalorder %s21, 1
        %s258 = scalar_select %p257, %s21, 1
        %p259 = scmp.lt.s32.totalorder %s256, 19
        %s260 = scalar_select %p259, %s256, 19
        %s261 = smul.addr %s258, 20
        %s262 = sadd.s32 %s260, %s261
        %s263 = smul.addr %s262, 4
        %s264 = scalar_lea.vmem %s0, %s263
        %s265 = smul.u32 20, %s22
      $region32: #{fusionnet_forward.11} parent=27 // pred_fallthru
        _
      // Predicated region
      $region33: #{fusionnet_forward.11} parent=27 // pred_check
        %p266 = pneg %p76
      $region34: #{fusionnet_forward.11} parent=27 // pred_check_branch
        %268 = sbr.rel (%p266) target = $region36
      $region35: #{fusionnet_forward.11} parent=27 // pred_region
        %s269 = smul.u32 20, %s22
        %p270 = scmp.lt.s32.totalorder %s21, 1
        %s271 = scalar_select %p270, %s21, 1
        %p272 = scmp.lt.s32.totalorder %s269, 19
        %s273 = scalar_select %p272, %s269, 19
        %s274 = smul.addr %s271, 20
        %s275 = sadd.s32 %s273, %s274
        %s276 = smul.addr %s275, 4
        %s277 = scalar_lea.vmem %s1, %s276
        %s278 = smul.u32 20, %s22
      $region36: #{fusionnet_forward.11} parent=27 // pred_fallthru
        _
    $region28: #{fusionnet_forward.11} parent=5 // pred_fallthru
      _
    %p279 = scmp.le.s32.totalorder 1, %s14
    %p280 = scmp.lt.s32.totalorder %s14, 3
    %p281 = pnand %p279, %p280
    %p282 = pneg %p281
    // Predicated region
    $region37: #{fusionnet_forward.11} parent=5 // pred_check
      _
    $region38: #{fusionnet_forward.11} parent=5 // pred_check_branch
      %284 = sbr.rel (%p281) target = $region40
    $region39: #{fusionnet_forward.11} parent=5 // pred_region
      %s285 = ssub.s32 %s14, 1
      %s286 = smul.u32 20, %s24
      %p287 = scmp.lt.s32.totalorder %s23, 1
      %s288 = scalar_select %p287, %s23, 1
      %p289 = scmp.lt.s32.totalorder %s286, 19
      %s290 = scalar_select %p289, %s286, 19
      %s291 = smul.addr %s288, 20
      %s292 = sadd.s32 %s290, %s291
      %s293 = smul.addr %s292, 4
      %s294 = scalar_lea.vmem %s0, %s293
      %p295 = pneg %p54
      %p296 = pneg %p51
      %s297 = smul.u32 20, %s24
      %p298 = scmp.lt.s32.totalorder %s23, 1
      %s299 = scalar_select %p298, %s23, 1
      %p300 = scmp.lt.s32.totalorder %s297, 19
      %s301 = scalar_select %p300, %s297, 19
      %s302 = smul.addr %s299, 20
      %s303 = sadd.s32 %s301, %s302
      %s304 = smul.addr %s303, 4
      %s305 = scalar_lea.vmem %s1, %s304
      %p306 = pneg %p82
      %p307 = pneg %p79
      %p308 = pneg %p103
      %p309 = pneg %p100
      %p310 = pneg %p124
      %p311 = pneg %p121
      %p312 = pneg %p145
      %p313 = pneg %p142
      %p314 = pneg %p173
      %p315 = pneg %p170
      %s316 = smul.u32 20, %s24
      %p317 = scmp.lt.s32.totalorder %s23, 1
      %s318 = scalar_select %p317, %s23, 1
      %p319 = scmp.lt.s32.totalorder %s316, 19
      %s320 = scalar_select %p319, %s316, 19
      %s321 = smul.addr %s318, 20
      %s322 = sadd.s32 %s320, %s321
      %s323 = smul.addr %s322, 8
      %s324 = scalar_lea.vmem %s5, %s323
      %p325 = pneg %p199
      %p326 = pneg %p196
      %p327 = scmp.lt.s32.totalorder %s23, 1
      %s328 = scalar_select %p327, %s23, 1
      %s329 = scalar_lea.vmem %s6, %s328
      %p330 = pneg %p225
      %p331 = pneg %p222
      %p332 = scmp.lt.s32.totalorder %s23, 1
      %s333 = scalar_select %p332, %s23, 1
      %s334 = scalar_lea.vmem %s7, %s333
      %s335 = smul.u32 20, %s24
      %p336 = scmp.lt.s32.totalorder %s23, 1
      %s337 = scalar_select %p336, %s23, 1
      %p338 = scmp.lt.s32.totalorder %s335, 19
      %s339 = scalar_select %p338, %s335, 19
      %s340 = smul.addr %s337, 20
      %s341 = sadd.s32 %s339, %s340
      %s342 = smul.addr %s341, 4
      %s343 = scalar_lea.vmem %s0, %s342
      %s344 = smul.u32 20, %s24
      %s345 = smul.u32 20, %s24
      %p346 = scmp.lt.s32.totalorder %s23, 1
      %s347 = scalar_select %p346, %s23, 1
      %p348 = scmp.lt.s32.totalorder %s345, 19
      %s349 = scalar_select %p348, %s345, 19
      %s350 = smul.addr %s347, 20
      %s351 = sadd.s32 %s349, %s350
      %s352 = smul.addr %s351, 4
      %s353 = scalar_lea.vmem %s1, %s352
      %s354 = smul.u32 20, %s24
      %s355 = smul.u32 20, %s24
      %p356 = scmp.lt.s32.totalorder %s23, 1
      %s357 = scalar_select %p356, %s23, 1
      %p358 = scmp.lt.s32.totalorder %s355, 19
      %s359 = scalar_select %p358, %s355, 19
      %s360 = smul.addr %s357, 20
      %s361 = sadd.s32 %s359, %s360
      %s362 = smul.addr %s361, 8
      %s363 = scalar_lea.vmem %s5, %s362
      %s364 = smul.u32 20, %s24
      %p365 = scmp.lt.s32.totalorder %s23, 1
      %s366 = scalar_select %p365, %s23, 1
      %s367 = scalar_lea.vmem %s6, %s366
      %p368 = scmp.lt.s32.totalorder %s23, 1
      %s369 = scalar_select %p368, %s23, 1
      %s370 = scalar_lea.vmem %s7, %s369
      %p372 = scmp.eq.s32.totalorder %s24, 0
      // Predicated region
      $region41: #{fusionnet_forward.11} parent=39 // pred_check
        %p373 = pneg %p372
      $region42: #{fusionnet_forward.11} parent=39 // pred_check_branch
        %375 = sbr.rel (%p373) target = $region44
      $region43: #{fusionnet_forward.11} parent=39 // pred_region
        %vm376 = vcmask 0
        %377 = vst.msk [vmem:[#allocation2] sm:$0x1] %vm376, 0.0
        %378 = vst.msk [vmem:[#allocation3] sm:$0x1] %vm376, 0.0
      $region44: #{fusionnet_forward.11} parent=39 // pred_fallthru
        _
      %v379 = vld [vmem:[%s343] sm:$0xf]
      %v380 = vld [vmem:[%s343 + $0x4] sm:$0xf]
      %v381 = vld [vmem:[%s343 + $0x8] sm:$0xf]
      %v382 = vld [vmem:[%s343 + $0xc] sm:$0xf]
      %v383 = vld [vmem:[%s343 + $0x10] sm:$0xf]
      %v384 = vld [vmem:[%s343 + $0x14] sm:$0xf]
      %v385 = vld [vmem:[%s343 + $0x18] sm:$0xf]
      %v386 = vld [vmem:[%s343 + $0x1c] sm:$0xf]
      %v387 = vld [vmem:[%s343 + $0x20] sm:$0xf]
      %v388 = vld [vmem:[%s343 + $0x24] sm:$0xf]
      %v389 = vld [vmem:[%s343 + $0x28] sm:$0xf]
      %v390 = vld [vmem:[%s343 + $0x2c] sm:$0xf]
      %v391 = vld [vmem:[%s343 + $0x30] sm:$0xf]
      %v392 = vld [vmem:[%s343 + $0x34] sm:$0xf]
      %v393 = vld [vmem:[%s343 + $0x38] sm:$0xf]
      %v394 = vld [vmem:[%s343 + $0x3c] sm:$0xf]
      %v395 = vld [vmem:[%s343 + $0x40] sm:$0xf]
      %v396 = vld [vmem:[%s343 + $0x44] sm:$0xf]
      %v397 = vld [vmem:[%s343 + $0x48] sm:$0xf]
      %v398 = vld [vmem:[%s343 + $0x4c] sm:$0xf]
      %v399 = vld [vmem:[%s2] sm:$0xf]
      %v400 = vld [vmem:[%s2 + $0x4] sm:$0xf]
      %v401 = vld [vmem:[%s2 + $0x8] sm:$0xf]
      %v402 = vld [vmem:[%s2 + $0xc] sm:$0xf]
      %v403 = vld [vmem:[%s2 + $0x10] sm:$0xf]
      %v404 = vld [vmem:[%s2 + $0x14] sm:$0xf]
      %v405 = vld [vmem:[%s2 + $0x18] sm:$0xf]
      %v406 = vld [vmem:[%s2 + $0x1c] sm:$0xf]
      %v407 = vld [vmem:[%s2 + $0x20] sm:$0xf]
      %v408 = vld [vmem:[%s2 + $0x24] sm:$0xf]
      %v409 = vld [vmem:[%s2 + $0x28] sm:$0xf]
      %v410 = vld [vmem:[%s2 + $0x2c] sm:$0xf]
      %v411 = vld [vmem:[%s2 + $0x30] sm:$0xf]
      %v412 = vld [vmem:[%s2 + $0x34] sm:$0xf]
      %v413 = vld [vmem:[%s2 + $0x38] sm:$0xf]
      %v414 = vld [vmem:[%s2 + $0x3c] sm:$0xf]
      %v415 = vld [vmem:[%s353] sm:$0xf]
      %v416 = vld [vmem:[%s353 + $0x4] sm:$0xf]
      %v417 = vld [vmem:[%s353 + $0x8] sm:$0xf]
      %v418 = vld [vmem:[%s353 + $0xc] sm:$0xf]
      %v419 = vld [vmem:[%s353 + $0x10] sm:$0xf]
      %v420 = vld [vmem:[%s353 + $0x14] sm:$0xf]
      %v421 = vld [vmem:[%s353 + $0x18] sm:$0xf]
      %v422 = vld [vmem:[%s353 + $0x1c] sm:$0xf]
      %v423 = vld [vmem:[%s353 + $0x20] sm:$0xf]
      %v424 = vld [vmem:[%s353 + $0x24] sm:$0xf]
      %v425 = vld [vmem:[%s353 + $0x28] sm:$0xf]
      %v426 = vld [vmem:[%s353 + $0x2c] sm:$0xf]
      %v427 = vld [vmem:[%s353 + $0x30] sm:$0xf]
      %v428 = vld [vmem:[%s353 + $0x34] sm:$0xf]
      %v429 = vld [vmem:[%s353 + $0x38] sm:$0xf]
      %v430 = vld [vmem:[%s353 + $0x3c] sm:$0xf]
      %v431 = vld [vmem:[%s353 + $0x40] sm:$0xf]
      %v432 = vld [vmem:[%s353 + $0x44] sm:$0xf]
      %v433 = vld [vmem:[%s353 + $0x48] sm:$0xf]
      %v434 = vld [vmem:[%s353 + $0x4c] sm:$0xf]
      %v435 = vld [vmem:[%s3] sm:$0xf]
      %v436 = vld [vmem:[%s3 + $0x4] sm:$0xf]
      %v437 = vld [vmem:[%s3 + $0x8] sm:$0xf]
      %v438 = vld [vmem:[%s3 + $0xc] sm:$0xf]
      %v439 = vld [vmem:[%s3 + $0x10] sm:$0xf]
      %v440 = vld [vmem:[%s3 + $0x14] sm:$0xf]
      %v441 = vld [vmem:[%s3 + $0x18] sm:$0xf]
      %v442 = vld [vmem:[%s3 + $0x1c] sm:$0xf]
      %v443 = vld [vmem:[%s3 + $0x20] sm:$0xf]
      %v444 = vld [vmem:[%s3 + $0x24] sm:$0xf]
      %v445 = vld [vmem:[%s3 + $0x28] sm:$0xf]
      %v446 = vld [vmem:[%s3 + $0x2c] sm:$0xf]
      %v447 = vld [vmem:[%s3 + $0x30] sm:$0xf]
      %v448 = vld [vmem:[%s3 + $0x34] sm:$0xf]
      %v449 = vld [vmem:[%s3 + $0x38] sm:$0xf]
      %v450 = vld [vmem:[%s3 + $0x3c] sm:$0xf]
      %v471 = vunpack.c.l.b16 %v415
      %v472 = vunpack.c.l.b16 %v416
      %v473 = vunpack.c.l.b16 %v417
      %v474 = vunpack.c.l.b16 %v418
      %v475 = vunpack.c.l.b16 %v419
      %v476 = vunpack.c.l.b16 %v420
      %v477 = vunpack.c.l.b16 %v421
      %v478 = vunpack.c.l.b16 %v422
      %v479 = vunpack.c.l.b16 %v423
      %v480 = vunpack.c.l.b16 %v424
      %v481 = vunpack.c.l.b16 %v425
      %v482 = vunpack.c.l.b16 %v426
      %v483 = vunpack.c.l.b16 %v427
      %v484 = vunpack.c.l.b16 %v428
      %v485 = vunpack.c.l.b16 %v429
      %v486 = vunpack.c.l.b16 %v430
      %v487 = vunpack.c.l.b16 %v431
      %v488 = vunpack.c.l.b16 %v432
      %v489 = vunpack.c.l.b16 %v433
      %v490 = vunpack.c.l.b16 %v434
      %v491 = vpack.c.b16 %v472, %v471
      %v492 = vpack.c.b16 %v474, %v473
      %v493 = vpack.c.b16 %v476, %v475
      %v494 = vpack.c.b16 %v478, %v477
      %v495 = vpack.c.b16 %v480, %v479
      %v496 = vpack.c.b16 %v482, %v481
      %v497 = vpack.c.b16 %v484, %v483
      %v498 = vpack.c.b16 %v486, %v485
      %v499 = vpack.c.b16 %v488, %v487
      %v500 = vpack.c.b16 %v490, %v489
      %v527 = vunpack.c.l.b16 %v435
      %v528 = vunpack.c.l.b16 %v436
      %v529 = vunpack.c.l.b16 %v437
      %v530 = vunpack.c.l.b16 %v438
      %v531 = vunpack.c.l.b16 %v439
      %v532 = vunpack.c.l.b16 %v440
      %v533 = vunpack.c.l.b16 %v441
      %v534 = vunpack.c.l.b16 %v442
      %v535 = vunpack.c.l.b16 %v443
      %v536 = vunpack.c.l.b16 %v444
      %v537 = vunpack.c.l.b16 %v445
      %v538 = vunpack.c.l.b16 %v446
      %v539 = vunpack.c.l.b16 %v447
      %v540 = vunpack.c.l.b16 %v448
      %v541 = vunpack.c.l.b16 %v449
      %v542 = vunpack.c.l.b16 %v450
      %v543 = vpack.c.b16 %v528, %v527
      %v544 = vpack.c.b16 %v530, %v529
      %v545 = vpack.c.b16 %v532, %v531
      %v546 = vpack.c.b16 %v534, %v533
      %v547 = vpack.c.b16 %v536, %v535
      %v548 = vpack.c.b16 %v538, %v537
      %v549 = vpack.c.b16 %v540, %v539
      %v550 = vpack.c.b16 %v542, %v541
      %559 = vmatprep.subr.bf16.mxu0 0
      %560 = vmatpush1.bf16.msra.mxu0 %v550
      %561 = vmatprep.subr.bf16.mxu0 0
      %562 = vmatpush1.bf16.msra.mxu0 %v549
      %563 = vmatprep.subr.bf16.mxu0 0
      %564 = vmatpush1.bf16.msra.mxu0 %v548
      %565 = vmatprep.subr.bf16.mxu0 0
      %566 = vmatpush1.bf16.msra.mxu0 %v547
      %567 = vmatprep.subr.bf16.mxu0 0
      %568 = vmatpush1.bf16.msra.mxu0 %v546
      %569 = vmatprep.subr.bf16.mxu0 0
      %570 = vmatpush1.bf16.msra.mxu0 %v545
      %571 = vmatprep.subr.bf16.mxu0 0
      %572 = vmatpush1.bf16.msra.mxu0 %v544
      %573 = vmatprep.subr.bf16.mxu0 0
      %574 = vmatpush1.bf16.msra.mxu0 %v543
      %575 = vmatprep.subr.bf16.mxu0 0
      %576 = vmatpush2.bf16.msra.mxu0 0
      %577 = vmatprep.subr.bf16.mxu0 0
      %578 = vmatpush2.bf16.msra.mxu0 0
      %579 = vmatprep.subr.bf16.mxu0 0
      %580 = vmatpush2.bf16.msra.mxu0 0
      %581 = vmatprep.subr.bf16.mxu0 0
      %582 = vmatpush2.bf16.msra.mxu0 0
      %583 = vmatprep.subr.bf16.mxu0 0
      %584 = vmatpush2.bf16.msra.mxu0 0
      %585 = vmatprep.subr.bf16.mxu0 0
      %586 = vmatpush2.bf16.msra.mxu0 0
      %587 = vmatprep.subr.bf16.mxu0 0
      %588 = vmatpush2.bf16.msra.mxu0 0
      %589 = vmatprep.subr.bf16.mxu0 0
      %590 = vmatpush2.bf16.msra.mxu0 0
      %591 = vmatprep.mubr.bf16.mxu0 0
      %592 = vmatmul.mubr.bf16.gmra.mxu0 %v491
      %v593 = vpop.f32.mrf.mxu0
      %v594 = vadd.f32 0.0, %v593
      %v595 = vpop.f32.mrf.mxu0
      %v596 = vpop.f32.mrf.mxu0
      %v597 = vadd.f32 0.0, %v596
      %v598 = vpop.f32.mrf.mxu0
      %599 = vmatprep.mubr.bf16.mxu0 0
      %600 = vmatmul.mubr.bf16.gmra.mxu0 %v492
      %v601 = vpop.f32.mrf.mxu0
      %v602 = vadd.f32 0.0, %v601
      %v603 = vpop.f32.mrf.mxu0
      %v604 = vpop.f32.mrf.mxu0
      %v605 = vadd.f32 0.0, %v604
      %v606 = vpop.f32.mrf.mxu0
      %607 = vmatprep.mubr.bf16.mxu0 0
      %608 = vmatmul.mubr.bf16.gmra.mxu0 %v493
      %v609 = vpop.f32.mrf.mxu0
      %v610 = vadd.f32 0.0, %v609
      %v611 = vpop.f32.mrf.mxu0
      %v612 = vpop.f32.mrf.mxu0
      %v613 = vadd.f32 0.0, %v612
      %v614 = vpop.f32.mrf.mxu0
      %615 = vmatprep.mubr.bf16.mxu0 0
      %616 = vmatmul.mubr.bf16.gmra.mxu0 %v494
      %v617 = vpop.f32.mrf.mxu0
      %v618 = vadd.f32 0.0, %v617
      %v619 = vpop.f32.mrf.mxu0
      %v620 = vpop.f32.mrf.mxu0
      %v621 = vadd.f32 0.0, %v620
      %v622 = vpop.f32.mrf.mxu0
      %623 = vmatprep.mubr.bf16.mxu0 0
      %624 = vmatmul.mubr.bf16.gmra.mxu0 %v495
      %v625 = vpop.f32.mrf.mxu0
      %v626 = vadd.f32 0.0, %v625
      %v627 = vpop.f32.mrf.mxu0
      %v628 = vpop.f32.mrf.mxu0
      %v629 = vadd.f32 0.0, %v628
      %v630 = vpop.f32.mrf.mxu0
      %631 = vmatprep.mubr.bf16.mxu0 0
      %632 = vmatmul.mubr.bf16.gmra.mxu0 %v496
      %v633 = vpop.f32.mrf.mxu0
      %v634 = vadd.f32 0.0, %v633
      %v635 = vpop.f32.mrf.mxu0
      %v636 = vpop.f32.mrf.mxu0
      %v637 = vadd.f32 0.0, %v636
      %v638 = vpop.f32.mrf.mxu0
      %639 = vmatprep.mubr.bf16.mxu0 0
      %640 = vmatmul.mubr.bf16.gmra.mxu0 %v497
      %v641 = vpop.f32.mrf.mxu0
      %v642 = vadd.f32 0.0, %v641
      %v643 = vpop.f32.mrf.mxu0
      %v644 = vpop.f32.mrf.mxu0
      %v645 = vadd.f32 0.0, %v644
      %v646 = vpop.f32.mrf.mxu0
      %647 = vmatprep.mubr.bf16.mxu0 0
      %648 = vmatmul.mubr.bf16.gmra.mxu0 %v498
      %v649 = vpop.f32.mrf.mxu0
      %v650 = vadd.f32 0.0, %v649
      %v651 = vpop.f32.mrf.mxu0
      %v652 = vpop.f32.mrf.mxu0
      %v653 = vadd.f32 0.0, %v652
      %v654 = vpop.f32.mrf.mxu0
      %655 = vmatprep.mubr.bf16.mxu0 0
      %656 = vmatmul.mubr.bf16.gmra.mxu0 %v499
      %v657 = vpop.f32.mrf.mxu0
      %v658 = vadd.f32 0.0, %v657
      %v659 = vpop.f32.mrf.mxu0
      %v660 = vpop.f32.mrf.mxu0
      %v661 = vadd.f32 0.0, %v660
      %v662 = vpop.f32.mrf.mxu0
      %663 = vmatprep.mubr.bf16.mxu0 0
      %664 = vmatmul.mubr.bf16.gmra.mxu0 %v500
      %v665 = vpop.f32.mrf.mxu0
      %v666 = vadd.f32 0.0, %v665
      %v667 = vpop.f32.mrf.mxu0
      %v668 = vpop.f32.mrf.mxu0
      %v669 = vadd.f32 0.0, %v668
      %v670 = vpop.f32.mrf.mxu0
      %671 = vdwg.mxu0
      %v692 = vunpack.c.l.b16 %v379
      %v693 = vunpack.c.l.b16 %v380
      %v694 = vunpack.c.l.b16 %v381
      %v695 = vunpack.c.l.b16 %v382
      %v696 = vunpack.c.l.b16 %v383
      %v697 = vunpack.c.l.b16 %v384
      %v698 = vunpack.c.l.b16 %v385
      %v699 = vunpack.c.l.b16 %v386
      %v700 = vunpack.c.l.b16 %v387
      %v701 = vunpack.c.l.b16 %v388
      %v702 = vunpack.c.l.b16 %v389
      %v703 = vunpack.c.l.b16 %v390
      %v704 = vunpack.c.l.b16 %v391
      %v705 = vunpack.c.l.b16 %v392
      %v706 = vunpack.c.l.b16 %v393
      %v707 = vunpack.c.l.b16 %v394
      %v708 = vunpack.c.l.b16 %v395
      %v709 = vunpack.c.l.b16 %v396
      %v710 = vunpack.c.l.b16 %v397
      %v711 = vunpack.c.l.b16 %v398
      %v712 = vpack.c.b16 %v693, %v692
      %v713 = vpack.c.b16 %v695, %v694
      %v714 = vpack.c.b16 %v697, %v696
      %v715 = vpack.c.b16 %v699, %v698
      %v716 = vpack.c.b16 %v701, %v700
      %v717 = vpack.c.b16 %v703, %v702
      %v718 = vpack.c.b16 %v705, %v704
      %v719 = vpack.c.b16 %v707, %v706
      %v720 = vpack.c.b16 %v709, %v708
      %v721 = vpack.c.b16 %v711, %v710
      %v748 = vunpack.c.l.b16 %v399
      %v749 = vunpack.c.l.b16 %v400
      %v750 = vunpack.c.l.b16 %v401
      %v751 = vunpack.c.l.b16 %v402
      %v752 = vunpack.c.l.b16 %v403
      %v753 = vunpack.c.l.b16 %v404
      %v754 = vunpack.c.l.b16 %v405
      %v755 = vunpack.c.l.b16 %v406
      %v756 = vunpack.c.l.b16 %v407
      %v757 = vunpack.c.l.b16 %v408
      %v758 = vunpack.c.l.b16 %v409
      %v759 = vunpack.c.l.b16 %v410
      %v760 = vunpack.c.l.b16 %v411
      %v761 = vunpack.c.l.b16 %v412
      %v762 = vunpack.c.l.b16 %v413
      %v763 = vunpack.c.l.b16 %v414
      %v764 = vpack.c.b16 %v749, %v748
      %v765 = vpack.c.b16 %v751, %v750
      %v766 = vpack.c.b16 %v753, %v752
      %v767 = vpack.c.b16 %v755, %v754
      %v768 = vpack.c.b16 %v757, %v756
      %v769 = vpack.c.b16 %v759, %v758
      %v770 = vpack.c.b16 %v761, %v760
      %v771 = vpack.c.b16 %v763, %v762
      %780 = vmatprep.subr.bf16.mxu0 0
      %781 = vmatpush1.bf16.msra.mxu0 %v771
      %782 = vmatprep.subr.bf16.mxu0 0
      %783 = vmatpush1.bf16.msra.mxu0 %v770
      %784 = vmatprep.subr.bf16.mxu0 0
      %785 = vmatpush1.bf16.msra.mxu0 %v769
      %786 = vmatprep.subr.bf16.mxu0 0
      %787 = vmatpush1.bf16.msra.mxu0 %v768
      %788 = vmatprep.subr.bf16.mxu0 0
      %789 = vmatpush1.bf16.msra.mxu0 %v767
      %790 = vmatprep.subr.bf16.mxu0 0
      %791 = vmatpush1.bf16.msra.mxu0 %v766
      %792 = vmatprep.subr.bf16.mxu0 0
      %793 = vmatpush1.bf16.msra.mxu0 %v765
      %794 = vmatprep.subr.bf16.mxu0 0
      %795 = vmatpush1.bf16.msra.mxu0 %v764
      %796 = vmatprep.subr.bf16.mxu0 0
      %797 = vmatpush2.bf16.msra.mxu0 0
      %798 = vmatprep.subr.bf16.mxu0 0
      %799 = vmatpush2.bf16.msra.mxu0 0
      %800 = vmatprep.subr.bf16.mxu0 0
      %801 = vmatpush2.bf16.msra.mxu0 0
      %802 = vmatprep.subr.bf16.mxu0 0
      %803 = vmatpush2.bf16.msra.mxu0 0
      %804 = vmatprep.subr.bf16.mxu0 0
      %805 = vmatpush2.bf16.msra.mxu0 0
      %806 = vmatprep.subr.bf16.mxu0 0
      %807 = vmatpush2.bf16.msra.mxu0 0
      %808 = vmatprep.subr.bf16.mxu0 0
      %809 = vmatpush2.bf16.msra.mxu0 0
      %810 = vmatprep.subr.bf16.mxu0 0
      %811 = vmatpush2.bf16.msra.mxu0 0
      %812 = vmatprep.mubr.bf16.mxu0 0
      %813 = vmatmul.mubr.bf16.gmra.mxu0 %v712
      %v814 = vpop.f32.mrf.mxu0
      %v815 = vadd.f32 %v594, %v814
      %v816 = vpop.f32.mrf.mxu0
      %v817 = vpop.f32.mrf.mxu0
      %v818 = vadd.f32 %v597, %v817
      %v819 = vpop.f32.mrf.mxu0
      %820 = vmatprep.mubr.bf16.mxu0 0
      %821 = vmatmul.mubr.bf16.gmra.mxu0 %v713
      %v822 = vpop.f32.mrf.mxu0
      %v823 = vadd.f32 %v602, %v822
      %v824 = vpop.f32.mrf.mxu0
      %v825 = vpop.f32.mrf.mxu0
      %v826 = vadd.f32 %v605, %v825
      %v827 = vpop.f32.mrf.mxu0
      %828 = vmatprep.mubr.bf16.mxu0 0
      %829 = vmatmul.mubr.bf16.gmra.mxu0 %v714
      %v830 = vpop.f32.mrf.mxu0
      %v831 = vadd.f32 %v610, %v830
      %v832 = vpop.f32.mrf.mxu0
      %v833 = vpop.f32.mrf.mxu0
      %v834 = vadd.f32 %v613, %v833
      %v835 = vpop.f32.mrf.mxu0
      %836 = vmatprep.mubr.bf16.mxu0 0
      %837 = vmatmul.mubr.bf16.gmra.mxu0 %v715
      %v838 = vpop.f32.mrf.mxu0
      %v839 = vadd.f32 %v618, %v838
      %v840 = vpop.f32.mrf.mxu0
      %v841 = vpop.f32.mrf.mxu0
      %v842 = vadd.f32 %v621, %v841
      %v843 = vpop.f32.mrf.mxu0
      %844 = vmatprep.mubr.bf16.mxu0 0
      %845 = vmatmul.mubr.bf16.gmra.mxu0 %v716
      %v846 = vpop.f32.mrf.mxu0
      %v847 = vadd.f32 %v626, %v846
      %v848 = vpop.f32.mrf.mxu0
      %v849 = vpop.f32.mrf.mxu0
      %v850 = vadd.f32 %v629, %v849
      %v851 = vpop.f32.mrf.mxu0
      %852 = vmatprep.mubr.bf16.mxu0 0
      %853 = vmatmul.mubr.bf16.gmra.mxu0 %v717
      %v854 = vpop.f32.mrf.mxu0
      %v855 = vadd.f32 %v634, %v854
      %v856 = vpop.f32.mrf.mxu0
      %v857 = vpop.f32.mrf.mxu0
      %v858 = vadd.f32 %v637, %v857
      %v859 = vpop.f32.mrf.mxu0
      %860 = vmatprep.mubr.bf16.mxu0 0
      %861 = vmatmul.mubr.bf16.gmra.mxu0 %v718
      %v862 = vpop.f32.mrf.mxu0
      %v863 = vadd.f32 %v642, %v862
      %v864 = vpop.f32.mrf.mxu0
      %v865 = vpop.f32.mrf.mxu0
      %v866 = vadd.f32 %v645, %v865
      %v867 = vpop.f32.mrf.mxu0
      %868 = vmatprep.mubr.bf16.mxu0 0
      %869 = vmatmul.mubr.bf16.gmra.mxu0 %v719
      %v870 = vpop.f32.mrf.mxu0
      %v871 = vadd.f32 %v650, %v870
      %v872 = vpop.f32.mrf.mxu0
      %v873 = vpop.f32.mrf.mxu0
      %v874 = vadd.f32 %v653, %v873
      %v875 = vpop.f32.mrf.mxu0
      %876 = vmatprep.mubr.bf16.mxu0 0
      %877 = vmatmul.mubr.bf16.gmra.mxu0 %v720
      %v878 = vpop.f32.mrf.mxu0
      %v879 = vadd.f32 %v658, %v878
      %v880 = vpop.f32.mrf.mxu0
      %v881 = vpop.f32.mrf.mxu0
      %v882 = vadd.f32 %v661, %v881
      %v883 = vpop.f32.mrf.mxu0
      %884 = vmatprep.mubr.bf16.mxu0 0
      %885 = vmatmul.mubr.bf16.gmra.mxu0 %v721
      %v886 = vpop.f32.mrf.mxu0
      %v887 = vadd.f32 %v666, %v886
      %v888 = vpop.f32.mrf.mxu0
      %v889 = vpop.f32.mrf.mxu0
      %v890 = vadd.f32 %v669, %v889
      %v891 = vpop.f32.mrf.mxu0
      %892 = vdwg.mxu0
      %v893 = vld [vmem:[%s4] sm:$0x1]
      %v895 = vlaneseq
      %v896 = vshrl.u32 %v895, 7
      %v897 = vsub.s32 0, %v896
      %v898 = vrot.slane %v893, %v897
      %v900 = vadd.f32 %v815, %v898
      %v901 = vadd.f32 %v818, %v898
      %v902 = vadd.f32 %v823, %v898
      %v903 = vadd.f32 %v826, %v898
      %v904 = vadd.f32 %v831, %v898
      %v905 = vadd.f32 %v834, %v898
      %v906 = vadd.f32 %v839, %v898
      %v907 = vadd.f32 %v842, %v898
      %v908 = vadd.f32 %v847, %v898
      %v909 = vadd.f32 %v850, %v898
      %v910 = vadd.f32 %v855, %v898
      %v911 = vadd.f32 %v858, %v898
      %v912 = vadd.f32 %v863, %v898
      %v913 = vadd.f32 %v866, %v898
      %v914 = vadd.f32 %v871, %v898
      %v915 = vadd.f32 %v874, %v898
      %v916 = vadd.f32 %v879, %v898
      %v917 = vadd.f32 %v882, %v898
      %v918 = vadd.f32 %v887, %v898
      %v919 = vadd.f32 %v890, %v898
      %v920 = vlaneseq
      %v921 = vshrl.u32 %v920, 7
      %v922 = vadd.s32 %v921, 8
      %v923 = vadd.s32 %v921, 16
      %v924 = vadd.s32 %v921, 24
      %v925 = vadd.s32 %v921, 32
      %v926 = vadd.s32 %v921, 40
      %v927 = vadd.s32 %v921, 48
      %v928 = vadd.s32 %v921, 56
      %v929 = vadd.s32 %v921, 64
      %v930 = vadd.s32 %v921, 72
      %v931 = vadd.s32 %v921, 80
      %v932 = vadd.s32 %v921, 88
      %v933 = vadd.s32 %v921, 96
      %v934 = vadd.s32 %v921, 104
      %v935 = vadd.s32 %v921, 112
      %v936 = vadd.s32 %v921, 120
      %v937 = vadd.s32 %v921, 128
      %v938 = vadd.s32 %v921, 136
      %v939 = vadd.s32 %v921, 144
      %v940 = vadd.s32 %v921, 152
      %s941 = smul.u32 %s24, 160
      %v942 = vstv %s941
      %v943 = vadd.s32 %v921, %v942
      %v944 = vadd.s32 %v922, %v942
      %v945 = vadd.s32 %v923, %v942
      %v946 = vadd.s32 %v924, %v942
      %v947 = vadd.s32 %v925, %v942
      %v948 = vadd.s32 %v926, %v942
      %v949 = vadd.s32 %v927, %v942
      %v950 = vadd.s32 %v928, %v942
      %v951 = vadd.s32 %v929, %v942
      %v952 = vadd.s32 %v930, %v942
      %v953 = vadd.s32 %v931, %v942
      %v954 = vadd.s32 %v932, %v942
      %v955 = vadd.s32 %v933, %v942
      %v956 = vadd.s32 %v934, %v942
      %v957 = vadd.s32 %v935, %v942
      %v958 = vadd.s32 %v936, %v942
      %v959 = vadd.s32 %v937, %v942
      %v960 = vadd.s32 %v938, %v942
      %v961 = vadd.s32 %v939, %v942
      %v962 = vadd.s32 %v940, %v942
      %vm963 = vcmp.lt.s32.totalorder %v943, 153
      %vm964 = vcmp.lt.s32.totalorder %v944, 153
      %vm965 = vcmp.lt.s32.totalorder %v945, 153
      %vm966 = vcmp.lt.s32.totalorder %v946, 153
      %vm967 = vcmp.lt.s32.totalorder %v947, 153
      %vm968 = vcmp.lt.s32.totalorder %v948, 153
      %vm969 = vcmp.lt.s32.totalorder %v949, 153
      %vm970 = vcmp.lt.s32.totalorder %v950, 153
      %vm971 = vcmp.lt.s32.totalorder %v951, 153
      %vm972 = vcmp.lt.s32.totalorder %v952, 153
      %vm973 = vcmp.lt.s32.totalorder %v953, 153
      %vm974 = vcmp.lt.s32.totalorder %v954, 153
      %vm975 = vcmp.lt.s32.totalorder %v955, 153
      %vm976 = vcmp.lt.s32.totalorder %v956, 153
      %vm977 = vcmp.lt.s32.totalorder %v957, 153
      %vm978 = vcmp.lt.s32.totalorder %v958, 153
      %vm979 = vcmp.lt.s32.totalorder %v959, 153
      %vm980 = vcmp.lt.s32.totalorder %v960, 153
      %vm981 = vcmp.lt.s32.totalorder %v961, 153
      %vm982 = vcmp.lt.s32.totalorder %v962, 153
      %v983 = vsel %vm963, %v900, 0.0
      %v984 = vsel %vm964, %v901, 0.0
      %v985 = vsel %vm965, %v902, 0.0
      %v986 = vsel %vm966, %v903, 0.0
      %v987 = vsel %vm967, %v904, 0.0
      %v988 = vsel %vm968, %v905, 0.0
      %v989 = vsel %vm969, %v906, 0.0
      %v990 = vsel %vm970, %v907, 0.0
      %v991 = vsel %vm971, %v908, 0.0
      %v992 = vsel %vm972, %v909, 0.0
      %v993 = vsel %vm973, %v910, 0.0
      %v994 = vsel %vm974, %v911, 0.0
      %v995 = vsel %vm975, %v912, 0.0
      %v996 = vsel %vm976, %v913, 0.0
      %v997 = vsel %vm977, %v914, 0.0
      %v998 = vsel %vm978, %v915, 0.0
      %v999 = vsel %vm979, %v916, 0.0
      %v1000 = vsel %vm980, %v917, 0.0
      %v1001 = vsel %vm981, %v918, 0.0
      %v1002 = vsel %vm982, %v919, 0.0
      %v1003 = vld [vmem:[#allocation2] sm:$0x1]
      %v1004 = vadd.f32 %v983, %v984
      %v1005 = vadd.f32 %v1004, %v985
      %v1006 = vadd.f32 %v1005, %v986
      %v1007 = vadd.f32 %v1006, %v987
      %v1008 = vadd.f32 %v1007, %v988
      %v1009 = vadd.f32 %v1008, %v989
      %v1010 = vadd.f32 %v1009, %v990
      %v1011 = vadd.f32 %v1010, %v991
      %v1012 = vadd.f32 %v1011, %v992
      %v1013 = vadd.f32 %v1012, %v993
      %v1014 = vadd.f32 %v1013, %v994
      %v1015 = vadd.f32 %v1014, %v995
      %v1016 = vadd.f32 %v1015, %v996
      %v1017 = vadd.f32 %v1016, %v997
      %v1018 = vadd.f32 %v1017, %v998
      %v1019 = vadd.f32 %v1018, %v999
      %v1020 = vadd.f32 %v1019, %v1000
      %v1021 = vadd.f32 %v1020, %v1001
      %v1022 = vadd.f32 %v1021, %v1002
      %1023 = vadd.xlane.f32.xlu0 %v1022
      %v1024 = vpop.xlane.xlu0 %1023
      %v1025 = vrot.slane %v1024, 4
      %v1026 = vadd.f32 %v1024, %v1025
      %v1027 = vrot.slane %v1026, 2
      %v1028 = vadd.f32 %v1026, %v1027
      %v1029 = vrot.slane %v1028, 1
      %v1030 = vadd.f32 %v1028, %v1029
      %s1031 = vtos %v1030
      %v1032 = vstv %s1031
      %v1033 = vadd.f32 %v1003, %v1032
      %vm1034 = vcmask 0
      %1035 = vst.msk [vmem:[#allocation2] sm:$0x1] %vm1034, %v1033
      %v1036 = vld [vmem:[#allocation3] sm:$0x1]
      %v1037 = vmul.f32 %v983, %v983
      %v1038 = vmul.f32 %v984, %v984
      %v1039 = vmul.f32 %v985, %v985
      %v1040 = vmul.f32 %v986, %v986
      %v1041 = vmul.f32 %v987, %v987
      %v1042 = vmul.f32 %v988, %v988
      %v1043 = vmul.f32 %v989, %v989
      %v1044 = vmul.f32 %v990, %v990
      %v1045 = vmul.f32 %v991, %v991
      %v1046 = vmul.f32 %v992, %v992
      %v1047 = vmul.f32 %v993, %v993
      %v1048 = vmul.f32 %v994, %v994
      %v1049 = vmul.f32 %v995, %v995
      %v1050 = vmul.f32 %v996, %v996
      %v1051 = vmul.f32 %v997, %v997
      %v1052 = vmul.f32 %v998, %v998
      %v1053 = vmul.f32 %v999, %v999
      %v1054 = vmul.f32 %v1000, %v1000
      %v1055 = vmul.f32 %v1001, %v1001
      %v1056 = vmul.f32 %v1002, %v1002
      %v1057 = vadd.f32 %v1037, %v1038
      %v1058 = vadd.f32 %v1057, %v1039
      %v1059 = vadd.f32 %v1058, %v1040
      %v1060 = vadd.f32 %v1059, %v1041
      %v1061 = vadd.f32 %v1060, %v1042
      %v1062 = vadd.f32 %v1061, %v1043
      %v1063 = vadd.f32 %v1062, %v1044
      %v1064 = vadd.f32 %v1063, %v1045
      %v1065 = vadd.f32 %v1064, %v1046
      %v1066 = vadd.f32 %v1065, %v1047
      %v1067 = vadd.f32 %v1066, %v1048
      %v1068 = vadd.f32 %v1067, %v1049
      %v1069 = vadd.f32 %v1068, %v1050
      %v1070 = vadd.f32 %v1069, %v1051
      %v1071 = vadd.f32 %v1070, %v1052
      %v1072 = vadd.f32 %v1071, %v1053
      %v1073 = vadd.f32 %v1072, %v1054
      %v1074 = vadd.f32 %v1073, %v1055
      %v1075 = vadd.f32 %v1074, %v1056
      %1076 = vadd.xlane.f32.xlu0 %v1075
      %v1077 = vpop.xlane.xlu0 %1076
      %v1078 = vrot.slane %v1077, 4
      %v1079 = vadd.f32 %v1077, %v1078
      %v1080 = vrot.slane %v1079, 2
      %v1081 = vadd.f32 %v1079, %v1080
      %v1082 = vrot.slane %v1081, 1
      %v1083 = vadd.f32 %v1081, %v1082
      %s1084 = vtos %v1083
      %v1085 = vstv %s1084
      %v1086 = vadd.f32 %v1036, %v1085
      %1087 = vst.msk [vmem:[#allocation3] sm:$0x1] %vm1034, %v1086
      %1088 = vst [vmem:[%s363] sm:$0xff] %v900
      %1089 = vst [vmem:[%s363 + $0x8] sm:$0xff] %v901
      %1090 = vst [vmem:[%s363 + $0x10] sm:$0xff] %v902
      %1091 = vst [vmem:[%s363 + $0x18] sm:$0xff] %v903
      %1092 = vst [vmem:[%s363 + $0x20] sm:$0xff] %v904
      %1093 = vst [vmem:[%s363 + $0x28] sm:$0xff] %v905
      %1094 = vst [vmem:[%s363 + $0x30] sm:$0xff] %v906
      %1095 = vst [vmem:[%s363 + $0x38] sm:$0xff] %v907
      %1096 = vst [vmem:[%s363 + $0x40] sm:$0xff] %v908
      %1097 = vst [vmem:[%s363 + $0x48] sm:$0xff] %v909
      %1098 = vst [vmem:[%s363 + $0x50] sm:$0xff] %v910
      %1099 = vst [vmem:[%s363 + $0x58] sm:$0xff] %v911
      %1100 = vst [vmem:[%s363 + $0x60] sm:$0xff] %v912
      %1101 = vst [vmem:[%s363 + $0x68] sm:$0xff] %v913
      %1102 = vst [vmem:[%s363 + $0x70] sm:$0xff] %v914
      %1103 = vst [vmem:[%s363 + $0x78] sm:$0xff] %v915
      %1104 = vst [vmem:[%s363 + $0x80] sm:$0xff] %v916
      %1105 = vst [vmem:[%s363 + $0x88] sm:$0xff] %v917
      %1106 = vst [vmem:[%s363 + $0x90] sm:$0xff] %v918
      %1107 = vst [vmem:[%s363 + $0x98] sm:$0xff] %v919
      // Predicated region
      $region45: #{fusionnet_forward.11} parent=39 // pred_check
        %p1108 = pneg %p372
      $region46: #{fusionnet_forward.11} parent=39 // pred_check_branch
        %1110 = sbr.rel (%p1108) target = $region48
      $region47: #{fusionnet_forward.11} parent=39 // pred_region
        %v1111 = vld [vmem:[#allocation2] sm:$0x1]
        %v1112 = vrcp.pop 19584.0
        %v1113 = vmul.f32 %v1111, %v1112
        %v1114 = vld [vmem:[#allocation3] sm:$0x1]
        %v1115 = vmul.f32 %v1114, %v1112
        %v1116 = vmul.f32 %v1113, %v1113
        %v1117 = vsub.f32 %v1115, %v1116
        %1118 = vst.msk [vmem:[%s367] sm:$0x1] %vm1034, %v1113
        %v1119 = vadd.f32 %v1117, 1e-05
        %v1120 = vrsqrt.pop %v1119
        %1121 = vst.msk [vmem:[%s370] sm:$0x1] %vm1034, %v1120
      $region48: #{fusionnet_forward.11} parent=39 // pred_fallthru
        _
      %s1122 = smul.u32 20, %s24
      %p1123 = scmp.lt.s32.totalorder %s23, 1
      %s1124 = scalar_select %p1123, %s23, 1
      %p1125 = scmp.lt.s32.totalorder %s1122, 19
      %s1126 = scalar_select %p1125, %s1122, 19
      %s1127 = smul.addr %s1124, 20
      %s1128 = sadd.s32 %s1126, %s1127
      %s1129 = smul.addr %s1128, 8
      %s1130 = scalar_lea.vmem %s5, %s1129
      %p1131 = scmp.lt.s32.totalorder %s23, 1
      %s1132 = scalar_select %p1131, %s23, 1
      %s1133 = scalar_lea.vmem %s6, %s1132
      %p1134 = scmp.lt.s32.totalorder %s23, 1
      %s1135 = scalar_select %p1134, %s23, 1
      %s1136 = scalar_lea.vmem %s7, %s1135
      // Predicated region
      $region49: #{fusionnet_forward.11} parent=39 // pred_check
        %p1137 = pneg %p170
      $region50: #{fusionnet_forward.11} parent=39 // pred_check_branch
        %1139 = sbr.rel (%p1137) target = $region52
      $region51: #{fusionnet_forward.11} parent=39 // pred_region
        %s1140 = smul.u32 20, %s24
      $region52: #{fusionnet_forward.11} parent=39 // pred_fallthru
        _
      // Predicated region
      $region53: #{fusionnet_forward.11} parent=39 // pred_check
        %p1141 = pneg %p196
      $region54: #{fusionnet_forward.11} parent=39 // pred_check_branch
        %1143 = sbr.rel (%p1141) target = $region56
      $region55: #{fusionnet_forward.11} parent=39 // pred_region
        _
      $region56: #{fusionnet_forward.11} parent=39 // pred_fallthru
        _
      // Predicated region
      $region57: #{fusionnet_forward.11} parent=39 // pred_check
        %p1144 = pneg %p222
      $region58: #{fusionnet_forward.11} parent=39 // pred_check_branch
        %1146 = sbr.rel (%p1144) target = $region60
      $region59: #{fusionnet_forward.11} parent=39 // pred_region
        _
      $region60: #{fusionnet_forward.11} parent=39 // pred_fallthru
        _
    $region40: #{fusionnet_forward.11} parent=5 // pred_fallthru
      _
    %p1147 = scmp.le.s32.totalorder 2, %s14
    // Predicated region
    $region61: #{fusionnet_forward.11} parent=5 // pred_check
      %p1148 = pneg %p1147
    $region62: #{fusionnet_forward.11} parent=5 // pred_check_branch
      %1150 = sbr.rel (%p1148) target = $region64
    $region63: #{fusionnet_forward.11} parent=5 // pred_region
      %s1151 = ssub.s32 %s14, 2
      // Predicated region
      $region65: #{fusionnet_forward.11} parent=63 // pred_check
        %p1152 = pneg %p176
      $region66: #{fusionnet_forward.11} parent=63 // pred_check_branch
        %1154 = sbr.rel (%p1152) target = $region68
      $region67: #{fusionnet_forward.11} parent=63 // pred_region
        %s1155 = smul.u32 20, %s26
        %p1156 = scmp.lt.s32.totalorder %s25, 1
        %s1157 = scalar_select %p1156, %s25, 1
        %p1158 = scmp.lt.s32.totalorder %s1155, 19
        %s1159 = scalar_select %p1158, %s1155, 19
        %s1160 = smul.addr %s1157, 20
        %s1161 = sadd.s32 %s1159, %s1160
        %s1162 = smul.addr %s1161, 8
        %s1163 = scalar_lea.vmem %s5, %s1162
      $region68: #{fusionnet_forward.11} parent=63 // pred_fallthru
        _
      // Predicated region
      $region69: #{fusionnet_forward.11} parent=63 // pred_check
        %p1164 = pneg %p202
      $region70: #{fusionnet_forward.11} parent=63 // pred_check_branch
        %1166 = sbr.rel (%p1164) target = $region72
      $region71: #{fusionnet_forward.11} parent=63 // pred_region
        %p1167 = scmp.lt.s32.totalorder %s25, 1
        %s1168 = scalar_select %p1167, %s25, 1
        %s1169 = scalar_lea.vmem %s6, %s1168
      $region72: #{fusionnet_forward.11} parent=63 // pred_fallthru
        _
      // Predicated region
      $region73: #{fusionnet_forward.11} parent=63 // pred_check
        %p1170 = pneg %p228
      $region74: #{fusionnet_forward.11} parent=63 // pred_check_branch
        %1172 = sbr.rel (%p1170) target = $region76
      $region75: #{fusionnet_forward.11} parent=63 // pred_region
        %p1173 = scmp.lt.s32.totalorder %s25, 1
        %s1174 = scalar_select %p1173, %s25, 1
        %s1175 = scalar_lea.vmem %s7, %s1174
      $region76: #{fusionnet_forward.11} parent=63 // pred_fallthru
        _
    $region64: #{fusionnet_forward.11} parent=5 // pred_fallthru
      _
  $region6: #{fusionnet_forward.11} parent=0 // loop_footer
    %s18 = sadd.s32 1, %s14
  $region7: #{fusionnet_forward.11} parent=0 // loop_footer_branch
    %13 = sbr.rel target = $region3
  $region8: #{fusionnet_forward.11} parent=0 // loop_exit
    _

// kernel: fusionnet_forward.13
$region0: #{fusionnet_forward.13}
  #allocation0 [shape = 'u32[]', space=smem, size = 0x4, offset = 0x4, fixed_abs, tag = 'smem constant byte address 0x4 - core index']
  #allocation1 [shape = 'u32[144,128]{1,0:T(1,128)}', space=vmem, size = 0x12000, scoped, tag = 'internal scratch']
  %s0 = inlined_call_operand.vmem [shape: bf16[2,160,128], index: 0, kind: input, shape index: {}]
  %s1 = inlined_call_operand.vmem [shape: bf16[2,160,128], index: 1, kind: input, shape index: {}]
  %s2 = inlined_call_operand.vmem [shape: bf16[2,160,128], index: 2, kind: input, shape index: {}]
  %s3 = inlined_call_operand.vmem [shape: bf16[128,128], index: 3, kind: input, shape index: {}]
  %s4 = inlined_call_operand.vmem [shape: bf16[128,128], index: 4, kind: input, shape index: {}]
  %s5 = inlined_call_operand.vmem [shape: bf16[128,128], index: 5, kind: input, shape index: {}]
  %s6 = inlined_call_operand.vmem [shape: f32[1,128], index: 6, kind: input, shape index: {}]
  %s7 = inlined_call_operand.vmem [shape: f32[2,160,128], index: 7, kind: output, shape index: {}]
  %s8 = sld [smem:[#allocation0]]
  $region61: #{fusionnet_forward.13} parent=0
    _
  %s10 = ssub.s32 1, %s8
  %s11 = scalar_select 0, %s10, %s8
  loop: start=0, step=1, limit=4
  $region2: #{fusionnet_forward.13} parent=0 // loop_pre_header
    _
  $region3: #{fusionnet_forward.13} parent=0 // loop_header
    %s13 = sphi 0, %s17
    %p14 = scmp.ge.s32.totalorder %s13, 4
    %s20 = sphi 0, %s32
    %s21 = sphi 0, %s28
    %s22 = sphi 0, %s20
    %s23 = sphi 0, %s21
    %s24 = sphi 0, %s22
    %s25 = sphi 0, %s23
    %s37 = sphi 0, %s39
    %s40 = sphi 0, %s37
    %s41 = sphi 0, %s40
    %s57 = sphi 0, %s41
    %s65 = sphi 0, %s67
    %s68 = sphi 0, %s65
    %s69 = sphi 0, %s68
    %s85 = sphi 0, %s69
    %s93 = sphi 0, %s95
    %s96 = sphi 0, %s93
    %s97 = sphi 0, %s96
    %s113 = sphi 0, %s97
    %s117 = sphi 0, %s117
    %s119 = sphi 0, %s117
    %s120 = sphi 0, %s119
    %s134 = sphi 0, %s120
    %s138 = sphi 0, %s138
    %s140 = sphi 0, %s138
    %s141 = sphi 0, %s140
    %s155 = sphi 0, %s141
    %s159 = sphi 0, %s159
    %s161 = sphi 0, %s159
    %s162 = sphi 0, %s161
    %s176 = sphi 0, %s162
    %s180 = sphi 0, %s180
    %s182 = sphi 0, %s180
    %s183 = sphi 0, %s182
    %s197 = sphi 0, %s183
    %s205 = sphi 0, %s207
    %s208 = sphi 0, %s205
    %s209 = sphi 0, %s208
    %s225 = sphi 0, %s209
  $region4: #{fusionnet_forward.13} parent=0 // loop_header_branch
    %16 = sbr.rel (%p14) target = $region8
  $region5: #{fusionnet_forward.13} parent=0 // loop_body
    %s18 = ssub.s32 %s13, 1
    %s19 = ssub.s32 %s13, 2
    %s26 = sadd.s32 1, %s21
    %p27 = scmp.ge.s32.totalorder %s26, 1
    %s28 = scalar_select %p27, 0, %s26
    %s29 = sadd.s32 1, %s20
    %s30 = scalar_select %p27, %s29, %s20
    %p31 = scmp.ge.s32.totalorder %s30, 2
    %s32 = scalar_select %p31, 0, %s30
    %s33 = ssub.s32 %s20, %s32
    %s34 = ssub.s32 %s21, %s28
    %s35 = sor.u32 %s33, %s34
    %p36 = scmp.eq.s32.totalorder %s35, 0
    %s38 = sadd.s32 %s37, 1
    %s39 = scalar_select %p36, %s37, %s38
    %p42 = pneg %p36
    %p43 = scmp.eq.s32.totalorder %s13, 1
    %p44 = por %p42, %p43
    %p45 = scmp.ne.s32.totalorder %s37, %s40
    %p46 = scmp.eq.s32.totalorder %s13, 0
    %p47 = por %p45, %p46
    %p48 = scmp.ne.s32.totalorder %s37, %s40
    %p49 = scmp.eq.s32.totalorder %s18, 1
    %p50 = por %p48, %p49
    %p51 = scmp.ne.s32.totalorder %s40, %s41
    %p52 = scmp.eq.s32.totalorder %s18, 0
    %p53 = por %p51, %p52
    %p54 = scmp.ne.s32.totalorder %s40, %s41
    %p55 = scmp.eq.s32.totalorder %s19, 1
    %p56 = por %p54, %p55
    %p58 = scmp.ne.s32.totalorder %s41, %s57
    %p59 = scmp.eq.s32.totalorder %s19, 0
    %p60 = por %p58, %p59
    %s61 = ssub.s32 %s20, %s32
    %s62 = ssub.s32 %s21, %s28
    %s63 = sor.u32 %s61, %s62
    %p64 = scmp.eq.s32.totalorder %s63, 0
    %s66 = sadd.s32 %s65, 1
    %s67 = scalar_select %p64, %s65, %s66
    %p70 = pneg %p64
    %p71 = scmp.eq.s32.totalorder %s13, 1
    %p72 = por %p70, %p71
    %p73 = scmp.ne.s32.totalorder %s65, %s68
    %p74 = scmp.eq.s32.totalorder %s13, 0
    %p75 = por %p73, %p74
    %p76 = scmp.ne.s32.totalorder %s65, %s68
    %p77 = scmp.eq.s32.totalorder %s18, 1
    %p78 = por %p76, %p77
    %p79 = scmp.ne.s32.totalorder %s68, %s69
    %p80 = scmp.eq.s32.totalorder %s18, 0
    %p81 = por %p79, %p80
    %p82 = scmp.ne.s32.totalorder %s68, %s69
    %p83 = scmp.eq.s32.totalorder %s19, 1
    %p84 = por %p82, %p83
    %p86 = scmp.ne.s32.totalorder %s69, %s85
    %p87 = scmp.eq.s32.totalorder %s19, 0
    %p88 = por %p86, %p87
    %s89 = ssub.s32 %s20, %s32
    %s90 = ssub.s32 %s21, %s28
    %s91 = sor.u32 %s89, %s90
    %p92 = scmp.eq.s32.totalorder %s91, 0
    %s94 = sadd.s32 %s93, 1
    %s95 = scalar_select %p92, %s93, %s94
    %p98 = pneg %p92
    %p99 = scmp.eq.s32.totalorder %s13, 1
    %p100 = por %p98, %p99
    %p101 = scmp.ne.s32.totalorder %s93, %s96
    %p102 = scmp.eq.s32.totalorder %s13, 0
    %p103 = por %p101, %p102
    %p104 = scmp.ne.s32.totalorder %s93, %s96
    %p105 = scmp.eq.s32.totalorder %s18, 1
    %p106 = por %p104, %p105
    %p107 = scmp.ne.s32.totalorder %s96, %s97
    %p108 = scmp.eq.s32.totalorder %s18, 0
    %p109 = por %p107, %p108
    %p110 = scmp.ne.s32.totalorder %s96, %s97
    %p111 = scmp.eq.s32.totalorder %s19, 1
    %p112 = por %p110, %p111
    %p114 = scmp.ne.s32.totalorder %s97, %s113
    %p115 = scmp.eq.s32.totalorder %s19, 0
    %p116 = por %p114, %p115
    %s118 = sadd.s32 %s117, 1
    %p121 = scmp.eq.s32.totalorder %s13, 1
    %p122 = scmp.ne.s32.totalorder %s117, %s119
    %p123 = scmp.eq.s32.totalorder %s13, 0
    %p124 = por %p122, %p123
    %p125 = scmp.ne.s32.totalorder %s117, %s119
    %p126 = scmp.eq.s32.totalorder %s18, 1
    %p127 = por %p125, %p126
    %p128 = scmp.ne.s32.totalorder %s119, %s120
    %p129 = scmp.eq.s32.totalorder %s18, 0
    %p130 = por %p128, %p129
    %p131 = scmp.ne.s32.totalorder %s119, %s120
    %p132 = scmp.eq.s32.totalorder %s19, 1
    %p133 = por %p131, %p132
    %p135 = scmp.ne.s32.totalorder %s120, %s134
    %p136 = scmp.eq.s32.totalorder %s19, 0
    %p137 = por %p135, %p136
    %s139 = sadd.s32 %s138, 1
    %p142 = scmp.eq.s32.totalorder %s13, 1
    %p143 = scmp.ne.s32.totalorder %s138, %s140
    %p144 = scmp.eq.s32.totalorder %s13, 0
    %p145 = por %p143, %p144
    %p146 = scmp.ne.s32.totalorder %s138, %s140
    %p147 = scmp.eq.s32.totalorder %s18, 1
    %p148 = por %p146, %p147
    %p149 = scmp.ne.s32.totalorder %s140, %s141
    %p150 = scmp.eq.s32.totalorder %s18, 0
    %p151 = por %p149, %p150
    %p152 = scmp.ne.s32.totalorder %s140, %s141
    %p153 = scmp.eq.s32.totalorder %s19, 1
    %p154 = por %p152, %p153
    %p156 = scmp.ne.s32.totalorder %s141, %s155
    %p157 = scmp.eq.s32.totalorder %s19, 0
    %p158 = por %p156, %p157
    %s160 = sadd.s32 %s159, 1
    %p163 = scmp.eq.s32.totalorder %s13, 1
    %p164 = scmp.ne.s32.totalorder %s159, %s161
    %p165 = scmp.eq.s32.totalorder %s13, 0
    %p166 = por %p164, %p165
    %p167 = scmp.ne.s32.totalorder %s159, %s161
    %p168 = scmp.eq.s32.totalorder %s18, 1
    %p169 = por %p167, %p168
    %p170 = scmp.ne.s32.totalorder %s161, %s162
    %p171 = scmp.eq.s32.totalorder %s18, 0
    %p172 = por %p170, %p171
    %p173 = scmp.ne.s32.totalorder %s161, %s162
    %p174 = scmp.eq.s32.totalorder %s19, 1
    %p175 = por %p173, %p174
    %p177 = scmp.ne.s32.totalorder %s162, %s176
    %p178 = scmp.eq.s32.totalorder %s19, 0
    %p179 = por %p177, %p178
    %s181 = sadd.s32 %s180, 1
    %p184 = scmp.eq.s32.totalorder %s13, 1
    %p185 = scmp.ne.s32.totalorder %s180, %s182
    %p186 = scmp.eq.s32.totalorder %s13, 0
    %p187 = por %p185, %p186
    %p188 = scmp.ne.s32.totalorder %s180, %s182
    %p189 = scmp.eq.s32.totalorder %s18, 1
    %p190 = por %p188, %p189
    %p191 = scmp.ne.s32.totalorder %s182, %s183
    %p192 = scmp.eq.s32.totalorder %s18, 0
    %p193 = por %p191, %p192
    %p194 = scmp.ne.s32.totalorder %s182, %s183
    %p195 = scmp.eq.s32.totalorder %s19, 1
    %p196 = por %p194, %p195
    %p198 = scmp.ne.s32.totalorder %s183, %s197
    %p199 = scmp.eq.s32.totalorder %s19, 0
    %p200 = por %p198, %p199
    %s201 = ssub.s32 %s20, %s32
    %s202 = ssub.s32 %s21, %s28
    %s203 = sor.u32 %s201, %s202
    %p204 = scmp.eq.s32.totalorder %s203, 0
    %s206 = sadd.s32 %s205, 1
    %s207 = scalar_select %p204, %s205, %s206
    %p210 = pneg %p204
    %p211 = scmp.eq.s32.totalorder %s13, 1
    %p212 = por %p210, %p211
    %p213 = scmp.ne.s32.totalorder %s205, %s208
    %p214 = scmp.eq.s32.totalorder %s13, 0
    %p215 = por %p213, %p214
    %p216 = scmp.ne.s32.totalorder %s205, %s208
    %p217 = scmp.eq.s32.totalorder %s18, 1
    %p218 = por %p216, %p217
    %p219 = scmp.ne.s32.totalorder %s208, %s209
    %p220 = scmp.eq.s32.totalorder %s18, 0
    %p221 = por %p219, %p220
    %p222 = scmp.ne.s32.totalorder %s208, %s209
    %p223 = scmp.eq.s32.totalorder %s19, 1
    %p224 = por %p222, %p223
    %p226 = scmp.ne.s32.totalorder %s209, %s225
    %p227 = scmp.eq.s32.totalorder %s19, 0
    %p228 = por %p226, %p227
    %p229 = scmp.le.s32.totalorder 1, %s13
    %p230 = scmp.lt.s32.totalorder %s13, 3
    %p231 = pnand %p229, %p230
    %p232 = pneg %p231
    // Predicated region
    $region9: #{fusionnet_forward.13} parent=5 // pred_check
      _
    $region10: #{fusionnet_forward.13} parent=5 // pred_check_branch
      %234 = sbr.rel (%p231) target = $region12
    $region11: #{fusionnet_forward.13} parent=5 // pred_region
      %s235 = ssub.s32 %s13, 1
      // Predicated region
      $region13: #{fusionnet_forward.13} parent=11 // pred_check
        %p236 = pneg %p130
      $region14: #{fusionnet_forward.13} parent=11 // pred_check_branch
        %238 = sbr.rel (%p236) target = $region16
      $region15: #{fusionnet_forward.13} parent=11 // pred_region
        _
      $region16: #{fusionnet_forward.13} parent=11 // pred_fallthru
        _
      // Predicated region
      $region17: #{fusionnet_forward.13} parent=11 // pred_check
        %p239 = pneg %p151
      $region18: #{fusionnet_forward.13} parent=11 // pred_check_branch
        %241 = sbr.rel (%p239) target = $region20
      $region19: #{fusionnet_forward.13} parent=11 // pred_region
        _
      $region20: #{fusionnet_forward.13} parent=11 // pred_fallthru
        _
      // Predicated region
      $region21: #{fusionnet_forward.13} parent=11 // pred_check
        %p242 = pneg %p172
      $region22: #{fusionnet_forward.13} parent=11 // pred_check_branch
        %244 = sbr.rel (%p242) target = $region24
      $region23: #{fusionnet_forward.13} parent=11 // pred_region
        _
      $region24: #{fusionnet_forward.13} parent=11 // pred_fallthru
        _
      // Predicated region
      $region25: #{fusionnet_forward.13} parent=11 // pred_check
        %p245 = pneg %p193
      $region26: #{fusionnet_forward.13} parent=11 // pred_check_branch
        %247 = sbr.rel (%p245) target = $region28
      $region27: #{fusionnet_forward.13} parent=11 // pred_region
        _
      $region28: #{fusionnet_forward.13} parent=11 // pred_fallthru
        _
    $region12: #{fusionnet_forward.13} parent=5 // pred_fallthru
      _
    %p248 = scmp.lt.s32.totalorder %s13, 2
    // Predicated region
    $region29: #{fusionnet_forward.13} parent=5 // pred_check
      %p249 = pneg %p248
    $region30: #{fusionnet_forward.13} parent=5 // pred_check_branch
      %251 = sbr.rel (%p249) target = $region32
    $region31: #{fusionnet_forward.13} parent=5 // pred_region
      // Predicated region
      $region33: #{fusionnet_forward.13} parent=31 // pred_check
        %p252 = pneg %p47
      $region34: #{fusionnet_forward.13} parent=31 // pred_check_branch
        %254 = sbr.rel (%p252) target = $region36
      $region35: #{fusionnet_forward.13} parent=31 // pred_region
        %s255 = smul.u32 20, %s21
        %p256 = scmp.lt.s32.totalorder %s20, 1
        %s257 = scalar_select %p256, %s20, 1
        %p258 = scmp.lt.s32.totalorder %s255, 19
        %s259 = scalar_select %p258, %s255, 19
        %s260 = smul.addr %s257, 20
        %s261 = sadd.s32 %s259, %s260
        %s262 = smul.addr %s261, 4
        %s263 = scalar_lea.vmem %s0, %s262
        %s264 = smul.u32 20, %s21
      $region36: #{fusionnet_forward.13} parent=31 // pred_fallthru
        _
      // Predicated region
      $region37: #{fusionnet_forward.13} parent=31 // pred_check
        %p265 = pneg %p75
      $region38: #{fusionnet_forward.13} parent=31 // pred_check_branch
        %267 = sbr.rel (%p265) target = $region40
      $region39: #{fusionnet_forward.13} parent=31 // pred_region
        %s268 = smul.u32 20, %s21
        %p269 = scmp.lt.s32.totalorder %s20, 1
        %s270 = scalar_select %p269, %s20, 1
        %p271 = scmp.lt.s32.totalorder %s268, 19
        %s272 = scalar_select %p271, %s268, 19
        %s273 = smul.addr %s270, 20
        %s274 = sadd.s32 %s272, %s273
        %s275 = smul.addr %s274, 4
        %s276 = scalar_lea.vmem %s1, %s275
        %s277 = smul.u32 20, %s21
      $region40: #{fusionnet_forward.13} parent=31 // pred_fallthru
        _
      // Predicated region
      $region41: #{fusionnet_forward.13} parent=31 // pred_check
        %p278 = pneg %p103
      $region42: #{fusionnet_forward.13} parent=31 // pred_check_branch
        %280 = sbr.rel (%p278) target = $region44
      $region43: #{fusionnet_forward.13} parent=31 // pred_region
        %s281 = smul.u32 20, %s21
        %p282 = scmp.lt.s32.totalorder %s20, 1
        %s283 = scalar_select %p282, %s20, 1
        %p284 = scmp.lt.s32.totalorder %s281, 19
        %s285 = scalar_select %p284, %s281, 19
        %s286 = smul.addr %s283, 20
        %s287 = sadd.s32 %s285, %s286
        %s288 = smul.addr %s287, 4
        %s289 = scalar_lea.vmem %s2, %s288
        %s290 = smul.u32 20, %s21
      $region44: #{fusionnet_forward.13} parent=31 // pred_fallthru
        _
    $region32: #{fusionnet_forward.13} parent=5 // pred_fallthru
      _
    %p291 = scmp.le.s32.totalorder 1, %s13
    %p292 = scmp.lt.s32.totalorder %s13, 3
    %p293 = pnand %p291, %p292
    %p294 = pneg %p293
    // Predicated region
    $region45: #{fusionnet_forward.13} parent=5 // pred_check
      _
    $region46: #{fusionnet_forward.13} parent=5 // pred_check_branch
      %296 = sbr.rel (%p293) target = $region48
    $region47: #{fusionnet_forward.13} parent=5 // pred_region
      %s297 = ssub.s32 %s13, 1
      %s298 = smul.u32 20, %s23
      %p299 = scmp.lt.s32.totalorder %s22, 1
      %s300 = scalar_select %p299, %s22, 1
      %p301 = scmp.lt.s32.totalorder %s298, 19
      %s302 = scalar_select %p301, %s298, 19
      %s303 = smul.addr %s300, 20
      %s304 = sadd.s32 %s302, %s303
      %s305 = smul.addr %s304, 4
      %s306 = scalar_lea.vmem %s0, %s305
      %p307 = pneg %p53
      %p308 = pneg %p50
      %s309 = smul.u32 20, %s23
      %p310 = scmp.lt.s32.totalorder %s22, 1
      %s311 = scalar_select %p310, %s22, 1
      %p312 = scmp.lt.s32.totalorder %s309, 19
      %s313 = scalar_select %p312, %s309, 19
      %s314 = smul.addr %s311, 20
      %s315 = sadd.s32 %s313, %s314
      %s316 = smul.addr %s315, 4
      %s317 = scalar_lea.vmem %s1, %s316
      %p318 = pneg %p81
      %p319 = pneg %p78
      %s320 = smul.u32 20, %s23
      %p321 = scmp.lt.s32.totalorder %s22, 1
      %s322 = scalar_select %p321, %s22, 1
      %p323 = scmp.lt.s32.totalorder %s320, 19
      %s324 = scalar_select %p323, %s320, 19
      %s325 = smul.addr %s322, 20
      %s326 = sadd.s32 %s324, %s325
      %s327 = smul.addr %s326, 4
      %s328 = scalar_lea.vmem %s2, %s327
      %p329 = pneg %p109
      %p330 = pneg %p106
      %p331 = pneg %p130
      %p332 = pneg %p127
      %p333 = pneg %p151
      %p334 = pneg %p148
      %p335 = pneg %p172
      %p336 = pneg %p169
      %p337 = pneg %p193
      %p338 = pneg %p190
      %p339 = pneg %p221
      %p340 = pneg %p218
      %s341 = smul.u32 20, %s23
      %p342 = scmp.lt.s32.totalorder %s22, 1
      %s343 = scalar_select %p342, %s22, 1
      %p344 = scmp.lt.s32.totalorder %s341, 19
      %s345 = scalar_select %p344, %s341, 19
      %s346 = smul.addr %s343, 20
      %s347 = sadd.s32 %s345, %s346
      %s348 = smul.addr %s347, 8
      %s349 = scalar_lea.vmem %s7, %s348
      %s350 = smul.u32 20, %s23
      %p351 = scmp.lt.s32.totalorder %s22, 1
      %s352 = scalar_select %p351, %s22, 1
      %p353 = scmp.lt.s32.totalorder %s350, 19
      %s354 = scalar_select %p353, %s350, 19
      %s355 = smul.addr %s352, 20
      %s356 = sadd.s32 %s354, %s355
      %s357 = smul.addr %s356, 4
      %s358 = scalar_lea.vmem %s0, %s357
      %s359 = smul.u32 20, %s23
      %s360 = smul.u32 20, %s23
      %p361 = scmp.lt.s32.totalorder %s22, 1
      %s362 = scalar_select %p361, %s22, 1
      %p363 = scmp.lt.s32.totalorder %s360, 19
      %s364 = scalar_select %p363, %s360, 19
      %s365 = smul.addr %s362, 20
      %s366 = sadd.s32 %s364, %s365
      %s367 = smul.addr %s366, 4
      %s368 = scalar_lea.vmem %s1, %s367
      %s369 = smul.u32 20, %s23
      %s370 = smul.u32 20, %s23
      %p371 = scmp.lt.s32.totalorder %s22, 1
      %s372 = scalar_select %p371, %s22, 1
      %p373 = scmp.lt.s32.totalorder %s370, 19
      %s374 = scalar_select %p373, %s370, 19
      %s375 = smul.addr %s372, 20
      %s376 = sadd.s32 %s374, %s375
      %s377 = smul.addr %s376, 4
      %s378 = scalar_lea.vmem %s2, %s377
      %s379 = smul.u32 20, %s23
      %s380 = smul.u32 20, %s23
      %p381 = scmp.lt.s32.totalorder %s22, 1
      %s382 = scalar_select %p381, %s22, 1
      %p383 = scmp.lt.s32.totalorder %s380, 19
      %s384 = scalar_select %p383, %s380, 19
      %s385 = smul.addr %s382, 20
      %s386 = sadd.s32 %s384, %s385
      %s387 = smul.addr %s386, 8
      %s388 = scalar_lea.vmem %s7, %s387
      %s389 = smul.u32 20, %s23
      %v391 = vld [vmem:[%s358] sm:$0xf]
      %v392 = vld [vmem:[%s358 + $0x4] sm:$0xf]
      %v393 = vld [vmem:[%s358 + $0x8] sm:$0xf]
      %v394 = vld [vmem:[%s358 + $0xc] sm:$0xf]
      %v395 = vld [vmem:[%s358 + $0x10] sm:$0xf]
      %v396 = vld [vmem:[%s358 + $0x14] sm:$0xf]
      %v397 = vld [vmem:[%s358 + $0x18] sm:$0xf]
      %v398 = vld [vmem:[%s358 + $0x1c] sm:$0xf]
      %v399 = vld [vmem:[%s358 + $0x20] sm:$0xf]
      %v400 = vld [vmem:[%s358 + $0x24] sm:$0xf]
      %v401 = vld [vmem:[%s358 + $0x28] sm:$0xf]
      %v402 = vld [vmem:[%s358 + $0x2c] sm:$0xf]
      %v403 = vld [vmem:[%s358 + $0x30] sm:$0xf]
      %v404 = vld [vmem:[%s358 + $0x34] sm:$0xf]
      %v405 = vld [vmem:[%s358 + $0x38] sm:$0xf]
      %v406 = vld [vmem:[%s358 + $0x3c] sm:$0xf]
      %v407 = vld [vmem:[%s358 + $0x40] sm:$0xf]
      %v408 = vld [vmem:[%s358 + $0x44] sm:$0xf]
      %v409 = vld [vmem:[%s358 + $0x48] sm:$0xf]
      %v410 = vld [vmem:[%s358 + $0x4c] sm:$0xf]
      %v411 = vld [vmem:[%s3] sm:$0xf]
      %v412 = vld [vmem:[%s3 + $0x4] sm:$0xf]
      %v413 = vld [vmem:[%s3 + $0x8] sm:$0xf]
      %v414 = vld [vmem:[%s3 + $0xc] sm:$0xf]
      %v415 = vld [vmem:[%s3 + $0x10] sm:$0xf]
      %v416 = vld [vmem:[%s3 + $0x14] sm:$0xf]
      %v417 = vld [vmem:[%s3 + $0x18] sm:$0xf]
      %v418 = vld [vmem:[%s3 + $0x1c] sm:$0xf]
      %v419 = vld [vmem:[%s3 + $0x20] sm:$0xf]
      %v420 = vld [vmem:[%s3 + $0x24] sm:$0xf]
      %v421 = vld [vmem:[%s3 + $0x28] sm:$0xf]
      %v422 = vld [vmem:[%s3 + $0x2c] sm:$0xf]
      %v423 = vld [vmem:[%s3 + $0x30] sm:$0xf]
      %v424 = vld [vmem:[%s3 + $0x34] sm:$0xf]
      %v425 = vld [vmem:[%s3 + $0x38] sm:$0xf]
      %v426 = vld [vmem:[%s3 + $0x3c] sm:$0xf]
      %v427 = vld [vmem:[%s368] sm:$0xf]
      %v428 = vld [vmem:[%s368 + $0x4] sm:$0xf]
      %v429 = vld [vmem:[%s368 + $0x8] sm:$0xf]
      %v430 = vld [vmem:[%s368 + $0xc] sm:$0xf]
      %v431 = vld [vmem:[%s368 + $0x10] sm:$0xf]
      %v432 = vld [vmem:[%s368 + $0x14] sm:$0xf]
      %v433 = vld [vmem:[%s368 + $0x18] sm:$0xf]
      %v434 = vld [vmem:[%s368 + $0x1c] sm:$0xf]
      %v435 = vld [vmem:[%s368 + $0x20] sm:$0xf]
      %v436 = vld [vmem:[%s368 + $0x24] sm:$0xf]
      %v437 = vld [vmem:[%s368 + $0x28] sm:$0xf]
      %v438 = vld [vmem:[%s368 + $0x2c] sm:$0xf]
      %v439 = vld [vmem:[%s368 + $0x30] sm:$0xf]
      %v440 = vld [vmem:[%s368 + $0x34] sm:$0xf]
      %v441 = vld [vmem:[%s368 + $0x38] sm:$0xf]
      %v442 = vld [vmem:[%s368 + $0x3c] sm:$0xf]
      %v443 = vld [vmem:[%s368 + $0x40] sm:$0xf]
      %v444 = vld [vmem:[%s368 + $0x44] sm:$0xf]
      %v445 = vld [vmem:[%s368 + $0x48] sm:$0xf]
      %v446 = vld [vmem:[%s368 + $0x4c] sm:$0xf]
      %v447 = vld [vmem:[%s4] sm:$0xf]
      %v448 = vld [vmem:[%s4 + $0x4] sm:$0xf]
      %v449 = vld [vmem:[%s4 + $0x8] sm:$0xf]
      %v450 = vld [vmem:[%s4 + $0xc] sm:$0xf]
      %v451 = vld [vmem:[%s4 + $0x10] sm:$0xf]
      %v452 = vld [vmem:[%s4 + $0x14] sm:$0xf]
      %v453 = vld [vmem:[%s4 + $0x18] sm:$0xf]
      %v454 = vld [vmem:[%s4 + $0x1c] sm:$0xf]
      %v455 = vld [vmem:[%s4 + $0x20] sm:$0xf]
      %v456 = vld [vmem:[%s4 + $0x24] sm:$0xf]
      %v457 = vld [vmem:[%s4 + $0x28] sm:$0xf]
      %v458 = vld [vmem:[%s4 + $0x2c] sm:$0xf]
      %v459 = vld [vmem:[%s4 + $0x30] sm:$0xf]
      %v460 = vld [vmem:[%s4 + $0x34] sm:$0xf]
      %v461 = vld [vmem:[%s4 + $0x38] sm:$0xf]
      %v462 = vld [vmem:[%s4 + $0x3c] sm:$0xf]
      %v483 = vunpack.c.l.b16 %v427
      %v484 = vunpack.c.l.b16 %v428
      %v485 = vunpack.c.l.b16 %v429
      %v486 = vunpack.c.l.b16 %v430
      %v487 = vunpack.c.l.b16 %v431
      %v488 = vunpack.c.l.b16 %v432
      %v489 = vunpack.c.l.b16 %v433
      %v490 = vunpack.c.l.b16 %v434
      %v491 = vunpack.c.l.b16 %v435
      %v492 = vunpack.c.l.b16 %v436
      %v493 = vunpack.c.l.b16 %v437
      %v494 = vunpack.c.l.b16 %v438
      %v495 = vunpack.c.l.b16 %v439
      %v496 = vunpack.c.l.b16 %v440
      %v497 = vunpack.c.l.b16 %v441
      %v498 = vunpack.c.l.b16 %v442
      %v499 = vunpack.c.l.b16 %v443
      %v500 = vunpack.c.l.b16 %v444
      %v501 = vunpack.c.l.b16 %v445
      %v502 = vunpack.c.l.b16 %v446
      %v503 = vpack.c.b16 %v484, %v483
      %v504 = vpack.c.b16 %v486, %v485
      %v505 = vpack.c.b16 %v488, %v487
      %v506 = vpack.c.b16 %v490, %v489
      %v507 = vpack.c.b16 %v492, %v491
      %v508 = vpack.c.b16 %v494, %v493
      %v509 = vpack.c.b16 %v496, %v495
      %v510 = vpack.c.b16 %v498, %v497
      %v511 = vpack.c.b16 %v500, %v499
      %v512 = vpack.c.b16 %v502, %v501
      %v539 = vunpack.c.l.b16 %v447
      %v540 = vunpack.c.l.b16 %v448
      %v541 = vunpack.c.l.b16 %v449
      %v542 = vunpack.c.l.b16 %v450
      %v543 = vunpack.c.l.b16 %v451
      %v544 = vunpack.c.l.b16 %v452
      %v545 = vunpack.c.l.b16 %v453
      %v546 = vunpack.c.l.b16 %v454
      %v547 = vunpack.c.l.b16 %v455
      %v548 = vunpack.c.l.b16 %v456
      %v549 = vunpack.c.l.b16 %v457
      %v550 = vunpack.c.l.b16 %v458
      %v551 = vunpack.c.l.b16 %v459
      %v552 = vunpack.c.l.b16 %v460
      %v553 = vunpack.c.l.b16 %v461
      %v554 = vunpack.c.l.b16 %v462
      %v555 = vpack.c.b16 %v540, %v539
      %v556 = vpack.c.b16 %v542, %v541
      %v557 = vpack.c.b16 %v544, %v543
      %v558 = vpack.c.b16 %v546, %v545
      %v559 = vpack.c.b16 %v548, %v547
      %v560 = vpack.c.b16 %v550, %v549
      %v561 = vpack.c.b16 %v552, %v551
      %v562 = vpack.c.b16 %v554, %v553
      %571 = vmatprep.subr.bf16.mxu0 0
      %572 = vmatpush1.bf16.msra.mxu0 %v562
      %573 = vmatprep.subr.bf16.mxu0 0
      %574 = vmatpush1.bf16.msra.mxu0 %v561
      %575 = vmatprep.subr.bf16.mxu0 0
      %576 = vmatpush1.bf16.msra.mxu0 %v560
      %577 = vmatprep.subr.bf16.mxu0 0
      %578 = vmatpush1.bf16.msra.mxu0 %v559
      %579 = vmatprep.subr.bf16.mxu0 0
      %580 = vmatpush1.bf16.msra.mxu0 %v558
      %581 = vmatprep.subr.bf16.mxu0 0
      %582 = vmatpush1.bf16.msra.mxu0 %v557
      %583 = vmatprep.subr.bf16.mxu0 0
      %584 = vmatpush1.bf16.msra.mxu0 %v556
      %585 = vmatprep.subr.bf16.mxu0 0
      %586 = vmatpush1.bf16.msra.mxu0 %v555
      %587 = vmatprep.subr.bf16.mxu0 0
      %588 = vmatpush2.bf16.msra.mxu0 0
      %589 = vmatprep.subr.bf16.mxu0 0
      %590 = vmatpush2.bf16.msra.mxu0 0
      %591 = vmatprep.subr.bf16.mxu0 0
      %592 = vmatpush2.bf16.msra.mxu0 0
      %593 = vmatprep.subr.bf16.mxu0 0
      %594 = vmatpush2.bf16.msra.mxu0 0
      %595 = vmatprep.subr.bf16.mxu0 0
      %596 = vmatpush2.bf16.msra.mxu0 0
      %597 = vmatprep.subr.bf16.mxu0 0
      %598 = vmatpush2.bf16.msra.mxu0 0
      %599 = vmatprep.subr.bf16.mxu0 0
      %600 = vmatpush2.bf16.msra.mxu0 0
      %601 = vmatprep.subr.bf16.mxu0 0
      %602 = vmatpush2.bf16.msra.mxu0 0
      %603 = vmatprep.mubr.bf16.mxu0 0
      %604 = vmatmul.mubr.bf16.gmra.mxu0 %v503
      %v605 = vpop.f32.mrf.mxu0
      %v606 = vadd.f32 0.0, %v605
      %v607 = vpop.f32.mrf.mxu0
      %v608 = vpop.f32.mrf.mxu0
      %v609 = vadd.f32 0.0, %v608
      %v610 = vpop.f32.mrf.mxu0
      %611 = vmatprep.mubr.bf16.mxu0 0
      %612 = vmatmul.mubr.bf16.gmra.mxu0 %v504
      %v613 = vpop.f32.mrf.mxu0
      %v614 = vadd.f32 0.0, %v613
      %v615 = vpop.f32.mrf.mxu0
      %v616 = vpop.f32.mrf.mxu0
      %v617 = vadd.f32 0.0, %v616
      %v618 = vpop.f32.mrf.mxu0
      %619 = vmatprep.mubr.bf16.mxu0 0
      %620 = vmatmul.mubr.bf16.gmra.mxu0 %v505
      %v621 = vpop.f32.mrf.mxu0
      %v622 = vadd.f32 0.0, %v621
      %v623 = vpop.f32.mrf.mxu0
      %v624 = vpop.f32.mrf.mxu0
      %v625 = vadd.f32 0.0, %v624
      %v626 = vpop.f32.mrf.mxu0
      %627 = vmatprep.mubr.bf16.mxu0 0
      %628 = vmatmul.mubr.bf16.gmra.mxu0 %v506
      %v629 = vpop.f32.mrf.mxu0
      %v630 = vadd.f32 0.0, %v629
      %v631 = vpop.f32.mrf.mxu0
      %v632 = vpop.f32.mrf.mxu0
      %v633 = vadd.f32 0.0, %v632
      %v634 = vpop.f32.mrf.mxu0
      %635 = vmatprep.mubr.bf16.mxu0 0
      %636 = vmatmul.mubr.bf16.gmra.mxu0 %v507
      %v637 = vpop.f32.mrf.mxu0
      %v638 = vadd.f32 0.0, %v637
      %v639 = vpop.f32.mrf.mxu0
      %v640 = vpop.f32.mrf.mxu0
      %v641 = vadd.f32 0.0, %v640
      %v642 = vpop.f32.mrf.mxu0
      %643 = vmatprep.mubr.bf16.mxu0 0
      %644 = vmatmul.mubr.bf16.gmra.mxu0 %v508
      %v645 = vpop.f32.mrf.mxu0
      %v646 = vadd.f32 0.0, %v645
      %v647 = vpop.f32.mrf.mxu0
      %v648 = vpop.f32.mrf.mxu0
      %v649 = vadd.f32 0.0, %v648
      %v650 = vpop.f32.mrf.mxu0
      %651 = vmatprep.mubr.bf16.mxu0 0
      %652 = vmatmul.mubr.bf16.gmra.mxu0 %v509
      %v653 = vpop.f32.mrf.mxu0
      %v654 = vadd.f32 0.0, %v653
      %v655 = vpop.f32.mrf.mxu0
      %v656 = vpop.f32.mrf.mxu0
      %v657 = vadd.f32 0.0, %v656
      %v658 = vpop.f32.mrf.mxu0
      %659 = vmatprep.mubr.bf16.mxu0 0
      %660 = vmatmul.mubr.bf16.gmra.mxu0 %v510
      %v661 = vpop.f32.mrf.mxu0
      %v662 = vadd.f32 0.0, %v661
      %v663 = vpop.f32.mrf.mxu0
      %v664 = vpop.f32.mrf.mxu0
      %v665 = vadd.f32 0.0, %v664
      %v666 = vpop.f32.mrf.mxu0
      %667 = vmatprep.mubr.bf16.mxu0 0
      %668 = vmatmul.mubr.bf16.gmra.mxu0 %v511
      %v669 = vpop.f32.mrf.mxu0
      %v670 = vadd.f32 0.0, %v669
      %v671 = vpop.f32.mrf.mxu0
      %v672 = vpop.f32.mrf.mxu0
      %v673 = vadd.f32 0.0, %v672
      %v674 = vpop.f32.mrf.mxu0
      %675 = vmatprep.mubr.bf16.mxu0 0
      %676 = vmatmul.mubr.bf16.gmra.mxu0 %v512
      %v677 = vpop.f32.mrf.mxu0
      %v678 = vadd.f32 0.0, %v677
      %v679 = vpop.f32.mrf.mxu0
      %v680 = vpop.f32.mrf.mxu0
      %v681 = vadd.f32 0.0, %v680
      %v682 = vpop.f32.mrf.mxu0
      %683 = vdwg.mxu0
      %v704 = vunpack.c.l.b16 %v391
      %v705 = vunpack.c.l.b16 %v392
      %v706 = vunpack.c.l.b16 %v393
      %v707 = vunpack.c.l.b16 %v394
      %v708 = vunpack.c.l.b16 %v395
      %v709 = vunpack.c.l.b16 %v396
      %v710 = vunpack.c.l.b16 %v397
      %v711 = vunpack.c.l.b16 %v398
      %v712 = vunpack.c.l.b16 %v399
      %v713 = vunpack.c.l.b16 %v400
      %v714 = vunpack.c.l.b16 %v401
      %v715 = vunpack.c.l.b16 %v402
      %v716 = vunpack.c.l.b16 %v403
      %v717 = vunpack.c.l.b16 %v404
      %v718 = vunpack.c.l.b16 %v405
      %v719 = vunpack.c.l.b16 %v406
      %v720 = vunpack.c.l.b16 %v407
      %v721 = vunpack.c.l.b16 %v408
      %v722 = vunpack.c.l.b16 %v409
      %v723 = vunpack.c.l.b16 %v410
      %v724 = vpack.c.b16 %v705, %v704
      %v725 = vpack.c.b16 %v707, %v706
      %v726 = vpack.c.b16 %v709, %v708
      %v727 = vpack.c.b16 %v711, %v710
      %v728 = vpack.c.b16 %v713, %v712
      %v729 = vpack.c.b16 %v715, %v714
      %v730 = vpack.c.b16 %v717, %v716
      %v731 = vpack.c.b16 %v719, %v718
      %v732 = vpack.c.b16 %v721, %v720
      %v733 = vpack.c.b16 %v723, %v722
      %v760 = vunpack.c.l.b16 %v411
      %v761 = vunpack.c.l.b16 %v412
      %v762 = vunpack.c.l.b16 %v413
      %v763 = vunpack.c.l.b16 %v414
      %v764 = vunpack.c.l.b16 %v415
      %v765 = vunpack.c.l.b16 %v416
      %v766 = vunpack.c.l.b16 %v417
      %v767 = vunpack.c.l.b16 %v418
      %v768 = vunpack.c.l.b16 %v419
      %v769 = vunpack.c.l.b16 %v420
      %v770 = vunpack.c.l.b16 %v421
      %v771 = vunpack.c.l.b16 %v422
      %v772 = vunpack.c.l.b16 %v423
      %v773 = vunpack.c.l.b16 %v424
      %v774 = vunpack.c.l.b16 %v425
      %v775 = vunpack.c.l.b16 %v426
      %v776 = vpack.c.b16 %v761, %v760
      %v777 = vpack.c.b16 %v763, %v762
      %v778 = vpack.c.b16 %v765, %v764
      %v779 = vpack.c.b16 %v767, %v766
      %v780 = vpack.c.b16 %v769, %v768
      %v781 = vpack.c.b16 %v771, %v770
      %v782 = vpack.c.b16 %v773, %v772
      %v783 = vpack.c.b16 %v775, %v774
      %792 = vmatprep.subr.bf16.mxu0 0
      %793 = vmatpush1.bf16.msra.mxu0 %v783
      %794 = vmatprep.subr.bf16.mxu0 0
      %795 = vmatpush1.bf16.msra.mxu0 %v782
      %796 = vmatprep.subr.bf16.mxu0 0
      %797 = vmatpush1.bf16.msra.mxu0 %v781
      %798 = vmatprep.subr.bf16.mxu0 0
      %799 = vmatpush1.bf16.msra.mxu0 %v780
      %800 = vmatprep.subr.bf16.mxu0 0
      %801 = vmatpush1.bf16.msra.mxu0 %v779
      %802 = vmatprep.subr.bf16.mxu0 0
      %803 = vmatpush1.bf16.msra.mxu0 %v778
      %804 = vmatprep.subr.bf16.mxu0 0
      %805 = vmatpush1.bf16.msra.mxu0 %v777
      %806 = vmatprep.subr.bf16.mxu0 0
      %807 = vmatpush1.bf16.msra.mxu0 %v776
      %808 = vmatprep.subr.bf16.mxu0 0
      %809 = vmatpush2.bf16.msra.mxu0 0
      %810 = vmatprep.subr.bf16.mxu0 0
      %811 = vmatpush2.bf16.msra.mxu0 0
      %812 = vmatprep.subr.bf16.mxu0 0
      %813 = vmatpush2.bf16.msra.mxu0 0
      %814 = vmatprep.subr.bf16.mxu0 0
      %815 = vmatpush2.bf16.msra.mxu0 0
      %816 = vmatprep.subr.bf16.mxu0 0
      %817 = vmatpush2.bf16.msra.mxu0 0
      %818 = vmatprep.subr.bf16.mxu0 0
      %819 = vmatpush2.bf16.msra.mxu0 0
      %820 = vmatprep.subr.bf16.mxu0 0
      %821 = vmatpush2.bf16.msra.mxu0 0
      %822 = vmatprep.subr.bf16.mxu0 0
      %823 = vmatpush2.bf16.msra.mxu0 0
      %824 = vmatprep.mubr.bf16.mxu0 0
      %825 = vmatmul.mubr.bf16.gmra.mxu0 %v724
      %v826 = vpop.f32.mrf.mxu0
      %v827 = vadd.f32 %v606, %v826
      %v828 = vpop.f32.mrf.mxu0
      %v829 = vpop.f32.mrf.mxu0
      %v830 = vadd.f32 %v609, %v829
      %v831 = vpop.f32.mrf.mxu0
      %832 = vmatprep.mubr.bf16.mxu0 0
      %833 = vmatmul.mubr.bf16.gmra.mxu0 %v725
      %v834 = vpop.f32.mrf.mxu0
      %v835 = vadd.f32 %v614, %v834
      %v836 = vpop.f32.mrf.mxu0
      %v837 = vpop.f32.mrf.mxu0
      %v838 = vadd.f32 %v617, %v837
      %v839 = vpop.f32.mrf.mxu0
      %840 = vmatprep.mubr.bf16.mxu0 0
      %841 = vmatmul.mubr.bf16.gmra.mxu0 %v726
      %v842 = vpop.f32.mrf.mxu0
      %v843 = vadd.f32 %v622, %v842
      %v844 = vpop.f32.mrf.mxu0
      %v845 = vpop.f32.mrf.mxu0
      %v846 = vadd.f32 %v625, %v845
      %v847 = vpop.f32.mrf.mxu0
      %848 = vmatprep.mubr.bf16.mxu0 0
      %849 = vmatmul.mubr.bf16.gmra.mxu0 %v727
      %v850 = vpop.f32.mrf.mxu0
      %v851 = vadd.f32 %v630, %v850
      %v852 = vpop.f32.mrf.mxu0
      %v853 = vpop.f32.mrf.mxu0
      %v854 = vadd.f32 %v633, %v853
      %v855 = vpop.f32.mrf.mxu0
      %856 = vmatprep.mubr.bf16.mxu0 0
      %857 = vmatmul.mubr.bf16.gmra.mxu0 %v728
      %v858 = vpop.f32.mrf.mxu0
      %v859 = vadd.f32 %v638, %v858
      %v860 = vpop.f32.mrf.mxu0
      %v861 = vpop.f32.mrf.mxu0
      %v862 = vadd.f32 %v641, %v861
      %v863 = vpop.f32.mrf.mxu0
      %864 = vmatprep.mubr.bf16.mxu0 0
      %865 = vmatmul.mubr.bf16.gmra.mxu0 %v729
      %v866 = vpop.f32.mrf.mxu0
      %v867 = vadd.f32 %v646, %v866
      %v868 = vpop.f32.mrf.mxu0
      %v869 = vpop.f32.mrf.mxu0
      %v870 = vadd.f32 %v649, %v869
      %v871 = vpop.f32.mrf.mxu0
      %872 = vmatprep.mubr.bf16.mxu0 0
      %873 = vmatmul.mubr.bf16.gmra.mxu0 %v730
      %v874 = vpop.f32.mrf.mxu0
      %v875 = vadd.f32 %v654, %v874
      %v876 = vpop.f32.mrf.mxu0
      %v877 = vpop.f32.mrf.mxu0
      %v878 = vadd.f32 %v657, %v877
      %v879 = vpop.f32.mrf.mxu0
      %880 = vmatprep.mubr.bf16.mxu0 0
      %881 = vmatmul.mubr.bf16.gmra.mxu0 %v731
      %v882 = vpop.f32.mrf.mxu0
      %v883 = vadd.f32 %v662, %v882
      %v884 = vpop.f32.mrf.mxu0
      %v885 = vpop.f32.mrf.mxu0
      %v886 = vadd.f32 %v665, %v885
      %v887 = vpop.f32.mrf.mxu0
      %888 = vmatprep.mubr.bf16.mxu0 0
      %889 = vmatmul.mubr.bf16.gmra.mxu0 %v732
      %v890 = vpop.f32.mrf.mxu0
      %v891 = vadd.f32 %v670, %v890
      %v892 = vpop.f32.mrf.mxu0
      %v893 = vpop.f32.mrf.mxu0
      %v894 = vadd.f32 %v673, %v893
      %v895 = vpop.f32.mrf.mxu0
      %896 = vmatprep.mubr.bf16.mxu0 0
      %897 = vmatmul.mubr.bf16.gmra.mxu0 %v733
      %v898 = vpop.f32.mrf.mxu0
      %v899 = vadd.f32 %v678, %v898
      %v900 = vpop.f32.mrf.mxu0
      %v901 = vpop.f32.mrf.mxu0
      %v902 = vadd.f32 %v681, %v901
      %v903 = vpop.f32.mrf.mxu0
      %904 = vdwg.mxu0
      %v905 = vld [vmem:[%s378] sm:$0xf]
      %v906 = vld [vmem:[%s378 + $0x4] sm:$0xf]
      %v907 = vld [vmem:[%s378 + $0x8] sm:$0xf]
      %v908 = vld [vmem:[%s378 + $0xc] sm:$0xf]
      %v909 = vld [vmem:[%s378 + $0x10] sm:$0xf]
      %v910 = vld [vmem:[%s378 + $0x14] sm:$0xf]
      %v911 = vld [vmem:[%s378 + $0x18] sm:$0xf]
      %v912 = vld [vmem:[%s378 + $0x1c] sm:$0xf]
      %v913 = vld [vmem:[%s378 + $0x20] sm:$0xf]
      %v914 = vld [vmem:[%s378 + $0x24] sm:$0xf]
      %v915 = vld [vmem:[%s378 + $0x28] sm:$0xf]
      %v916 = vld [vmem:[%s378 + $0x2c] sm:$0xf]
      %v917 = vld [vmem:[%s378 + $0x30] sm:$0xf]
      %v918 = vld [vmem:[%s378 + $0x34] sm:$0xf]
      %v919 = vld [vmem:[%s378 + $0x38] sm:$0xf]
      %v920 = vld [vmem:[%s378 + $0x3c] sm:$0xf]
      %v921 = vld [vmem:[%s378 + $0x40] sm:$0xf]
      %v922 = vld [vmem:[%s378 + $0x44] sm:$0xf]
      %v923 = vld [vmem:[%s378 + $0x48] sm:$0xf]
      %v924 = vld [vmem:[%s378 + $0x4c] sm:$0xf]
      %v925 = vld [vmem:[%s5] sm:$0xf]
      %v926 = vld [vmem:[%s5 + $0x4] sm:$0xf]
      %v927 = vld [vmem:[%s5 + $0x8] sm:$0xf]
      %v928 = vld [vmem:[%s5 + $0xc] sm:$0xf]
      %v929 = vld [vmem:[%s5 + $0x10] sm:$0xf]
      %v930 = vld [vmem:[%s5 + $0x14] sm:$0xf]
      %v931 = vld [vmem:[%s5 + $0x18] sm:$0xf]
      %v932 = vld [vmem:[%s5 + $0x1c] sm:$0xf]
      %v933 = vld [vmem:[%s5 + $0x20] sm:$0xf]
      %v934 = vld [vmem:[%s5 + $0x24] sm:$0xf]
      %v935 = vld [vmem:[%s5 + $0x28] sm:$0xf]
      %v936 = vld [vmem:[%s5 + $0x2c] sm:$0xf]
      %v937 = vld [vmem:[%s5 + $0x30] sm:$0xf]
      %v938 = vld [vmem:[%s5 + $0x34] sm:$0xf]
      %v939 = vld [vmem:[%s5 + $0x38] sm:$0xf]
      %v940 = vld [vmem:[%s5 + $0x3c] sm:$0xf]
      %v961 = vunpack.c.l.b16 %v905
      %v962 = vunpack.c.l.b16 %v906
      %v963 = vunpack.c.l.b16 %v907
      %v964 = vunpack.c.l.b16 %v908
      %v965 = vunpack.c.l.b16 %v909
      %v966 = vunpack.c.l.b16 %v910
      %v967 = vunpack.c.l.b16 %v911
      %v968 = vunpack.c.l.b16 %v912
      %v969 = vunpack.c.l.b16 %v913
      %v970 = vunpack.c.l.b16 %v914
      %v971 = vunpack.c.l.b16 %v915
      %v972 = vunpack.c.l.b16 %v916
      %v973 = vunpack.c.l.b16 %v917
      %v974 = vunpack.c.l.b16 %v918
      %v975 = vunpack.c.l.b16 %v919
      %v976 = vunpack.c.l.b16 %v920
      %v977 = vunpack.c.l.b16 %v921
      %v978 = vunpack.c.l.b16 %v922
      %v979 = vunpack.c.l.b16 %v923
      %v980 = vunpack.c.l.b16 %v924
      %v981 = vpack.c.b16 %v962, %v961
      %v982 = vpack.c.b16 %v964, %v963
      %v983 = vpack.c.b16 %v966, %v965
      %v984 = vpack.c.b16 %v968, %v967
      %v985 = vpack.c.b16 %v970, %v969
      %v986 = vpack.c.b16 %v972, %v971
      %v987 = vpack.c.b16 %v974, %v973
      %v988 = vpack.c.b16 %v976, %v975
      %v989 = vpack.c.b16 %v978, %v977
      %v990 = vpack.c.b16 %v980, %v979
      %v1017 = vunpack.c.l.b16 %v925
      %v1018 = vunpack.c.l.b16 %v926
      %v1019 = vunpack.c.l.b16 %v927
      %v1020 = vunpack.c.l.b16 %v928
      %v1021 = vunpack.c.l.b16 %v929
      %v1022 = vunpack.c.l.b16 %v930
      %v1023 = vunpack.c.l.b16 %v931
      %v1024 = vunpack.c.l.b16 %v932
      %v1025 = vunpack.c.l.b16 %v933
      %v1026 = vunpack.c.l.b16 %v934
      %v1027 = vunpack.c.l.b16 %v935
      %v1028 = vunpack.c.l.b16 %v936
      %v1029 = vunpack.c.l.b16 %v937
      %v1030 = vunpack.c.l.b16 %v938
      %v1031 = vunpack.c.l.b16 %v939
      %v1032 = vunpack.c.l.b16 %v940
      %v1033 = vpack.c.b16 %v1018, %v1017
      %v1034 = vpack.c.b16 %v1020, %v1019
      %v1035 = vpack.c.b16 %v1022, %v1021
      %v1036 = vpack.c.b16 %v1024, %v1023
      %v1037 = vpack.c.b16 %v1026, %v1025
      %v1038 = vpack.c.b16 %v1028, %v1027
      %v1039 = vpack.c.b16 %v1030, %v1029
      %v1040 = vpack.c.b16 %v1032, %v1031
      %1049 = vmatprep.subr.bf16.mxu0 0
      %1050 = vmatpush1.bf16.msra.mxu0 %v1040
      %1051 = vmatprep.subr.bf16.mxu0 0
      %1052 = vmatpush1.bf16.msra.mxu0 %v1039
      %1053 = vmatprep.subr.bf16.mxu0 0
      %1054 = vmatpush1.bf16.msra.mxu0 %v1038
      %1055 = vmatprep.subr.bf16.mxu0 0
      %1056 = vmatpush1.bf16.msra.mxu0 %v1037
      %1057 = vmatprep.subr.bf16.mxu0 0
      %1058 = vmatpush1.bf16.msra.mxu0 %v1036
      %1059 = vmatprep.subr.bf16.mxu0 0
      %1060 = vmatpush1.bf16.msra.mxu0 %v1035
      %1061 = vmatprep.subr.bf16.mxu0 0
      %1062 = vmatpush1.bf16.msra.mxu0 %v1034
      %1063 = vmatprep.subr.bf16.mxu0 0
      %1064 = vmatpush1.bf16.msra.mxu0 %v1033
      %1065 = vmatprep.subr.bf16.mxu0 0
      %1066 = vmatpush2.bf16.msra.mxu0 0
      %1067 = vmatprep.subr.bf16.mxu0 0
      %1068 = vmatpush2.bf16.msra.mxu0 0
      %1069 = vmatprep.subr.bf16.mxu0 0
      %1070 = vmatpush2.bf16.msra.mxu0 0
      %1071 = vmatprep.subr.bf16.mxu0 0
      %1072 = vmatpush2.bf16.msra.mxu0 0
      %1073 = vmatprep.subr.bf16.mxu0 0
      %1074 = vmatpush2.bf16.msra.mxu0 0
      %1075 = vmatprep.subr.bf16.mxu0 0
      %1076 = vmatpush2.bf16.msra.mxu0 0
      %1077 = vmatprep.subr.bf16.mxu0 0
      %1078 = vmatpush2.bf16.msra.mxu0 0
      %1079 = vmatprep.subr.bf16.mxu0 0
      %1080 = vmatpush2.bf16.msra.mxu0 0
      %1081 = vmatprep.mubr.bf16.mxu0 0
      %1082 = vmatmul.mubr.bf16.gmra.mxu0 %v981
      %v1083 = vpop.f32.mrf.mxu0
      %v1084 = vadd.f32 0.0, %v1083
      %v1085 = vpop.f32.mrf.mxu0
      %v1086 = vpop.f32.mrf.mxu0
      %v1087 = vadd.f32 0.0, %v1086
      %v1088 = vpop.f32.mrf.mxu0
      %1089 = vmatprep.mubr.bf16.mxu0 0
      %1090 = vmatmul.mubr.bf16.gmra.mxu0 %v982
      %v1091 = vpop.f32.mrf.mxu0
      %v1092 = vadd.f32 0.0, %v1091
      %v1093 = vpop.f32.mrf.mxu0
      %v1094 = vpop.f32.mrf.mxu0
      %v1095 = vadd.f32 0.0, %v1094
      %v1096 = vpop.f32.mrf.mxu0
      %1097 = vmatprep.mubr.bf16.mxu0 0
      %1098 = vmatmul.mubr.bf16.gmra.mxu0 %v983
      %v1099 = vpop.f32.mrf.mxu0
      %v1100 = vadd.f32 0.0, %v1099
      %v1101 = vpop.f32.mrf.mxu0
      %v1102 = vpop.f32.mrf.mxu0
      %v1103 = vadd.f32 0.0, %v1102
      %v1104 = vpop.f32.mrf.mxu0
      %1105 = vmatprep.mubr.bf16.mxu0 0
      %1106 = vmatmul.mubr.bf16.gmra.mxu0 %v984
      %v1107 = vpop.f32.mrf.mxu0
      %v1108 = vadd.f32 0.0, %v1107
      %v1109 = vpop.f32.mrf.mxu0
      %v1110 = vpop.f32.mrf.mxu0
      %v1111 = vadd.f32 0.0, %v1110
      %v1112 = vpop.f32.mrf.mxu0
      %1113 = vmatprep.mubr.bf16.mxu0 0
      %1114 = vmatmul.mubr.bf16.gmra.mxu0 %v985
      %v1115 = vpop.f32.mrf.mxu0
      %v1116 = vadd.f32 0.0, %v1115
      %v1117 = vpop.f32.mrf.mxu0
      %v1118 = vpop.f32.mrf.mxu0
      %v1119 = vadd.f32 0.0, %v1118
      %v1120 = vpop.f32.mrf.mxu0
      %1121 = vmatprep.mubr.bf16.mxu0 0
      %1122 = vmatmul.mubr.bf16.gmra.mxu0 %v986
      %v1123 = vpop.f32.mrf.mxu0
      %v1124 = vadd.f32 0.0, %v1123
      %v1125 = vpop.f32.mrf.mxu0
      %v1126 = vpop.f32.mrf.mxu0
      %v1127 = vadd.f32 0.0, %v1126
      %v1128 = vpop.f32.mrf.mxu0
      %1129 = vmatprep.mubr.bf16.mxu0 0
      %1130 = vmatmul.mubr.bf16.gmra.mxu0 %v987
      %v1131 = vpop.f32.mrf.mxu0
      %v1132 = vadd.f32 0.0, %v1131
      %v1133 = vpop.f32.mrf.mxu0
      %v1134 = vpop.f32.mrf.mxu0
      %v1135 = vadd.f32 0.0, %v1134
      %v1136 = vpop.f32.mrf.mxu0
      %1137 = vmatprep.mubr.bf16.mxu0 0
      %1138 = vmatmul.mubr.bf16.gmra.mxu0 %v988
      %v1139 = vpop.f32.mrf.mxu0
      %v1140 = vadd.f32 0.0, %v1139
      %v1141 = vpop.f32.mrf.mxu0
      %v1142 = vpop.f32.mrf.mxu0
      %v1143 = vadd.f32 0.0, %v1142
      %v1144 = vpop.f32.mrf.mxu0
      %1145 = vmatprep.mubr.bf16.mxu0 0
      %1146 = vmatmul.mubr.bf16.gmra.mxu0 %v989
      %v1147 = vpop.f32.mrf.mxu0
      %v1148 = vadd.f32 0.0, %v1147
      %v1149 = vpop.f32.mrf.mxu0
      %v1150 = vpop.f32.mrf.mxu0
      %v1151 = vadd.f32 0.0, %v1150
      %v1152 = vpop.f32.mrf.mxu0
      %1153 = vmatprep.mubr.bf16.mxu0 0
      %1154 = vmatmul.mubr.bf16.gmra.mxu0 %v990
      %v1155 = vpop.f32.mrf.mxu0
      %v1156 = vadd.f32 0.0, %v1155
      %v1157 = vpop.f32.mrf.mxu0
      %v1158 = vpop.f32.mrf.mxu0
      %v1159 = vadd.f32 0.0, %v1158
      %v1160 = vpop.f32.mrf.mxu0
      %1161 = vdwg.mxu0
      %v1162 = vadd.f32 %v827, %v1084
      %v1163 = vadd.f32 %v830, %v1087
      %v1164 = vadd.f32 %v835, %v1092
      %v1165 = vadd.f32 %v838, %v1095
      %v1166 = vadd.f32 %v843, %v1100
      %v1167 = vadd.f32 %v846, %v1103
      %v1168 = vadd.f32 %v851, %v1108
      %v1169 = vadd.f32 %v854, %v1111
      %v1170 = vadd.f32 %v859, %v1116
      %v1171 = vadd.f32 %v862, %v1119
      %v1172 = vadd.f32 %v867, %v1124
      %v1173 = vadd.f32 %v870, %v1127
      %v1174 = vadd.f32 %v875, %v1132
      %v1175 = vadd.f32 %v878, %v1135
      %v1176 = vadd.f32 %v883, %v1140
      %v1177 = vadd.f32 %v886, %v1143
      %v1178 = vadd.f32 %v891, %v1148
      %v1179 = vadd.f32 %v894, %v1151
      %v1180 = vadd.f32 %v899, %v1156
      %v1181 = vadd.f32 %v902, %v1159
      %v1182 = vld [vmem:[%s6] sm:$0x1]
      %v1184 = vlaneseq
      %v1185 = vshrl.u32 %v1184, 7
      %v1186 = vsub.s32 0, %v1185
      %v1187 = vrot.slane %v1182, %v1186
      %v1189 = vadd.f32 %v1162, %v1187
      %v1190 = vadd.f32 %v1163, %v1187
      %v1191 = vadd.f32 %v1164, %v1187
      %v1192 = vadd.f32 %v1165, %v1187
      %v1193 = vadd.f32 %v1166, %v1187
      %v1194 = vadd.f32 %v1167, %v1187
      %v1195 = vadd.f32 %v1168, %v1187
      %v1196 = vadd.f32 %v1169, %v1187
      %v1197 = vadd.f32 %v1170, %v1187
      %v1198 = vadd.f32 %v1171, %v1187
      %v1199 = vadd.f32 %v1172, %v1187
      %v1200 = vadd.f32 %v1173, %v1187
      %v1201 = vadd.f32 %v1174, %v1187
      %v1202 = vadd.f32 %v1175, %v1187
      %v1203 = vadd.f32 %v1176, %v1187
      %v1204 = vadd.f32 %v1177, %v1187
      %v1205 = vadd.f32 %v1178, %v1187
      %v1206 = vadd.f32 %v1179, %v1187
      %v1207 = vadd.f32 %v1180, %v1187
      %v1208 = vadd.f32 %v1181, %v1187
      %1209 = vst [vmem:[%s388] sm:$0xff] %v1189
      %1210 = vst [vmem:[%s388 + $0x8] sm:$0xff] %v1190
      %1211 = vst [vmem:[%s388 + $0x10] sm:$0xff] %v1191
      %1212 = vst [vmem:[%s388 + $0x18] sm:$0xff] %v1192
      %1213 = vst [vmem:[%s388 + $0x20] sm:$0xff] %v1193
      %1214 = vst [vmem:[%s388 + $0x28] sm:$0xff] %v1194
      %1215 = vst [vmem:[%s388 + $0x30] sm:$0xff] %v1195
      %1216 = vst [vmem:[%s388 + $0x38] sm:$0xff] %v1196
      %1217 = vst [vmem:[%s388 + $0x40] sm:$0xff] %v1197
      %1218 = vst [vmem:[%s388 + $0x48] sm:$0xff] %v1198
      %1219 = vst [vmem:[%s388 + $0x50] sm:$0xff] %v1199
      %1220 = vst [vmem:[%s388 + $0x58] sm:$0xff] %v1200
      %1221 = vst [vmem:[%s388 + $0x60] sm:$0xff] %v1201
      %1222 = vst [vmem:[%s388 + $0x68] sm:$0xff] %v1202
      %1223 = vst [vmem:[%s388 + $0x70] sm:$0xff] %v1203
      %1224 = vst [vmem:[%s388 + $0x78] sm:$0xff] %v1204
      %1225 = vst [vmem:[%s388 + $0x80] sm:$0xff] %v1205
      %1226 = vst [vmem:[%s388 + $0x88] sm:$0xff] %v1206
      %1227 = vst [vmem:[%s388 + $0x90] sm:$0xff] %v1207
      %1228 = vst [vmem:[%s388 + $0x98] sm:$0xff] %v1208
      %s1229 = smul.u32 20, %s23
      %p1230 = scmp.lt.s32.totalorder %s22, 1
      %s1231 = scalar_select %p1230, %s22, 1
      %p1232 = scmp.lt.s32.totalorder %s1229, 19
      %s1233 = scalar_select %p1232, %s1229, 19
      %s1234 = smul.addr %s1231, 20
      %s1235 = sadd.s32 %s1233, %s1234
      %s1236 = smul.addr %s1235, 8
      %s1237 = scalar_lea.vmem %s7, %s1236
      // Predicated region
      $region49: #{fusionnet_forward.13} parent=47 // pred_check
        %p1238 = pneg %p218
      $region50: #{fusionnet_forward.13} parent=47 // pred_check_branch
        %1240 = sbr.rel (%p1238) target = $region52
      $region51: #{fusionnet_forward.13} parent=47 // pred_region
        %s1241 = smul.u32 20, %s23
      $region52: #{fusionnet_forward.13} parent=47 // pred_fallthru
        _
    $region48: #{fusionnet_forward.13} parent=5 // pred_fallthru
      _
    %p1242 = scmp.le.s32.totalorder 2, %s13
    // Predicated region
    $region53: #{fusionnet_forward.13} parent=5 // pred_check
      %p1243 = pneg %p1242
    $region54: #{fusionnet_forward.13} parent=5 // pred_check_branch
      %1245 = sbr.rel (%p1243) target = $region56
    $region55: #{fusionnet_forward.13} parent=5 // pred_region
      %s1246 = ssub.s32 %s13, 2
      // Predicated region
      $region57: #{fusionnet_forward.13} parent=55 // pred_check
        %p1247 = pneg %p224
      $region58: #{fusionnet_forward.13} parent=55 // pred_check_branch
        %1249 = sbr.rel (%p1247) target = $region60
      $region59: #{fusionnet_forward.13} parent=55 // pred_region
        %s1250 = smul.u32 20, %s25
        %p1251 = scmp.lt.s32.totalorder %s24, 1
        %s1252 = scalar_select %p1251, %s24, 1
        %p1253 = scmp.lt.s32.totalorder %s1250, 19
        %s1254 = scalar_select %p1253, %s1250, 19
        %s1255 = smul.addr %s1252, 20
        %s1256 = sadd.s32 %s1254, %s1255
        %s1257 = smul.addr %s1256, 8
        %s1258 = scalar_lea.vmem %s7, %s1257
      $region60: #{fusionnet_forward.13} parent=55 // pred_fallthru
        _
    $region56: #{fusionnet_forward.13} parent=5 // pred_fallthru
      _
  $region6: #{fusionnet_forward.13} parent=0 // loop_footer
    %s17 = sadd.s32 1, %s13
  $region7: #{fusionnet_forward.13} parent=0 // loop_footer_branch
    %12 = sbr.rel target = $region3
  $region8: #{fusionnet_forward.13} parent=0 // loop_exit
    _

</llo_original>
